<compile_context>
chip_gen: v7x
topology: tpu7x:2x2x1
jax: 0.10.0
libtpu: 0.0.40
codegen_flags: <defaults>
</compile_context>

<pallas_src>
import functools

import jax
import jax.numpy as jnp
from jax.experimental import pallas as pl
from jax.experimental.pallas import tpu as pltpu

EPSILON = 1e-5      # spatial_fusion epsilon (matches reference)
BN_EPS = 1e-5       # nn.BatchNorm2d default eps
CPAD = 128          # lane-dense channel padding for HBM-visible conv outputs


# ----------------------------------------------------------------------------
# Pallas kernels
# ----------------------------------------------------------------------------
def _double_conv_kernel(x_ref, w1_ref, s1_ref, b1_ref, w2_ref, s2_ref, b2_ref,
                        o_ref, mid_ref):
    """Fused (conv3x3 + BN + ReLU) x 2 for a block of `nb` images.

    x_ref:  (nb, H+2, W+2, Cin)   bf16, spatially zero-padded input
    w1_ref: (1, 9*Cin,  Cmid)     bf16, tap-major (dh, dw) im2col weights
    w2_ref: (1, 9*Cmid, Cout)     bf16
    s*/b*:  (1, 1, C)             f32 folded BN scale / bias
    o_ref:  (nb, H, W, Cout)      bf16 (lane-dense: Cout padded to 128)
    mid_ref: VMEM (nb, H+2, W+2, Cmid) f32 scratch (conv1 act. + zero halo)
    """
    nb, Hp, Wp, Cin = x_ref.shape
    H, W = Hp - 2, Wp - 2
    Cmid = mid_ref.shape[-1]
    Cout = o_ref.shape[-1]
    M = nb * H * W

    def im2col(src_ref, C):
        # One (M, 9*C) LHS: the 9 shifted windows concatenated along K gives a
        # single MXU matmul per conv layer (no per-tap VPU accumulation).
        cols = []
        for t in range(9):
            dh, dw = t // 3, t % 3
            cols.append(src_ref[:, dh:dh + H, dw:dw + W, :].reshape(M, C))
        return jnp.concatenate(cols, axis=-1)

    # ---- conv1 + BN + ReLU (single matmul, K = 9*Cin) ----
    acc1 = jnp.dot(im2col(x_ref, Cin), w1_ref[0],
                   preferred_element_type=jnp.float32)
    y1 = jnp.maximum(acc1 * s1_ref[0] + b1_ref[0], 0.0)         # (M, Cmid) f32

    # Stage conv1 activation in VMEM with a zero 1-px halo.  Only the four
    # halo strips are zeroed (the interior is fully rewritten each step); this
    # is redone every step so it stays correct when parallel grid axes are
    # split across TensorCores (scratch is per-core).
    zrow = jnp.zeros((nb, 1, Wp, Cmid), jnp.float32)
    zcol = jnp.zeros((nb, Hp, 1, Cmid), jnp.float32)
    mid_ref[:, 0:1, :, :] = zrow
    mid_ref[:, H + 1:H + 2, :, :] = zrow
    mid_ref[:, :, 0:1, :] = zcol
    mid_ref[:, :, W + 1:W + 2, :] = zcol
    mid_ref[:, 1:H + 1, 1:W + 1, :] = y1.reshape(nb, H, W, Cmid)

    # ---- conv2 + BN + ReLU (single matmul, K = 9*Cmid) ----
    lhs2 = im2col(mid_ref, Cmid).astype(jnp.bfloat16)           # one cast, not 9
    acc2 = jnp.dot(lhs2, w2_ref[0], preferred_element_type=jnp.float32)
    y2 = jnp.maximum(acc2 * s2_ref[0] + b2_ref[0], 0.0)         # (M, Cout) f32
    o_ref[...] = y2.reshape(nb, H, W, Cout).astype(jnp.bfloat16)


def _pick_nb(n_per_group, hw, n_groups):
    """Images per grid step: fill the MXU M dim (target M = nb*H*W <= 256 so
    the f32 accumulator stays inside the vreg budget) while keeping >= 2
    parallel grid steps when possible (v7x has two TensorCores)."""
    divs = [d for d in range(1, n_per_group + 1)
            if n_per_group % d == 0 and d * hw <= 256]
    if not divs:
        return 1  # TODO(synk): add H-strip (row) tiling for large images (v7x 64MiB VMEM).
    for d in sorted(divs, reverse=True):
        if n_groups * (n_per_group // d) >= 2:
            return d
    return divs[-1]


def _double_conv_call(x_pad, w1, s1, b1, w2, s2, b2, *, n_per_group):
    """Run the fused double-conv kernel on a (branch-)stacked image batch.

    x_pad: (B, H+2, W+2, Cin) bf16 with B = n_groups * n_per_group; images
    [g*n_per_group, (g+1)*n_per_group) use weight group g.
    """
    B, Hp, Wp, Cin = x_pad.shape
    H, W = Hp - 2, Wp - 2
    G = B // n_per_group
    assert B == G * n_per_group
    Cmid = w1.shape[-1]
    Cout = w2.shape[-1]
    assert w1.shape[1] == 9 * Cin and w2.shape[1] == 9 * Cmid

    nb = _pick_nb(n_per_group, H * W, G)
    n_blk = n_per_group // nb

    img = lambda g, j: (g * n_blk + j, 0, 0, 0)
    grp = lambda g, j: (g, 0, 0)

    return pl.pallas_call(
        _double_conv_kernel,
        out_shape=jax.ShapeDtypeStruct((B, H, W, Cout), jnp.bfloat16),
        grid=(G, n_blk),
        in_specs=[
            pl.BlockSpec((nb, Hp, Wp, Cin), img),
            pl.BlockSpec((1, 9 * Cin, Cmid), grp),
            pl.BlockSpec((1, 1, Cmid), grp),
            pl.BlockSpec((1, 1, Cmid), grp),
            pl.BlockSpec((1, 9 * Cmid, Cout), grp),
            pl.BlockSpec((1, 1, Cout), grp),
            pl.BlockSpec((1, 1, Cout), grp),
        ],
        out_specs=pl.BlockSpec((nb, H, W, Cout), img),
        scratch_shapes=[pltpu.VMEM((nb, Hp, Wp, Cmid), jnp.float32)],
        compiler_params=pltpu.CompilerParams(
            dimension_semantics=("parallel", "parallel"),
            vmem_limit_bytes=48 * 1024 * 1024,
        ),
    )(x_pad, w1, s1, b1, w2, s2, b2)


def _spatial_fusion_kernel(t1_ref, t2_ref, t3_ref, t4_ref, o_ref, *, inv_c):
    # t*: (tm, CPAD) slabs (bf16 conv outputs / f32 x3).  Channels beyond the
    # real C are exactly zero (zero-padded weights/BN), so the channel mean is
    # sum * (1 / C_real).
    t1 = t1_ref[...].astype(jnp.float32)
    t2 = t2_ref[...].astype(jnp.float32)
    t3 = t3_ref[...].astype(jnp.float32)
    t4 = t4_ref[...].astype(jnp.float32)
    s1 = jnp.sum(t1, axis=-1, keepdims=True) * inv_c
    s2 = jnp.sum(t2, axis=-1, keepdims=True) * inv_c
    s3 = jnp.sum(t3, axis=-1, keepdims=True) * inv_c
    s4 = jnp.sum(t4, axis=-1, keepdims=True) * inv_c
    # Subtract the max before exp (ReLU means are unbounded).  Dividing the
    # reference's numerator and denominator by exp(m) keeps this EXACTLY
    # equivalent to exp(si) / (exp(s1)+exp(s2)+exp(s3)+exp(s4) + EPSILON).
    m = jnp.maximum(jnp.maximum(s1, s2), jnp.maximum(s3, s4))
    e1 = jnp.exp(s1 - m)
    e2 = jnp.exp(s2 - m)
    e3 = jnp.exp(s3 - m)
    e4 = jnp.exp(s4 - m)
    inv = pl.reciprocal(e1 + e2 + e3 + e4 + EPSILON * jnp.exp(-m), approx=True)
    o_ref[...] = ((e1 * t1 + e2 * t2 + e3 * t3 + e4 * t4) * inv).astype(o_ref.dtype)


def _spatial_fusion_call(t1, t2, t3, t4, c_real):
    M, C = t1.shape
    # >=512-row tiles reach ~85% of HBM roofline; pad M so the grid divides
    # evenly instead of falling back to one giant unpipelined block.
    tm = 512 if M >= 512 else max(16, -(-M // 16) * 16)
    Mp = -(-M // tm) * tm
    pad = Mp - M
    if pad:
        t1, t2, t3, t4 = (jnp.pad(t, ((0, pad), (0, 0))) for t in (t1, t2, t3, t4))
    spec = pl.BlockSpec((tm, C), lambda i: (i, 0))
    out = pl.pallas_call(
        functools.partial(_spatial_fusion_kernel, inv_c=1.0 / float(c_real)),
        out_shape=jax.ShapeDtypeStruct((Mp, C), jnp.bfloat16),
        grid=(Mp // tm,),
        in_specs=[spec, spec, spec, spec],
        out_specs=spec,
        compiler_params=pltpu.CompilerParams(
            dimension_semantics=("parallel",),
            vmem_limit_bytes=48 * 1024 * 1024,
        ),
    )(t1, t2, t3, t4)
    return out[:M]


# ----------------------------------------------------------------------------
# JAX glue: BN fold, operand prep, upsample, maxpool, padding
# ----------------------------------------------------------------------------
def _fold_bn(gamma, beta, mean, var, conv_bias):
    scale = gamma / jnp.sqrt(var + BN_EPS)
    bias = beta + scale * (conv_bias - mean)
    return scale.astype(jnp.float32), bias.astype(jnp.float32)


def _prep_dc(p, cin_pad, cmid_pad, cout_pad):
    """Pack one DoubleConv's parameters into im2col kernel operands (bf16).

    NOTE: padded weight rows/cols and padded BN scale/bias are ZERO, so padded
    output channels are exactly ReLU(0) = 0 -- the spatial_fusion kernel relies
    on this to turn a 128-lane sum into the real channel mean.
    """
    def wmat(w, cin_tgt, cout_tgt):
        co, ci, _, _ = w.shape
        m = jnp.transpose(w, (2, 3, 1, 0)).reshape(9, ci, co)   # taps (dh,dw) row-major
        m = jnp.pad(m, ((0, 0), (0, cin_tgt - ci), (0, cout_tgt - co)))
        return m.reshape(9 * cin_tgt, cout_tgt).astype(jnp.bfloat16)

    def vpad(v, tgt):
        return jnp.pad(v, (0, tgt - v.shape[0])).reshape(1, tgt).astype(jnp.float32)

    s1, bi1 = _fold_bn(p["g1"], p["be1"], p["m1"], p["v1"], p["b1"])
    s2, bi2 = _fold_bn(p["g2"], p["be2"], p["m2"], p["v2"], p["b2"])
    return (wmat(p["w1"], cin_pad, cmid_pad), vpad(s1, cmid_pad), vpad(bi1, cmid_pad),
            wmat(p["w2"], cmid_pad, cout_pad), vpad(s2, cout_pad), vpad(bi2, cout_pad))


def _prep_conv_input(x_nhwc, cin_pad):
    """Spatial zero-pad (+1 halo) + channel pad, cast bf16 for the MXU."""
    c = x_nhwc.shape[-1]
    x = jnp.pad(x_nhwc, ((0, 0), (1, 1), (1, 1), (0, cin_pad - c)))
    return x.astype(jnp.bfloat16)


def _upsample_matrix(n_in, n_out):
    # bilinear, align_corners=True interpolation matrix (n_out, n_in)
    if n_in == 1:
        return jnp.ones((n_out, 1), jnp.float32)
    src = jnp.arange(n_out, dtype=jnp.float32) * (n_in - 1) / (n_out - 1)
    i0 = jnp.clip(jnp.floor(src).astype(jnp.int32), 0, n_in - 2)
    frac = src - i0.astype(jnp.float32)
    mat = jnp.zeros((n_out, n_in), jnp.float32)
    rows = jnp.arange(n_out)
    mat = mat.at[rows, i0].add(1.0 - frac)
    mat = mat.at[rows, i0 + 1].add(frac)
    return mat


def bilinear_up2(x_nhwc):
    # TODO(synk): bilinear upsample kept in plain JAX glue (tiny, non-hot-path)
    _, H, W, _ = x_nhwc.shape
    Mh = _upsample_matrix(H, 2 * H)
    Mw = _upsample_matrix(W, 2 * W)
    return jnp.einsum("oh,pw,nhwc->nopc", Mh, Mw, x_nhwc)


def maxpool(x_nhwc, k):
    N, H, W, C = x_nhwc.shape
    return x_nhwc.reshape(N, H // k, k, W // k, k, C).max(axis=(2, 4))


def pad_to(x_nhwc, H_t, W_t):
    H, W = x_nhwc.shape[1], x_nhwc.shape[2]
    dY, dX = H_t - H, W_t - W
    return jnp.pad(
        x_nhwc,
        ((0, 0), (dY // 2, dY - dY // 2), (dX // 2, dX - dX // 2), (0, 0)),
    )


# ----------------------------------------------------------------------------
# Parameter initialization (deterministic, synthetic)
# ----------------------------------------------------------------------------
def make_doubleconv_params(key, cin, cout, cmid=None):
    if cmid is None:
        cmid = cout
    ks = jax.random.split(key, 12)

    def conv_w(k, ci, co):
        bound = 1.0 / jnp.sqrt(9.0 * ci)
        return jax.random.uniform(k, (co, ci, 3, 3), jnp.float32, -bound, bound)

    def conv_b(k, ci, co):
        bound = 1.0 / jnp.sqrt(9.0 * ci)
        return jax.random.uniform(k, (co,), jnp.float32, -bound, bound)

    return dict(
        w1=conv_w(ks[0], cin, cmid), b1=conv_b(ks[1], cin, cmid),
        g1=1.0 + 0.1 * jax.random.uniform(ks[2], (cmid,), jnp.float32),
        be1=0.1 * jax.random.normal(ks[3], (cmid,), jnp.float32),
        m1=0.1 * jax.random.normal(ks[4], (cmid,), jnp.float32),
        v1=1.0 + 0.1 * jax.random.uniform(ks[5], (cmid,), jnp.float32),
        w2=conv_w(ks[6], cmid, cout), b2=conv_b(ks[7], cmid, cout),
        g2=1.0 + 0.1 * jax.random.uniform(ks[8], (cout,), jnp.float32),
        be2=0.1 * jax.random.normal(ks[9], (cout,), jnp.float32),
        m2=0.1 * jax.random.normal(ks[10], (cout,), jnp.float32),
        v2=1.0 + 0.1 * jax.random.uniform(ks[11], (cout,), jnp.float32),
    )


# ----------------------------------------------------------------------------
# Full forward (mirrors Up_dense_2_softmax.forward, bilinear=True)
# ----------------------------------------------------------------------------
def up_dense_2_softmax_forward(params, x1, x2, x3, x4, x5):
    # inputs are NCHW (PyTorch convention); convert to NHWC internally
    nhwc = lambda t: jnp.transpose(t, (0, 2, 3, 1)).astype(jnp.float32)
    x1n, x2n, x3n, x4n, x5n = map(nhwc, (x1, x2, x3, x4, x5))

    N, H3, W3, _ = x3n.shape
    c_out = params["conv"]["w2"].shape[0]       # out_channels

    # --- glue: upsample / pad / pool (tiny relative to the conv work) ---
    x1p = pad_to(bilinear_up2(x1n), H3, W3)     # self.up   + F.pad
    x2p = pad_to(bilinear_up2(x2n), H3, W3)     # self.up_1 + F.pad
    x4p = maxpool(x4n, 2)                       # MaxPool2d(2)
    x5p = maxpool(x5n, 4)                       # MaxPool2d(4)

    # --- all four branch double-convs in ONE pallas_call (branch-stacked) ---
    branch_inputs = (x1p, x2p, x4p, x5p)
    branch_params = (params["conv"], params["conv_1"], params["mp0"], params["mp1"])
    cin_pad = max(t.shape[-1] for t in branch_inputs)
    cmid_pad = max(p["w1"].shape[0] for p in branch_params)     # real mid widths only

    xb = jnp.concatenate([_prep_conv_input(t, cin_pad) for t in branch_inputs],
                         axis=0)                                # (4N, H+2, W+2, cin_pad)
    ops = [_prep_dc(p, cin_pad, cmid_pad, CPAD) for p in branch_params]
    w1 = jnp.stack([o[0] for o in ops]); s1 = jnp.stack([o[1] for o in ops])
    b1 = jnp.stack([o[2] for o in ops]); w2 = jnp.stack([o[3] for o in ops])
    s2 = jnp.stack([o[4] for o in ops]); b2 = jnp.stack([o[5] for o in ops])

    y = _double_conv_call(xb, w1, s1, b1, w2, s2, b2, n_per_group=N)  # (4N,H,W,CPAD) bf16
    x1c = y[0 * N:1 * N]        # self.conv(x1)
    x2c = y[1 * N:2 * N]        # self.conv_1(x2)
    x4c = y[2 * N:3 * N]        # maxpool_conv_0(x4)
    x5c = y[3 * N:4 * N]        # maxpool_conv_1(x5)

    # --- spatial_fusion(x2c, x3, x4c, x5c) on lane-dense slabs (bf16 in/out) ---
    x3p = jnp.pad(x3n, ((0, 0), (0, 0), (0, 0), (0, CPAD - x3n.shape[-1])))
    M = N * H3 * W3
    x_add = _spatial_fusion_call(x2c.reshape(M, CPAD), x3p.reshape(M, CPAD),
                                 x4c.reshape(M, CPAD), x5c.reshape(M, CPAD), c_out)
    x_add = x_add.reshape(N, H3, W3, CPAD)

    # --- cat([x_add, x1c]) on real channels, then the final double conv
    #     (reuses self.conv, exactly as the reference does) ---
    x_cat = jnp.concatenate([x_add[..., :c_out], x1c[..., :c_out]], axis=-1)
    cin_f = x_cat.shape[-1]
    assert cin_f == params["conv"]["w1"].shape[1]
    cmid_f = params["conv"]["w1"].shape[0]
    xf = _prep_conv_input(x_cat, cin_f)
    of = _prep_dc(params["conv"], cin_f, cmid_f, CPAD)
    out = _double_conv_call(xf, of[0][None], of[1][None], of[2][None],
                            of[3][None], of[4][None], of[5][None],
                            n_per_group=N)                      # (N, H, W, CPAD) bf16
    out = out[..., :c_out].astype(jnp.float32)
    return jnp.transpose(out, (0, 3, 1, 2))                     # back to NCHW


# ----------------------------------------------------------------------------
# Pure-JAX reference (f32) for correctness checking
# ----------------------------------------------------------------------------
def _ref_double_conv(p, x_nhwc):
    def conv_bn_relu(x, w, b, g, be, m, v):
        y = jax.lax.conv_general_dilated(
            x, jnp.transpose(w, (2, 3, 1, 0)), window_strides=(1, 1),
            padding="SAME", dimension_numbers=("NHWC", "HWIO", "NHWC"),
            precision=jax.lax.Precision.HIGHEST)
        y = g * ((y + b) - m) / jnp.sqrt(v + BN_EPS) + be
        return jnp.maximum(y, 0.0)
    y = conv_bn_relu(x_nhwc, p["w1"], p["b1"], p["g1"], p["be1"], p["m1"], p["v1"])
    return conv_bn_relu(y, p["w2"], p["b2"], p["g2"], p["be2"], p["m2"], p["v2"])


def _ref_spatial_fusion(t1, t2, t3, t4):
    s = lambda t: jnp.mean(t, axis=-1, keepdims=True)
    e1, e2, e3, e4 = (jnp.exp(s(t)) for t in (t1, t2, t3, t4))
    den = e1 + e2 + e3 + e4 + EPSILON
    return (e1 * t1 + e2 * t2 + e3 * t3 + e4 * t4) / den


def _ref_forward(params, x1, x2, x3, x4, x5):
    nhwc = lambda t: jnp.transpose(t, (0, 2, 3, 1)).astype(jnp.float32)
    x1n, x2n, x3n, x4n, x5n = map(nhwc, (x1, x2, x3, x4, x5))
    _, H3, W3, _ = x3n.shape
    x1c = _ref_double_conv(params["conv"], pad_to(bilinear_up2(x1n), H3, W3))
    x2c = _ref_double_conv(params["conv_1"], pad_to(bilinear_up2(x2n), H3, W3))
    x4c = _ref_double_conv(params["mp0"], maxpool(x4n, 2))
    x5c = _ref_double_conv(params["mp1"], maxpool(x5n, 4))
    x_add = _ref_spatial_fusion(x2c, x3n, x4c, x5c)
    out = _ref_double_conv(params["conv"], jnp.concatenate([x_add, x1c], axis=-1))
    return jnp.transpose(out, (0, 3, 1, 2))


if __name__ == "__main__":
    # Channel configuration: in_channels_0 = 2*out_channels (required by the
    # final cat + self.conv, exactly as in the PyTorch module).
    IN0, IN1, IN2, OUT = 8, 4, 4, 4
    N, H3, W3 = 2, 8, 8

    root = jax.random.PRNGKey(0)
    kp, kx = jax.random.split(root)
    kps = jax.random.split(kp, 4)
    params = dict(
        conv=make_doubleconv_params(kps[0], IN0, OUT, IN0 // 2),
        conv_1=make_doubleconv_params(kps[1], IN0, OUT, IN0 // 2),
        mp0=make_doubleconv_params(kps[2], IN1, OUT),
        mp1=make_doubleconv_params(kps[3], IN2, OUT),
    )

    kxs = jax.random.split(kx, 5)
    x1 = jax.random.normal(kxs[0], (N, IN0, H3 // 2, W3 // 2), jnp.float32)
    x2 = jax.random.normal(kxs[1], (N, IN0, H3 // 2, W3 // 2), jnp.float32)
    x3 = jax.random.normal(kxs[2], (N, OUT, H3, W3), jnp.float32)
    x4 = jax.random.normal(kxs[3], (N, IN1, 2 * H3, 2 * W3), jnp.float32)
    x5 = jax.random.normal(kxs[4], (N, IN2, 4 * H3, 4 * W3), jnp.float32)

    fwd = jax.jit(up_dense_2_softmax_forward)
    out = jax.block_until_ready(fwd(params, x1, x2, x3, x4, x5))
    assert out.shape == (N, OUT, H3, W3), out.shape
    assert bool(jnp.all(jnp.isfinite(out)))

    # Pure-JAX f32 reference; tolerance covers bf16 MXU operands, bf16 HBM
    # slabs and the approximate reciprocal in the fusion kernel.
    ref = jax.block_until_ready(jax.jit(_ref_forward)(params, x1, x2, x3, x4, x5))
    rel = float(jnp.linalg.norm(out - ref) / (jnp.linalg.norm(ref) + 1e-12))
    assert rel < 0.06, f"relative L2 error vs reference too large: {rel}"

    print("KERNEL_OK")
</pallas_src>

<mosaic_0001>
module attributes {stable_mosaic.version = 11 : i64} {
  func.func @_double_conv_kernel(%arg0: i32, %arg1: i32, %arg2: memref<2x10x10x8xbf16, #tpu.memory_space<vmem>>, %arg3: memref<1x72x4xbf16, #tpu.memory_space<vmem>>, %arg4: memref<1x1x4xf32, #tpu.memory_space<vmem>>, %arg5: memref<1x1x4xf32, #tpu.memory_space<vmem>>, %arg6: memref<1x36x128xbf16, #tpu.memory_space<vmem>>, %arg7: memref<1x1x128xf32, #tpu.memory_space<vmem>>, %arg8: memref<1x1x128xf32, #tpu.memory_space<vmem>>, %arg9: memref<2x8x8x128xbf16, #tpu.memory_space<vmem>>, %arg10: memref<2x10x10x4xf32, #tpu.memory_space<vmem>>) attributes {dimension_semantics = [#tpu.dimension_semantics<parallel>, #tpu.dimension_semantics<parallel>], iteration_bounds = array<i64: 4, 1>, scalar_prefetch = 0 : i64, scratch_operands = 1 : i64, tpu.core_type = #tpu.core_type<tc>, window_params = [{transform_indices = @transform_0, window_bounds = array<i64: 2, 10, 10, 8>}, {transform_indices = @transform_1, window_bounds = array<i64: 1, 72, 4>}, {transform_indices = @transform_2, window_bounds = array<i64: 1, 1, 4>}, {transform_indices = @transform_3, window_bounds = array<i64: 1, 1, 4>}, {transform_indices = @transform_4, window_bounds = array<i64: 1, 36, 128>}, {transform_indices = @transform_5, window_bounds = array<i64: 1, 1, 128>}, {transform_indices = @transform_6, window_bounds = array<i64: 1, 1, 128>}, {transform_indices = @transform_7, window_bounds = array<i64: 2, 8, 8, 128>}]} {
    %c0 = arith.constant 0 : index
    %c0_0 = arith.constant 0 : index
    %c0_1 = arith.constant 0 : index
    %c0_2 = arith.constant 0 : index
    %0 = vector.load %arg2[%c0, %c0_0, %c0_1, %c0_2] : memref<2x10x10x8xbf16, #tpu.memory_space<vmem>>, vector<2x8x8x8xbf16>
    %1 = vector.shape_cast %0 : vector<2x8x8x8xbf16> to vector<128x8xbf16>
    %c0_3 = arith.constant 0 : index
    %c0_4 = arith.constant 0 : index
    %c1 = arith.constant 1 : index
    %c0_5 = arith.constant 0 : index
    %2 = vector.load %arg2[%c0_3, %c0_4, %c1, %c0_5] : memref<2x10x10x8xbf16, #tpu.memory_space<vmem>>, vector<2x8x8x8xbf16>
    %3 = vector.shape_cast %2 : vector<2x8x8x8xbf16> to vector<128x8xbf16>
    %c0_6 = arith.constant 0 : index
    %c0_7 = arith.constant 0 : index
    %c2 = arith.constant 2 : index
    %c0_8 = arith.constant 0 : index
    %4 = vector.load %arg2[%c0_6, %c0_7, %c2, %c0_8] : memref<2x10x10x8xbf16, #tpu.memory_space<vmem>>, vector<2x8x8x8xbf16>
    %5 = vector.shape_cast %4 : vector<2x8x8x8xbf16> to vector<128x8xbf16>
    %c0_9 = arith.constant 0 : index
    %c1_10 = arith.constant 1 : index
    %c0_11 = arith.constant 0 : index
    %c0_12 = arith.constant 0 : index
    %6 = vector.load %arg2[%c0_9, %c1_10, %c0_11, %c0_12] : memref<2x10x10x8xbf16, #tpu.memory_space<vmem>>, vector<2x8x8x8xbf16>
    %7 = vector.shape_cast %6 : vector<2x8x8x8xbf16> to vector<128x8xbf16>
    %c0_13 = arith.constant 0 : index
    %c1_14 = arith.constant 1 : index
    %c1_15 = arith.constant 1 : index
    %c0_16 = arith.constant 0 : index
    %8 = vector.load %arg2[%c0_13, %c1_14, %c1_15, %c0_16] : memref<2x10x10x8xbf16, #tpu.memory_space<vmem>>, vector<2x8x8x8xbf16>
    %9 = vector.shape_cast %8 : vector<2x8x8x8xbf16> to vector<128x8xbf16>
    %c0_17 = arith.constant 0 : index
    %c1_18 = arith.constant 1 : index
    %c2_19 = arith.constant 2 : index
    %c0_20 = arith.constant 0 : index
    %10 = vector.load %arg2[%c0_17, %c1_18, %c2_19, %c0_20] : memref<2x10x10x8xbf16, #tpu.memory_space<vmem>>, vector<2x8x8x8xbf16>
    %11 = vector.shape_cast %10 : vector<2x8x8x8xbf16> to vector<128x8xbf16>
    %c0_21 = arith.constant 0 : index
    %c2_22 = arith.constant 2 : index
    %c0_23 = arith.constant 0 : index
    %c0_24 = arith.constant 0 : index
    %12 = vector.load %arg2[%c0_21, %c2_22, %c0_23, %c0_24] : memref<2x10x10x8xbf16, #tpu.memory_space<vmem>>, vector<2x8x8x8xbf16>
    %13 = vector.shape_cast %12 : vector<2x8x8x8xbf16> to vector<128x8xbf16>
    %c0_25 = arith.constant 0 : index
    %c2_26 = arith.constant 2 : index
    %c1_27 = arith.constant 1 : index
    %c0_28 = arith.constant 0 : index
    %14 = vector.load %arg2[%c0_25, %c2_26, %c1_27, %c0_28] : memref<2x10x10x8xbf16, #tpu.memory_space<vmem>>, vector<2x8x8x8xbf16>
    %15 = vector.shape_cast %14 : vector<2x8x8x8xbf16> to vector<128x8xbf16>
    %c0_29 = arith.constant 0 : index
    %c2_30 = arith.constant 2 : index
    %c2_31 = arith.constant 2 : index
    %c0_32 = arith.constant 0 : index
    %16 = vector.load %arg2[%c0_29, %c2_30, %c2_31, %c0_32] : memref<2x10x10x8xbf16, #tpu.memory_space<vmem>>, vector<2x8x8x8xbf16>
    %17 = vector.shape_cast %16 : vector<2x8x8x8xbf16> to vector<128x8xbf16>
    %18 = tpu.concatenate %1, %3, %5, %7, %9, %11, %13, %15, %17 in 1 : vector<128x8xbf16>, vector<128x8xbf16>, vector<128x8xbf16>, vector<128x8xbf16>, vector<128x8xbf16>, vector<128x8xbf16>, vector<128x8xbf16>, vector<128x8xbf16>, vector<128x8xbf16> -> vector<128x72xbf16>
    %c0_33 = arith.constant 0 : index
    %c0_34 = arith.constant 0 : index
    %c0_35 = arith.constant 0 : index
    %19 = vector.load %arg3[%c0_33, %c0_34, %c0_35] : memref<1x72x4xbf16, #tpu.memory_space<vmem>>, vector<1x72x4xbf16>
    %20 = vector.shape_cast %19 : vector<1x72x4xbf16> to vector<72x4xbf16>
    %cst = arith.constant dense<0.000000e+00> : vector<128x4xf32>
    %21 = tpu.matmul %18, %20, %cst {dimension_numbers = #tpu.dot_dimension_numbers<[1], [0], [0], [1], [0, 0, 1, 1], [], []>} : vector<128x72xbf16>, vector<72x4xbf16>, vector<128x4xf32> -> vector<128x4xf32>
    %c0_36 = arith.constant 0 : index
    %c0_37 = arith.constant 0 : index
    %c0_38 = arith.constant 0 : index
    %22 = vector.load %arg4[%c0_36, %c0_37, %c0_38] : memref<1x1x4xf32, #tpu.memory_space<vmem>>, vector<1x1x4xf32>
    %23 = vector.shape_cast %22 : vector<1x1x4xf32> to vector<1x4xf32>
    %24 = vector.broadcast %23 : vector<1x4xf32> to vector<128x4xf32>
    %25 = arith.mulf %21, %24 : vector<128x4xf32>
    %c0_39 = arith.constant 0 : index
    %c0_40 = arith.constant 0 : index
    %c0_41 = arith.constant 0 : index
    %26 = vector.load %arg5[%c0_39, %c0_40, %c0_41] : memref<1x1x4xf32, #tpu.memory_space<vmem>>, vector<1x1x4xf32>
    %27 = vector.shape_cast %26 : vector<1x1x4xf32> to vector<1x4xf32>
    %28 = vector.broadcast %27 : vector<1x4xf32> to vector<128x4xf32>
    %29 = arith.addf %25, %28 : vector<128x4xf32>
    %cst_42 = arith.constant 0.000000e+00 : f32
    %30 = vector.broadcast %cst_42 : f32 to vector<128x4xf32>
    %31 = arith.maximumf %29, %30 : vector<128x4xf32>
    %cst_43 = arith.constant 0.000000e+00 : f32
    %32 = vector.broadcast %cst_43 : f32 to vector<2x1x10x4xf32>
    %cst_44 = arith.constant 0.000000e+00 : f32
    %33 = vector.broadcast %cst_44 : f32 to vector<2x10x1x4xf32>
    %c0_45 = arith.constant 0 : index
    %c0_46 = arith.constant 0 : index
    %c0_47 = arith.constant 0 : index
    %c0_48 = arith.constant 0 : index
    %34 = vector.load %arg10[%c0_45, %c0_46, %c0_47, %c0_48] : memref<2x10x10x4xf32, #tpu.memory_space<vmem>>, vector<2x1x10x4xf32>
    tpu.vector_store %arg10[%c0_45, %c0_46, %c0_47, %c0_48], %32 {strides = array<i32>} : memref<2x10x10x4xf32, #tpu.memory_space<vmem>>, vector<2x1x10x4xf32>,
    %c0_49 = arith.constant 0 : index
    %c9 = arith.constant 9 : index
    %c0_50 = arith.constant 0 : index
    %c0_51 = arith.constant 0 : index
    %35 = vector.load %arg10[%c0_49, %c9, %c0_50, %c0_51] : memref<2x10x10x4xf32, #tpu.memory_space<vmem>>, vector<2x1x10x4xf32>
    tpu.vector_store %arg10[%c0_49, %c9, %c0_50, %c0_51], %32 {strides = array<i32>} : memref<2x10x10x4xf32, #tpu.memory_space<vmem>>, vector<2x1x10x4xf32>,
    %c0_52 = arith.constant 0 : index
    %c0_53 = arith.constant 0 : index
    %c0_54 = arith.constant 0 : index
    %c0_55 = arith.constant 0 : index
    %36 = vector.load %arg10[%c0_52, %c0_53, %c0_54, %c0_55] : memref<2x10x10x4xf32, #tpu.memory_space<vmem>>, vector<2x10x1x4xf32>
    tpu.vector_store %arg10[%c0_52, %c0_53, %c0_54, %c0_55], %33 {strides = array<i32>} : memref<2x10x10x4xf32, #tpu.memory_space<vmem>>, vector<2x10x1x4xf32>,
    %c0_56 = arith.constant 0 : index
    %c0_57 = arith.constant 0 : index
    %c9_58 = arith.constant 9 : index
    %c0_59 = arith.constant 0 : index
    %37 = vector.load %arg10[%c0_56, %c0_57, %c9_58, %c0_59] : memref<2x10x10x4xf32, #tpu.memory_space<vmem>>, vector<2x10x1x4xf32>
    tpu.vector_store %arg10[%c0_56, %c0_57, %c9_58, %c0_59], %33 {strides = array<i32>} : memref<2x10x10x4xf32, #tpu.memory_space<vmem>>, vector<2x10x1x4xf32>,
    %38 = vector.shape_cast %31 : vector<128x4xf32> to vector<2x8x8x4xf32>
    %c0_60 = arith.constant 0 : index
    %c1_61 = arith.constant 1 : index
    %c1_62 = arith.constant 1 : index
    %c0_63 = arith.constant 0 : index
    %39 = vector.load %arg10[%c0_60, %c1_61, %c1_62, %c0_63] : memref<2x10x10x4xf32, #tpu.memory_space<vmem>>, vector<2x8x8x4xf32>
    tpu.vector_store %arg10[%c0_60, %c1_61, %c1_62, %c0_63], %38 {strides = array<i32>} : memref<2x10x10x4xf32, #tpu.memory_space<vmem>>, vector<2x8x8x4xf32>,
    %c0_64 = arith.constant 0 : index
    %c0_65 = arith.constant 0 : index
    %c0_66 = arith.constant 0 : index
    %c0_67 = arith.constant 0 : index
    %40 = vector.load %arg10[%c0_64, %c0_65, %c0_66, %c0_67] : memref<2x10x10x4xf32, #tpu.memory_space<vmem>>, vector<2x8x8x4xf32>
    %41 = vector.shape_cast %40 : vector<2x8x8x4xf32> to vector<128x4xf32>
    %c0_68 = arith.constant 0 : index
    %c0_69 = arith.constant 0 : index
    %c1_70 = arith.constant 1 : index
    %c0_71 = arith.constant 0 : index
    %42 = vector.load %arg10[%c0_68, %c0_69, %c1_70, %c0_71] : memref<2x10x10x4xf32, #tpu.memory_space<vmem>>, vector<2x8x8x4xf32>
    %43 = vector.shape_cast %42 : vector<2x8x8x4xf32> to vector<128x4xf32>
    %c0_72 = arith.constant 0 : index
    %c0_73 = arith.constant 0 : index
    %c2_74 = arith.constant 2 : index
    %c0_75 = arith.constant 0 : index
    %44 = vector.load %arg10[%c0_72, %c0_73, %c2_74, %c0_75] : memref<2x10x10x4xf32, #tpu.memory_space<vmem>>, vector<2x8x8x4xf32>
    %45 = vector.shape_cast %44 : vector<2x8x8x4xf32> to vector<128x4xf32>
    %c0_76 = arith.constant 0 : index
    %c1_77 = arith.constant 1 : index
    %c0_78 = arith.constant 0 : index
    %c0_79 = arith.constant 0 : index
    %46 = vector.load %arg10[%c0_76, %c1_77, %c0_78, %c0_79] : memref<2x10x10x4xf32, #tpu.memory_space<vmem>>, vector<2x8x8x4xf32>
    %47 = vector.shape_cast %46 : vector<2x8x8x4xf32> to vector<128x4xf32>
    %c0_80 = arith.constant 0 : index
    %c1_81 = arith.constant 1 : index
    %c1_82 = arith.constant 1 : index
    %c0_83 = arith.constant 0 : index
    %48 = vector.load %arg10[%c0_80, %c1_81, %c1_82, %c0_83] : memref<2x10x10x4xf32, #tpu.memory_space<vmem>>, vector<2x8x8x4xf32>
    %49 = vector.shape_cast %48 : vector<2x8x8x4xf32> to vector<128x4xf32>
    %c0_84 = arith.constant 0 : index
    %c1_85 = arith.constant 1 : index
    %c2_86 = arith.constant 2 : index
    %c0_87 = arith.constant 0 : index
    %50 = vector.load %arg10[%c0_84, %c1_85, %c2_86, %c0_87] : memref<2x10x10x4xf32, #tpu.memory_space<vmem>>, vector<2x8x8x4xf32>
    %51 = vector.shape_cast %50 : vector<2x8x8x4xf32> to vector<128x4xf32>
    %c0_88 = arith.constant 0 : index
    %c2_89 = arith.constant 2 : index
    %c0_90 = arith.constant 0 : index
    %c0_91 = arith.constant 0 : index
    %52 = vector.load %arg10[%c0_88, %c2_89, %c0_90, %c0_91] : memref<2x10x10x4xf32, #tpu.memory_space<vmem>>, vector<2x8x8x4xf32>
    %53 = vector.shape_cast %52 : vector<2x8x8x4xf32> to vector<128x4xf32>
    %c0_92 = arith.constant 0 : index
    %c2_93 = arith.constant 2 : index
    %c1_94 = arith.constant 1 : index
    %c0_95 = arith.constant 0 : index
    %54 = vector.load %arg10[%c0_92, %c2_93, %c1_94, %c0_95] : memref<2x10x10x4xf32, #tpu.memory_space<vmem>>, vector<2x8x8x4xf32>
    %55 = vector.shape_cast %54 : vector<2x8x8x4xf32> to vector<128x4xf32>
    %c0_96 = arith.constant 0 : index
    %c2_97 = arith.constant 2 : index
    %c2_98 = arith.constant 2 : index
    %c0_99 = arith.constant 0 : index
    %56 = vector.load %arg10[%c0_96, %c2_97, %c2_98, %c0_99] : memref<2x10x10x4xf32, #tpu.memory_space<vmem>>, vector<2x8x8x4xf32>
    %57 = vector.shape_cast %56 : vector<2x8x8x4xf32> to vector<128x4xf32>
    %58 = tpu.concatenate %41, %43, %45, %47, %49, %51, %53, %55, %57 in 1 : vector<128x4xf32>, vector<128x4xf32>, vector<128x4xf32>, vector<128x4xf32>, vector<128x4xf32>, vector<128x4xf32>, vector<128x4xf32>, vector<128x4xf32>, vector<128x4xf32> -> vector<128x36xf32>
    %59 = arith.truncf %58 : vector<128x36xf32> to vector<128x36xbf16>
    %c0_100 = arith.constant 0 : index
    %c0_101 = arith.constant 0 : index
    %c0_102 = arith.constant 0 : index
    %60 = vector.load %arg6[%c0_100, %c0_101, %c0_102] : memref<1x36x128xbf16, #tpu.memory_space<vmem>>, vector<1x36x128xbf16>
    %61 = vector.shape_cast %60 : vector<1x36x128xbf16> to vector<36x128xbf16>
    %cst_103 = arith.constant dense<0.000000e+00> : vector<128x128xf32>
    %62 = tpu.matmul %59, %61, %cst_103 {dimension_numbers = #tpu.dot_dimension_numbers<[1], [0], [0], [1], [0, 0, 1, 1], [], []>} : vector<128x36xbf16>, vector<36x128xbf16>, vector<128x128xf32> -> vector<128x128xf32>
    %c0_104 = arith.constant 0 : index
    %c0_105 = arith.constant 0 : index
    %c0_106 = arith.constant 0 : index
    %63 = vector.load %arg7[%c0_104, %c0_105, %c0_106] : memref<1x1x128xf32, #tpu.memory_space<vmem>>, vector<1x1x128xf32>
    %64 = vector.shape_cast %63 : vector<1x1x128xf32> to vector<1x128xf32>
    %65 = vector.broadcast %64 : vector<1x128xf32> to vector<128x128xf32>
    %66 = arith.mulf %62, %65 : vector<128x128xf32>
    %c0_107 = arith.constant 0 : index
    %c0_108 = arith.constant 0 : index
    %c0_109 = arith.constant 0 : index
    %67 = vector.load %arg8[%c0_107, %c0_108, %c0_109] : memref<1x1x128xf32, #tpu.memory_space<vmem>>, vector<1x1x128xf32>
    %68 = vector.shape_cast %67 : vector<1x1x128xf32> to vector<1x128xf32>
    %69 = vector.broadcast %68 : vector<1x128xf32> to vector<128x128xf32>
    %70 = arith.addf %66, %69 : vector<128x128xf32>
    %cst_110 = arith.constant 0.000000e+00 : f32
    %71 = vector.broadcast %cst_110 : f32 to vector<128x128xf32>
    %72 = arith.maximumf %70, %71 : vector<128x128xf32>
    %73 = vector.shape_cast %72 : vector<128x128xf32> to vector<2x8x8x128xf32>
    %74 = arith.truncf %73 : vector<2x8x8x128xf32> to vector<2x8x8x128xbf16>
    %c0_111 = arith.constant 0 : index
    %c0_112 = arith.constant 0 : index
    %c0_113 = arith.constant 0 : index
    %c0_114 = arith.constant 0 : index
    %75 = vector.load %arg9[%c0_111, %c0_112, %c0_113, %c0_114] : memref<2x8x8x128xbf16, #tpu.memory_space<vmem>>, vector<2x8x8x128xbf16>
    tpu.vector_store %arg9[%c0_111, %c0_112, %c0_113, %c0_114], %74 {strides = array<i32>} : memref<2x8x8x128xbf16, #tpu.memory_space<vmem>>, vector<2x8x8x128xbf16>,
    return
  }
  func.func @transform_0(%arg0: i32, %arg1: i32) -> (i32, i32, i32, i32) {
    %c1_i32 = arith.constant 1 : i32
    %0 = arith.muli %arg0, %c1_i32 : i32
    %1 = arith.addi %0, %arg1 : i32
    %c0_i32 = arith.constant 0 : i32
    %c0_i32_0 = arith.constant 0 : i32
    %c0_i32_1 = arith.constant 0 : i32
    %c0_i32_2 = arith.constant 0 : i32
    return %1, %c0_i32, %c0_i32_0, %c0_i32_1 : i32, i32, i32, i32
  }
  func.func @transform_1(%arg0: i32, %arg1: i32) -> (i32, i32, i32) {
    %c0_i32 = arith.constant 0 : i32
    %c0_i32_0 = arith.constant 0 : i32
    %c0_i32_1 = arith.constant 0 : i32
    return %arg0, %c0_i32, %c0_i32_0 : i32, i32, i32
  }
  func.func @transform_2(%arg0: i32, %arg1: i32) -> (i32, i32, i32) {
    %c0_i32 = arith.constant 0 : i32
    %c0_i32_0 = arith.constant 0 : i32
    %c0_i32_1 = arith.constant 0 : i32
    return %arg0, %c0_i32, %c0_i32_0 : i32, i32, i32
  }
  func.func @transform_3(%arg0: i32, %arg1: i32) -> (i32, i32, i32) {
    %c0_i32 = arith.constant 0 : i32
    %c0_i32_0 = arith.constant 0 : i32
    %c0_i32_1 = arith.constant 0 : i32
    return %arg0, %c0_i32, %c0_i32_0 : i32, i32, i32
  }
  func.func @transform_4(%arg0: i32, %arg1: i32) -> (i32, i32, i32) {
    %c0_i32 = arith.constant 0 : i32
    %c0_i32_0 = arith.constant 0 : i32
    %c0_i32_1 = arith.constant 0 : i32
    return %arg0, %c0_i32, %c0_i32_0 : i32, i32, i32
  }
  func.func @transform_5(%arg0: i32, %arg1: i32) -> (i32, i32, i32) {
    %c0_i32 = arith.constant 0 : i32
    %c0_i32_0 = arith.constant 0 : i32
    %c0_i32_1 = arith.constant 0 : i32
    return %arg0, %c0_i32, %c0_i32_0 : i32, i32, i32
  }
  func.func @transform_6(%arg0: i32, %arg1: i32) -> (i32, i32, i32) {
    %c0_i32 = arith.constant 0 : i32
    %c0_i32_0 = arith.constant 0 : i32
    %c0_i32_1 = arith.constant 0 : i32
    return %arg0, %c0_i32, %c0_i32_0 : i32, i32, i32
  }
  func.func @transform_7(%arg0: i32, %arg1: i32) -> (i32, i32, i32, i32) {
    %c1_i32 = arith.constant 1 : i32
    %0 = arith.muli %arg0, %c1_i32 : i32
    %1 = arith.addi %0, %arg1 : i32
    %c0_i32 = arith.constant 0 : i32
    %c0_i32_0 = arith.constant 0 : i32
    %c0_i32_1 = arith.constant 0 : i32
    %c0_i32_2 = arith.constant 0 : i32
    return %1, %c0_i32, %c0_i32_0, %c0_i32_1 : i32, i32, i32, i32
  }
}

module attributes {stable_mosaic.version = 11 : i64} {
  func.func @_spatial_fusion_kernel(%arg0: i32, %arg1: memref<128x128xbf16, #tpu.memory_space<vmem>>, %arg2: memref<128x128xf32, #tpu.memory_space<vmem>>, %arg3: memref<128x128xbf16, #tpu.memory_space<vmem>>, %arg4: memref<128x128xbf16, #tpu.memory_space<vmem>>, %arg5: memref<128x128xbf16, #tpu.memory_space<vmem>>) attributes {dimension_semantics = [#tpu.dimension_semantics<parallel>], iteration_bounds = array<i64: 1>, scalar_prefetch = 0 : i64, scratch_operands = 0 : i64, tpu.core_type = #tpu.core_type<tc>, window_params = [{transform_indices = @transform_0, window_bounds = array<i64: 128, 128>}, {transform_indices = @transform_1, window_bounds = array<i64: 128, 128>}, {transform_indices = @transform_2, window_bounds = array<i64: 128, 128>}, {transform_indices = @transform_3, window_bounds = array<i64: 128, 128>}, {transform_indices = @transform_4, window_bounds = array<i64: 128, 128>}]} {
    %c0 = arith.constant 0 : index
    %c0_0 = arith.constant 0 : index
    %0 = vector.load %arg1[%c0, %c0_0] : memref<128x128xbf16, #tpu.memory_space<vmem>>, vector<128x128xbf16>
    %1 = arith.extf %0 : vector<128x128xbf16> to vector<128x128xf32>
    %c0_1 = arith.constant 0 : index
    %c0_2 = arith.constant 0 : index
    %2 = vector.load %arg2[%c0_1, %c0_2] : memref<128x128xf32, #tpu.memory_space<vmem>>, vector<128x128xf32>
    %c0_3 = arith.constant 0 : index
    %c0_4 = arith.constant 0 : index
    %3 = vector.load %arg3[%c0_3, %c0_4] : memref<128x128xbf16, #tpu.memory_space<vmem>>, vector<128x128xbf16>
    %4 = arith.extf %3 : vector<128x128xbf16> to vector<128x128xf32>
    %c0_5 = arith.constant 0 : index
    %c0_6 = arith.constant 0 : index
    %5 = vector.load %arg4[%c0_5, %c0_6] : memref<128x128xbf16, #tpu.memory_space<vmem>>, vector<128x128xbf16>
    %6 = arith.extf %5 : vector<128x128xbf16> to vector<128x128xf32>
    %cst = arith.constant dense<0.000000e+00> : vector<128xf32>
    %7 = vector.multi_reduction <add>, %1, %cst [1] : vector<128x128xf32> to vector<128xf32>
    %8 = vector.shape_cast %7 : vector<128xf32> to vector<128x1xf32>
    %cst_7 = arith.constant 2.500000e-01 : f32
    %9 = vector.broadcast %cst_7 : f32 to vector<128x1xf32>
    %10 = arith.mulf %8, %9 : vector<128x1xf32>
    %cst_8 = arith.constant dense<0.000000e+00> : vector<128xf32>
    %11 = vector.multi_reduction <add>, %2, %cst_8 [1] : vector<128x128xf32> to vector<128xf32>
    %12 = vector.shape_cast %11 : vector<128xf32> to vector<128x1xf32>
    %cst_9 = arith.constant 2.500000e-01 : f32
    %13 = vector.broadcast %cst_9 : f32 to vector<128x1xf32>
    %14 = arith.mulf %12, %13 : vector<128x1xf32>
    %cst_10 = arith.constant dense<0.000000e+00> : vector<128xf32>
    %15 = vector.multi_reduction <add>, %4, %cst_10 [1] : vector<128x128xf32> to vector<128xf32>
    %16 = vector.shape_cast %15 : vector<128xf32> to vector<128x1xf32>
    %cst_11 = arith.constant 2.500000e-01 : f32
    %17 = vector.broadcast %cst_11 : f32 to vector<128x1xf32>
    %18 = arith.mulf %16, %17 : vector<128x1xf32>
    %cst_12 = arith.constant dense<0.000000e+00> : vector<128xf32>
    %19 = vector.multi_reduction <add>, %6, %cst_12 [1] : vector<128x128xf32> to vector<128xf32>
    %20 = vector.shape_cast %19 : vector<128xf32> to vector<128x1xf32>
    %cst_13 = arith.constant 2.500000e-01 : f32
    %21 = vector.broadcast %cst_13 : f32 to vector<128x1xf32>
    %22 = arith.mulf %20, %21 : vector<128x1xf32>
    %23 = arith.maximumf %10, %14 : vector<128x1xf32>
    %24 = arith.maximumf %18, %22 : vector<128x1xf32>
    %25 = arith.maximumf %23, %24 : vector<128x1xf32>
    %26 = arith.subf %10, %25 : vector<128x1xf32>
    %27 = math.exp %26 : vector<128x1xf32>
    %28 = arith.subf %14, %25 : vector<128x1xf32>
    %29 = math.exp %28 : vector<128x1xf32>
    %30 = arith.subf %18, %25 : vector<128x1xf32>
    %31 = math.exp %30 : vector<128x1xf32>
    %32 = arith.subf %22, %25 : vector<128x1xf32>
    %33 = math.exp %32 : vector<128x1xf32>
    %34 = arith.addf %27, %29 : vector<128x1xf32>
    %35 = arith.addf %34, %31 : vector<128x1xf32>
    %36 = arith.addf %35, %33 : vector<128x1xf32>
    %cst_14 = arith.constant 0.000000e+00 : f32
    %37 = vector.broadcast %cst_14 : f32 to vector<128x1xf32>
    %38 = arith.subf %37, %25 : vector<128x1xf32>
    %39 = math.exp %38 : vector<128x1xf32>
    %cst_15 = arith.constant 9.99999974E-6 : f32
    %40 = vector.broadcast %cst_15 : f32 to vector<128x1xf32>
    %41 = arith.mulf %40, %39 : vector<128x1xf32>
    %42 = arith.addf %36, %41 : vector<128x1xf32>
    %43 = tpu.reciprocal %42 {approx = true} : vector<128x1xf32> -> vector<128x1xf32>
    %44 = vector.broadcast %27 : vector<128x1xf32> to vector<128x128xf32>
    %45 = arith.mulf %44, %1 : vector<128x128xf32>
    %46 = vector.broadcast %29 : vector<128x1xf32> to vector<128x128xf32>
    %47 = arith.mulf %46, %2 : vector<128x128xf32>
    %48 = arith.addf %45, %47 : vector<128x128xf32>
    %49 = vector.broadcast %31 : vector<128x1xf32> to vector<128x128xf32>
    %50 = arith.mulf %49, %4 : vector<128x128xf32>
    %51 = arith.addf %48, %50 : vector<128x128xf32>
    %52 = vector.broadcast %33 : vector<128x1xf32> to vector<128x128xf32>
    %53 = arith.mulf %52, %6 : vector<128x128xf32>
    %54 = arith.addf %51, %53 : vector<128x128xf32>
    %55 = vector.broadcast %43 : vector<128x1xf32> to vector<128x128xf32>
    %56 = arith.mulf %54, %55 : vector<128x128xf32>
    %57 = arith.truncf %56 : vector<128x128xf32> to vector<128x128xbf16>
    %c0_16 = arith.constant 0 : index
    %c0_17 = arith.constant 0 : index
    %58 = vector.load %arg5[%c0_16, %c0_17] : memref<128x128xbf16, #tpu.memory_space<vmem>>, vector<128x128xbf16>
    tpu.vector_store %arg5[%c0_16, %c0_17], %57 {strides = array<i32>} : memref<128x128xbf16, #tpu.memory_space<vmem>>, vector<128x128xbf16>,
    return
  }
  func.func @transform_0(%arg0: i32) -> (i32, i32) {
    %c0_i32 = arith.constant 0 : i32
    %c0_i32_0 = arith.constant 0 : i32
    return %arg0, %c0_i32 : i32, i32
  }
  func.func @transform_1(%arg0: i32) -> (i32, i32) {
    %c0_i32 = arith.constant 0 : i32
    %c0_i32_0 = arith.constant 0 : i32
    return %arg0, %c0_i32 : i32, i32
  }
  func.func @transform_2(%arg0: i32) -> (i32, i32) {
    %c0_i32 = arith.constant 0 : i32
    %c0_i32_0 = arith.constant 0 : i32
    return %arg0, %c0_i32 : i32, i32
  }
  func.func @transform_3(%arg0: i32) -> (i32, i32) {
    %c0_i32 = arith.constant 0 : i32
    %c0_i32_0 = arith.constant 0 : i32
    return %arg0, %c0_i32 : i32, i32
  }
  func.func @transform_4(%arg0: i32) -> (i32, i32) {
    %c0_i32 = arith.constant 0 : i32
    %c0_i32_0 = arith.constant 0 : i32
    return %arg0, %c0_i32 : i32, i32
  }
}

module attributes {stable_mosaic.version = 11 : i64} {
  func.func @_double_conv_kernel(%arg0: i32, %arg1: i32, %arg2: memref<1x10x10x8xbf16, #tpu.memory_space<vmem>>, %arg3: memref<1x72x4xbf16, #tpu.memory_space<vmem>>, %arg4: memref<1x1x4xf32, #tpu.memory_space<vmem>>, %arg5: memref<1x1x4xf32, #tpu.memory_space<vmem>>, %arg6: memref<1x36x128xbf16, #tpu.memory_space<vmem>>, %arg7: memref<1x1x128xf32, #tpu.memory_space<vmem>>, %arg8: memref<1x1x128xf32, #tpu.memory_space<vmem>>, %arg9: memref<1x8x8x128xbf16, #tpu.memory_space<vmem>>, %arg10: memref<1x10x10x4xf32, #tpu.memory_space<vmem>>) attributes {dimension_semantics = [#tpu.dimension_semantics<parallel>, #tpu.dimension_semantics<parallel>], iteration_bounds = array<i64: 1, 2>, scalar_prefetch = 0 : i64, scratch_operands = 1 : i64, tpu.core_type = #tpu.core_type<tc>, window_params = [{transform_indices = @transform_0, window_bounds = array<i64: 1, 10, 10, 8>}, {transform_indices = @transform_1, window_bounds = array<i64: 1, 72, 4>}, {transform_indices = @transform_2, window_bounds = array<i64: 1, 1, 4>}, {transform_indices = @transform_3, window_bounds = array<i64: 1, 1, 4>}, {transform_indices = @transform_4, window_bounds = array<i64: 1, 36, 128>}, {transform_indices = @transform_5, window_bounds = array<i64: 1, 1, 128>}, {transform_indices = @transform_6, window_bounds = array<i64: 1, 1, 128>}, {transform_indices = @transform_7, window_bounds = array<i64: 1, 8, 8, 128>}]} {
    %c0 = arith.constant 0 : index
    %c0_0 = arith.constant 0 : index
    %c0_1 = arith.constant 0 : index
    %c0_2 = arith.constant 0 : index
    %0 = vector.load %arg2[%c0, %c0_0, %c0_1, %c0_2] : memref<1x10x10x8xbf16, #tpu.memory_space<vmem>>, vector<1x8x8x8xbf16>
    %1 = vector.shape_cast %0 : vector<1x8x8x8xbf16> to vector<64x8xbf16>
    %c0_3 = arith.constant 0 : index
    %c0_4 = arith.constant 0 : index
    %c1 = arith.constant 1 : index
    %c0_5 = arith.constant 0 : index
    %2 = vector.load %arg2[%c0_3, %c0_4, %c1, %c0_5] : memref<1x10x10x8xbf16, #tpu.memory_space<vmem>>, vector<1x8x8x8xbf16>
    %3 = vector.shape_cast %2 : vector<1x8x8x8xbf16> to vector<64x8xbf16>
    %c0_6 = arith.constant 0 : index
    %c0_7 = arith.constant 0 : index
    %c2 = arith.constant 2 : index
    %c0_8 = arith.constant 0 : index
    %4 = vector.load %arg2[%c0_6, %c0_7, %c2, %c0_8] : memref<1x10x10x8xbf16, #tpu.memory_space<vmem>>, vector<1x8x8x8xbf16>
    %5 = vector.shape_cast %4 : vector<1x8x8x8xbf16> to vector<64x8xbf16>
    %c0_9 = arith.constant 0 : index
    %c1_10 = arith.constant 1 : index
    %c0_11 = arith.constant 0 : index
    %c0_12 = arith.constant 0 : index
    %6 = vector.load %arg2[%c0_9, %c1_10, %c0_11, %c0_12] : memref<1x10x10x8xbf16, #tpu.memory_space<vmem>>, vector<1x8x8x8xbf16>
    %7 = vector.shape_cast %6 : vector<1x8x8x8xbf16> to vector<64x8xbf16>
    %c0_13 = arith.constant 0 : index
    %c1_14 = arith.constant 1 : index
    %c1_15 = arith.constant 1 : index
    %c0_16 = arith.constant 0 : index
    %8 = vector.load %arg2[%c0_13, %c1_14, %c1_15, %c0_16] : memref<1x10x10x8xbf16, #tpu.memory_space<vmem>>, vector<1x8x8x8xbf16>
    %9 = vector.shape_cast %8 : vector<1x8x8x8xbf16> to vector<64x8xbf16>
    %c0_17 = arith.constant 0 : index
    %c1_18 = arith.constant 1 : index
    %c2_19 = arith.constant 2 : index
    %c0_20 = arith.constant 0 : index
    %10 = vector.load %arg2[%c0_17, %c1_18, %c2_19, %c0_20] : memref<1x10x10x8xbf16, #tpu.memory_space<vmem>>, vector<1x8x8x8xbf16>
    %11 = vector.shape_cast %10 : vector<1x8x8x8xbf16> to vector<64x8xbf16>
    %c0_21 = arith.constant 0 : index
    %c2_22 = arith.constant 2 : index
    %c0_23 = arith.constant 0 : index
    %c0_24 = arith.constant 0 : index
    %12 = vector.load %arg2[%c0_21, %c2_22, %c0_23, %c0_24] : memref<1x10x10x8xbf16, #tpu.memory_space<vmem>>, vector<1x8x8x8xbf16>
    %13 = vector.shape_cast %12 : vector<1x8x8x8xbf16> to vector<64x8xbf16>
    %c0_25 = arith.constant 0 : index
    %c2_26 = arith.constant 2 : index
    %c1_27 = arith.constant 1 : index
    %c0_28 = arith.constant 0 : index
    %14 = vector.load %arg2[%c0_25, %c2_26, %c1_27, %c0_28] : memref<1x10x10x8xbf16, #tpu.memory_space<vmem>>, vector<1x8x8x8xbf16>
    %15 = vector.shape_cast %14 : vector<1x8x8x8xbf16> to vector<64x8xbf16>
    %c0_29 = arith.constant 0 : index
    %c2_30 = arith.constant 2 : index
    %c2_31 = arith.constant 2 : index
    %c0_32 = arith.constant 0 : index
    %16 = vector.load %arg2[%c0_29, %c2_30, %c2_31, %c0_32] : memref<1x10x10x8xbf16, #tpu.memory_space<vmem>>, vector<1x8x8x8xbf16>
    %17 = vector.shape_cast %16 : vector<1x8x8x8xbf16> to vector<64x8xbf16>
    %18 = tpu.concatenate %1, %3, %5, %7, %9, %11, %13, %15, %17 in 1 : vector<64x8xbf16>, vector<64x8xbf16>, vector<64x8xbf16>, vector<64x8xbf16>, vector<64x8xbf16>, vector<64x8xbf16>, vector<64x8xbf16>, vector<64x8xbf16>, vector<64x8xbf16> -> vector<64x72xbf16>
    %c0_33 = arith.constant 0 : index
    %c0_34 = arith.constant 0 : index
    %c0_35 = arith.constant 0 : index
    %19 = vector.load %arg3[%c0_33, %c0_34, %c0_35] : memref<1x72x4xbf16, #tpu.memory_space<vmem>>, vector<1x72x4xbf16>
    %20 = vector.shape_cast %19 : vector<1x72x4xbf16> to vector<72x4xbf16>
    %cst = arith.constant dense<0.000000e+00> : vector<64x4xf32>
    %21 = tpu.matmul %18, %20, %cst {dimension_numbers = #tpu.dot_dimension_numbers<[1], [0], [0], [1], [0, 0, 1, 1], [], []>} : vector<64x72xbf16>, vector<72x4xbf16>, vector<64x4xf32> -> vector<64x4xf32>
    %c0_36 = arith.constant 0 : index
    %c0_37 = arith.constant 0 : index
    %c0_38 = arith.constant 0 : index
    %22 = vector.load %arg4[%c0_36, %c0_37, %c0_38] : memref<1x1x4xf32, #tpu.memory_space<vmem>>, vector<1x1x4xf32>
    %23 = vector.shape_cast %22 : vector<1x1x4xf32> to vector<1x4xf32>
    %24 = vector.broadcast %23 : vector<1x4xf32> to vector<64x4xf32>
    %25 = arith.mulf %21, %24 : vector<64x4xf32>
    %c0_39 = arith.constant 0 : index
    %c0_40 = arith.constant 0 : index
    %c0_41 = arith.constant 0 : index
    %26 = vector.load %arg5[%c0_39, %c0_40, %c0_41] : memref<1x1x4xf32, #tpu.memory_space<vmem>>, vector<1x1x4xf32>
    %27 = vector.shape_cast %26 : vector<1x1x4xf32> to vector<1x4xf32>
    %28 = vector.broadcast %27 : vector<1x4xf32> to vector<64x4xf32>
    %29 = arith.addf %25, %28 : vector<64x4xf32>
    %cst_42 = arith.constant 0.000000e+00 : f32
    %30 = vector.broadcast %cst_42 : f32 to vector<64x4xf32>
    %31 = arith.maximumf %29, %30 : vector<64x4xf32>
    %cst_43 = arith.constant 0.000000e+00 : f32
    %32 = vector.broadcast %cst_43 : f32 to vector<1x1x10x4xf32>
    %cst_44 = arith.constant 0.000000e+00 : f32
    %33 = vector.broadcast %cst_44 : f32 to vector<1x10x1x4xf32>
    %c0_45 = arith.constant 0 : index
    %c0_46 = arith.constant 0 : index
    %c0_47 = arith.constant 0 : index
    %c0_48 = arith.constant 0 : index
    %34 = vector.load %arg10[%c0_45, %c0_46, %c0_47, %c0_48] : memref<1x10x10x4xf32, #tpu.memory_space<vmem>>, vector<1x1x10x4xf32>
    tpu.vector_store %arg10[%c0_45, %c0_46, %c0_47, %c0_48], %32 {strides = array<i32>} : memref<1x10x10x4xf32, #tpu.memory_space<vmem>>, vector<1x1x10x4xf32>,
    %c0_49 = arith.constant 0 : index
    %c9 = arith.constant 9 : index
    %c0_50 = arith.constant 0 : index
    %c0_51 = arith.constant 0 : index
    %35 = vector.load %arg10[%c0_49, %c9, %c0_50, %c0_51] : memref<1x10x10x4xf32, #tpu.memory_space<vmem>>, vector<1x1x10x4xf32>
    tpu.vector_store %arg10[%c0_49, %c9, %c0_50, %c0_51], %32 {strides = array<i32>} : memref<1x10x10x4xf32, #tpu.memory_space<vmem>>, vector<1x1x10x4xf32>,
    %c0_52 = arith.constant 0 : index
    %c0_53 = arith.constant 0 : index
    %c0_54 = arith.constant 0 : index
    %c0_55 = arith.constant 0 : index
    %36 = vector.load %arg10[%c0_52, %c0_53, %c0_54, %c0_55] : memref<1x10x10x4xf32, #tpu.memory_space<vmem>>, vector<1x10x1x4xf32>
    tpu.vector_store %arg10[%c0_52, %c0_53, %c0_54, %c0_55], %33 {strides = array<i32>} : memref<1x10x10x4xf32, #tpu.memory_space<vmem>>, vector<1x10x1x4xf32>,
    %c0_56 = arith.constant 0 : index
    %c0_57 = arith.constant 0 : index
    %c9_58 = arith.constant 9 : index
    %c0_59 = arith.constant 0 : index
    %37 = vector.load %arg10[%c0_56, %c0_57, %c9_58, %c0_59] : memref<1x10x10x4xf32, #tpu.memory_space<vmem>>, vector<1x10x1x4xf32>
    tpu.vector_store %arg10[%c0_56, %c0_57, %c9_58, %c0_59], %33 {strides = array<i32>} : memref<1x10x10x4xf32, #tpu.memory_space<vmem>>, vector<1x10x1x4xf32>,
    %38 = vector.shape_cast %31 : vector<64x4xf32> to vector<1x8x8x4xf32>
    %c0_60 = arith.constant 0 : index
    %c1_61 = arith.constant 1 : index
    %c1_62 = arith.constant 1 : index
    %c0_63 = arith.constant 0 : index
    %39 = vector.load %arg10[%c0_60, %c1_61, %c1_62, %c0_63] : memref<1x10x10x4xf32, #tpu.memory_space<vmem>>, vector<1x8x8x4xf32>
    tpu.vector_store %arg10[%c0_60, %c1_61, %c1_62, %c0_63], %38 {strides = array<i32>} : memref<1x10x10x4xf32, #tpu.memory_space<vmem>>, vector<1x8x8x4xf32>,
    %c0_64 = arith.constant 0 : index
    %c0_65 = arith.constant 0 : index
    %c0_66 = arith.constant 0 : index
    %c0_67 = arith.constant 0 : index
    %40 = vector.load %arg10[%c0_64, %c0_65, %c0_66, %c0_67] : memref<1x10x10x4xf32, #tpu.memory_space<vmem>>, vector<1x8x8x4xf32>
    %41 = vector.shape_cast %40 : vector<1x8x8x4xf32> to vector<64x4xf32>
    %c0_68 = arith.constant 0 : index
    %c0_69 = arith.constant 0 : index
    %c1_70 = arith.constant 1 : index
    %c0_71 = arith.constant 0 : index
    %42 = vector.load %arg10[%c0_68, %c0_69, %c1_70, %c0_71] : memref<1x10x10x4xf32, #tpu.memory_space<vmem>>, vector<1x8x8x4xf32>
    %43 = vector.shape_cast %42 : vector<1x8x8x4xf32> to vector<64x4xf32>
    %c0_72 = arith.constant 0 : index
    %c0_73 = arith.constant 0 : index
    %c2_74 = arith.constant 2 : index
    %c0_75 = arith.constant 0 : index
    %44 = vector.load %arg10[%c0_72, %c0_73, %c2_74, %c0_75] : memref<1x10x10x4xf32, #tpu.memory_space<vmem>>, vector<1x8x8x4xf32>
    %45 = vector.shape_cast %44 : vector<1x8x8x4xf32> to vector<64x4xf32>
    %c0_76 = arith.constant 0 : index
    %c1_77 = arith.constant 1 : index
    %c0_78 = arith.constant 0 : index
    %c0_79 = arith.constant 0 : index
    %46 = vector.load %arg10[%c0_76, %c1_77, %c0_78, %c0_79] : memref<1x10x10x4xf32, #tpu.memory_space<vmem>>, vector<1x8x8x4xf32>
    %47 = vector.shape_cast %46 : vector<1x8x8x4xf32> to vector<64x4xf32>
    %c0_80 = arith.constant 0 : index
    %c1_81 = arith.constant 1 : index
    %c1_82 = arith.constant 1 : index
    %c0_83 = arith.constant 0 : index
    %48 = vector.load %arg10[%c0_80, %c1_81, %c1_82, %c0_83] : memref<1x10x10x4xf32, #tpu.memory_space<vmem>>, vector<1x8x8x4xf32>
    %49 = vector.shape_cast %48 : vector<1x8x8x4xf32> to vector<64x4xf32>
    %c0_84 = arith.constant 0 : index
    %c1_85 = arith.constant 1 : index
    %c2_86 = arith.constant 2 : index
    %c0_87 = arith.constant 0 : index
    %50 = vector.load %arg10[%c0_84, %c1_85, %c2_86, %c0_87] : memref<1x10x10x4xf32, #tpu.memory_space<vmem>>, vector<1x8x8x4xf32>
    %51 = vector.shape_cast %50 : vector<1x8x8x4xf32> to vector<64x4xf32>
    %c0_88 = arith.constant 0 : index
    %c2_89 = arith.constant 2 : index
    %c0_90 = arith.constant 0 : index
    %c0_91 = arith.constant 0 : index
    %52 = vector.load %arg10[%c0_88, %c2_89, %c0_90, %c0_91] : memref<1x10x10x4xf32, #tpu.memory_space<vmem>>, vector<1x8x8x4xf32>
    %53 = vector.shape_cast %52 : vector<1x8x8x4xf32> to vector<64x4xf32>
    %c0_92 = arith.constant 0 : index
    %c2_93 = arith.constant 2 : index
    %c1_94 = arith.constant 1 : index
    %c0_95 = arith.constant 0 : index
    %54 = vector.load %arg10[%c0_92, %c2_93, %c1_94, %c0_95] : memref<1x10x10x4xf32, #tpu.memory_space<vmem>>, vector<1x8x8x4xf32>
    %55 = vector.shape_cast %54 : vector<1x8x8x4xf32> to vector<64x4xf32>
    %c0_96 = arith.constant 0 : index
    %c2_97 = arith.constant 2 : index
    %c2_98 = arith.constant 2 : index
    %c0_99 = arith.constant 0 : index
    %56 = vector.load %arg10[%c0_96, %c2_97, %c2_98, %c0_99] : memref<1x10x10x4xf32, #tpu.memory_space<vmem>>, vector<1x8x8x4xf32>
    %57 = vector.shape_cast %56 : vector<1x8x8x4xf32> to vector<64x4xf32>
    %58 = tpu.concatenate %41, %43, %45, %47, %49, %51, %53, %55, %57 in 1 : vector<64x4xf32>, vector<64x4xf32>, vector<64x4xf32>, vector<64x4xf32>, vector<64x4xf32>, vector<64x4xf32>, vector<64x4xf32>, vector<64x4xf32>, vector<64x4xf32> -> vector<64x36xf32>
    %59 = arith.truncf %58 : vector<64x36xf32> to vector<64x36xbf16>
    %c0_100 = arith.constant 0 : index
    %c0_101 = arith.constant 0 : index
    %c0_102 = arith.constant 0 : index
    %60 = vector.load %arg6[%c0_100, %c0_101, %c0_102] : memref<1x36x128xbf16, #tpu.memory_space<vmem>>, vector<1x36x128xbf16>
    %61 = vector.shape_cast %60 : vector<1x36x128xbf16> to vector<36x128xbf16>
    %cst_103 = arith.constant dense<0.000000e+00> : vector<64x128xf32>
    %62 = tpu.matmul %59, %61, %cst_103 {dimension_numbers = #tpu.dot_dimension_numbers<[1], [0], [0], [1], [0, 0, 1, 1], [], []>} : vector<64x36xbf16>, vector<36x128xbf16>, vector<64x128xf32> -> vector<64x128xf32>
    %c0_104 = arith.constant 0 : index
    %c0_105 = arith.constant 0 : index
    %c0_106 = arith.constant 0 : index
    %63 = vector.load %arg7[%c0_104, %c0_105, %c0_106] : memref<1x1x128xf32, #tpu.memory_space<vmem>>, vector<1x1x128xf32>
    %64 = vector.shape_cast %63 : vector<1x1x128xf32> to vector<1x128xf32>
    %65 = vector.broadcast %64 : vector<1x128xf32> to vector<64x128xf32>
    %66 = arith.mulf %62, %65 : vector<64x128xf32>
    %c0_107 = arith.constant 0 : index
    %c0_108 = arith.constant 0 : index
    %c0_109 = arith.constant 0 : index
    %67 = vector.load %arg8[%c0_107, %c0_108, %c0_109] : memref<1x1x128xf32, #tpu.memory_space<vmem>>, vector<1x1x128xf32>
    %68 = vector.shape_cast %67 : vector<1x1x128xf32> to vector<1x128xf32>
    %69 = vector.broadcast %68 : vector<1x128xf32> to vector<64x128xf32>
    %70 = arith.addf %66, %69 : vector<64x128xf32>
    %cst_110 = arith.constant 0.000000e+00 : f32
    %71 = vector.broadcast %cst_110 : f32 to vector<64x128xf32>
    %72 = arith.maximumf %70, %71 : vector<64x128xf32>
    %73 = vector.shape_cast %72 : vector<64x128xf32> to vector<1x8x8x128xf32>
    %74 = arith.truncf %73 : vector<1x8x8x128xf32> to vector<1x8x8x128xbf16>
    %c0_111 = arith.constant 0 : index
    %c0_112 = arith.constant 0 : index
    %c0_113 = arith.constant 0 : index
    %c0_114 = arith.constant 0 : index
    %75 = vector.load %arg9[%c0_111, %c0_112, %c0_113, %c0_114] : memref<1x8x8x128xbf16, #tpu.memory_space<vmem>>, vector<1x8x8x128xbf16>
    tpu.vector_store %arg9[%c0_111, %c0_112, %c0_113, %c0_114], %74 {strides = array<i32>} : memref<1x8x8x128xbf16, #tpu.memory_space<vmem>>, vector<1x8x8x128xbf16>,
    return
  }
  func.func @transform_0(%arg0: i32, %arg1: i32) -> (i32, i32, i32, i32) {
    %c2_i32 = arith.constant 2 : i32
    %0 = arith.muli %arg0, %c2_i32 : i32
    %1 = arith.addi %0, %arg1 : i32
    %c0_i32 = arith.constant 0 : i32
    %c0_i32_0 = arith.constant 0 : i32
    %c0_i32_1 = arith.constant 0 : i32
    %c0_i32_2 = arith.constant 0 : i32
    return %1, %c0_i32, %c0_i32_0, %c0_i32_1 : i32, i32, i32, i32
  }
  func.func @transform_1(%arg0: i32, %arg1: i32) -> (i32, i32, i32) {
    %c0_i32 = arith.constant 0 : i32
    %c0_i32_0 = arith.constant 0 : i32
    %c0_i32_1 = arith.constant 0 : i32
    return %arg0, %c0_i32, %c0_i32_0 : i32, i32, i32
  }
  func.func @transform_2(%arg0: i32, %arg1: i32) -> (i32, i32, i32) {
    %c0_i32 = arith.constant 0 : i32
    %c0_i32_0 = arith.constant 0 : i32
    %c0_i32_1 = arith.constant 0 : i32
    return %arg0, %c0_i32, %c0_i32_0 : i32, i32, i32
  }
  func.func @transform_3(%arg0: i32, %arg1: i32) -> (i32, i32, i32) {
    %c0_i32 = arith.constant 0 : i32
    %c0_i32_0 = arith.constant 0 : i32
    %c0_i32_1 = arith.constant 0 : i32
    return %arg0, %c0_i32, %c0_i32_0 : i32, i32, i32
  }
  func.func @transform_4(%arg0: i32, %arg1: i32) -> (i32, i32, i32) {
    %c0_i32 = arith.constant 0 : i32
    %c0_i32_0 = arith.constant 0 : i32
    %c0_i32_1 = arith.constant 0 : i32
    return %arg0, %c0_i32, %c0_i32_0 : i32, i32, i32
  }
  func.func @transform_5(%arg0: i32, %arg1: i32) -> (i32, i32, i32) {
    %c0_i32 = arith.constant 0 : i32
    %c0_i32_0 = arith.constant 0 : i32
    %c0_i32_1 = arith.constant 0 : i32
    return %arg0, %c0_i32, %c0_i32_0 : i32, i32, i32
  }
  func.func @transform_6(%arg0: i32, %arg1: i32) -> (i32, i32, i32) {
    %c0_i32 = arith.constant 0 : i32
    %c0_i32_0 = arith.constant 0 : i32
    %c0_i32_1 = arith.constant 0 : i32
    return %arg0, %c0_i32, %c0_i32_0 : i32, i32, i32
  }
  func.func @transform_7(%arg0: i32, %arg1: i32) -> (i32, i32, i32, i32) {
    %c2_i32 = arith.constant 2 : i32
    %0 = arith.muli %arg0, %c2_i32 : i32
    %1 = arith.addi %0, %arg1 : i32
    %c0_i32 = arith.constant 0 : i32
    %c0_i32_0 = arith.constant 0 : i32
    %c0_i32_1 = arith.constant 0 : i32
    %c0_i32_2 = arith.constant 0 : i32
    return %1, %c0_i32, %c0_i32_0, %c0_i32_1 : i32, i32, i32, i32
  }
}

</mosaic_0001>

<llo_original>
// kernel: up_dense_2_softmax_forward.4
$region0: #{up_dense_2_softmax_forward.4}
  #allocation0 [shape = 'u32[]', space=smem, size = 0x4, offset = 0x4, fixed_abs, tag = 'smem constant byte address 0x4 - core index']
  #allocation1 [shape = 'u32[144,128]{1,0:T(1,128)}', space=vmem, size = 0x12000, scoped, tag = 'internal scratch']
  %s0 = inlined_call_operand.vmem [shape: bf16[128,128], index: 0, kind: input, shape index: {}]
  %s1 = inlined_call_operand.vmem [shape: f32[128,128], index: 1, kind: input, shape index: {}]
  %s2 = inlined_call_operand.vmem [shape: bf16[128,128], index: 2, kind: input, shape index: {}]
  %s3 = inlined_call_operand.vmem [shape: bf16[128,128], index: 3, kind: input, shape index: {}]
  %s4 = inlined_call_operand.vmem [shape: bf16[128,128], index: 4, kind: output, shape index: {}]
  %s5 = sld [smem:[#allocation0]]
  $region26: #{up_dense_2_softmax_forward.4} parent=0
    _
  %s7 = ssub.s32 1, %s5
  %s8 = scalar_select 0, %s7, %s5
  // Predicated region
  $region2: #{up_dense_2_softmax_forward.4} parent=0 // pred_check
    _
  $region3: #{up_dense_2_softmax_forward.4} parent=0 // pred_check_branch
    %10 = sbr.rel (0) target = $region5
  $region4: #{up_dense_2_softmax_forward.4} parent=0 // pred_region
    _
  $region5: #{up_dense_2_softmax_forward.4} parent=0 // pred_fallthru
    _
  // Predicated region
  $region6: #{up_dense_2_softmax_forward.4} parent=0 // pred_check
    _
  $region7: #{up_dense_2_softmax_forward.4} parent=0 // pred_check_branch
    %12 = sbr.rel (0) target = $region9
  $region8: #{up_dense_2_softmax_forward.4} parent=0 // pred_region
    _
  $region9: #{up_dense_2_softmax_forward.4} parent=0 // pred_fallthru
    _
  // Predicated region
  $region10: #{up_dense_2_softmax_forward.4} parent=0 // pred_check
    _
  $region11: #{up_dense_2_softmax_forward.4} parent=0 // pred_check_branch
    %14 = sbr.rel (0) target = $region13
  $region12: #{up_dense_2_softmax_forward.4} parent=0 // pred_region
    _
  $region13: #{up_dense_2_softmax_forward.4} parent=0 // pred_fallthru
    _
  // Predicated region
  $region14: #{up_dense_2_softmax_forward.4} parent=0 // pred_check
    _
  $region15: #{up_dense_2_softmax_forward.4} parent=0 // pred_check_branch
    %16 = sbr.rel (0) target = $region17
  $region16: #{up_dense_2_softmax_forward.4} parent=0 // pred_region
    _
  $region17: #{up_dense_2_softmax_forward.4} parent=0 // pred_fallthru
    _
  %v17 = vld [vmem:[%s0] sm:$0xf]
  %v18 = vld [vmem:[%s0 + $0x4] sm:$0xf]
  %v19 = vld [vmem:[%s0 + $0x8] sm:$0xf]
  %v20 = vld [vmem:[%s0 + $0xc] sm:$0xf]
  %v21 = vld [vmem:[%s0 + $0x10] sm:$0xf]
  %v22 = vld [vmem:[%s0 + $0x14] sm:$0xf]
  %v23 = vld [vmem:[%s0 + $0x18] sm:$0xf]
  %v24 = vld [vmem:[%s0 + $0x1c] sm:$0xf]
  %v25 = vld [vmem:[%s0 + $0x20] sm:$0xf]
  %v26 = vld [vmem:[%s0 + $0x24] sm:$0xf]
  %v27 = vld [vmem:[%s0 + $0x28] sm:$0xf]
  %v28 = vld [vmem:[%s0 + $0x2c] sm:$0xf]
  %v29 = vld [vmem:[%s0 + $0x30] sm:$0xf]
  %v30 = vld [vmem:[%s0 + $0x34] sm:$0xf]
  %v31 = vld [vmem:[%s0 + $0x38] sm:$0xf]
  %v32 = vld [vmem:[%s0 + $0x3c] sm:$0xf]
  %v33 = vunpack.c.l.bf16 %v17
  %v34 = vunpack.c.l.bf16 %v18
  %v35 = vunpack.c.l.bf16 %v19
  %v36 = vunpack.c.l.bf16 %v20
  %v37 = vunpack.c.l.bf16 %v21
  %v38 = vunpack.c.l.bf16 %v22
  %v39 = vunpack.c.l.bf16 %v23
  %v40 = vunpack.c.l.bf16 %v24
  %v41 = vunpack.c.l.bf16 %v25
  %v42 = vunpack.c.l.bf16 %v26
  %v43 = vunpack.c.l.bf16 %v27
  %v44 = vunpack.c.l.bf16 %v28
  %v45 = vunpack.c.l.bf16 %v29
  %v46 = vunpack.c.l.bf16 %v30
  %v47 = vunpack.c.l.bf16 %v31
  %v48 = vunpack.c.l.bf16 %v32
  %v49 = vld [vmem:[%s1] sm:$0xff]
  %v50 = vld [vmem:[%s1 + $0x8] sm:$0xff]
  %v51 = vld [vmem:[%s1 + $0x10] sm:$0xff]
  %v52 = vld [vmem:[%s1 + $0x18] sm:$0xff]
  %v53 = vld [vmem:[%s1 + $0x20] sm:$0xff]
  %v54 = vld [vmem:[%s1 + $0x28] sm:$0xff]
  %v55 = vld [vmem:[%s1 + $0x30] sm:$0xff]
  %v56 = vld [vmem:[%s1 + $0x38] sm:$0xff]
  %v57 = vld [vmem:[%s1 + $0x40] sm:$0xff]
  %v58 = vld [vmem:[%s1 + $0x48] sm:$0xff]
  %v59 = vld [vmem:[%s1 + $0x50] sm:$0xff]
  %v60 = vld [vmem:[%s1 + $0x58] sm:$0xff]
  %v61 = vld [vmem:[%s1 + $0x60] sm:$0xff]
  %v62 = vld [vmem:[%s1 + $0x68] sm:$0xff]
  %v63 = vld [vmem:[%s1 + $0x70] sm:$0xff]
  %v64 = vld [vmem:[%s1 + $0x78] sm:$0xff]
  %v65 = vld [vmem:[%s2] sm:$0xf]
  %v66 = vld [vmem:[%s2 + $0x4] sm:$0xf]
  %v67 = vld [vmem:[%s2 + $0x8] sm:$0xf]
  %v68 = vld [vmem:[%s2 + $0xc] sm:$0xf]
  %v69 = vld [vmem:[%s2 + $0x10] sm:$0xf]
  %v70 = vld [vmem:[%s2 + $0x14] sm:$0xf]
  %v71 = vld [vmem:[%s2 + $0x18] sm:$0xf]
  %v72 = vld [vmem:[%s2 + $0x1c] sm:$0xf]
  %v73 = vld [vmem:[%s2 + $0x20] sm:$0xf]
  %v74 = vld [vmem:[%s2 + $0x24] sm:$0xf]
  %v75 = vld [vmem:[%s2 + $0x28] sm:$0xf]
  %v76 = vld [vmem:[%s2 + $0x2c] sm:$0xf]
  %v77 = vld [vmem:[%s2 + $0x30] sm:$0xf]
  %v78 = vld [vmem:[%s2 + $0x34] sm:$0xf]
  %v79 = vld [vmem:[%s2 + $0x38] sm:$0xf]
  %v80 = vld [vmem:[%s2 + $0x3c] sm:$0xf]
  %v81 = vunpack.c.l.bf16 %v65
  %v82 = vunpack.c.l.bf16 %v66
  %v83 = vunpack.c.l.bf16 %v67
  %v84 = vunpack.c.l.bf16 %v68
  %v85 = vunpack.c.l.bf16 %v69
  %v86 = vunpack.c.l.bf16 %v70
  %v87 = vunpack.c.l.bf16 %v71
  %v88 = vunpack.c.l.bf16 %v72
  %v89 = vunpack.c.l.bf16 %v73
  %v90 = vunpack.c.l.bf16 %v74
  %v91 = vunpack.c.l.bf16 %v75
  %v92 = vunpack.c.l.bf16 %v76
  %v93 = vunpack.c.l.bf16 %v77
  %v94 = vunpack.c.l.bf16 %v78
  %v95 = vunpack.c.l.bf16 %v79
  %v96 = vunpack.c.l.bf16 %v80
  %v97 = vld [vmem:[%s3] sm:$0xf]
  %v98 = vld [vmem:[%s3 + $0x4] sm:$0xf]
  %v99 = vld [vmem:[%s3 + $0x8] sm:$0xf]
  %v100 = vld [vmem:[%s3 + $0xc] sm:$0xf]
  %v101 = vld [vmem:[%s3 + $0x10] sm:$0xf]
  %v102 = vld [vmem:[%s3 + $0x14] sm:$0xf]
  %v103 = vld [vmem:[%s3 + $0x18] sm:$0xf]
  %v104 = vld [vmem:[%s3 + $0x1c] sm:$0xf]
  %v105 = vld [vmem:[%s3 + $0x20] sm:$0xf]
  %v106 = vld [vmem:[%s3 + $0x24] sm:$0xf]
  %v107 = vld [vmem:[%s3 + $0x28] sm:$0xf]
  %v108 = vld [vmem:[%s3 + $0x2c] sm:$0xf]
  %v109 = vld [vmem:[%s3 + $0x30] sm:$0xf]
  %v110 = vld [vmem:[%s3 + $0x34] sm:$0xf]
  %v111 = vld [vmem:[%s3 + $0x38] sm:$0xf]
  %v112 = vld [vmem:[%s3 + $0x3c] sm:$0xf]
  %v113 = vunpack.c.l.bf16 %v97
  %v114 = vunpack.c.l.bf16 %v98
  %v115 = vunpack.c.l.bf16 %v99
  %v116 = vunpack.c.l.bf16 %v100
  %v117 = vunpack.c.l.bf16 %v101
  %v118 = vunpack.c.l.bf16 %v102
  %v119 = vunpack.c.l.bf16 %v103
  %v120 = vunpack.c.l.bf16 %v104
  %v121 = vunpack.c.l.bf16 %v105
  %v122 = vunpack.c.l.bf16 %v106
  %v123 = vunpack.c.l.bf16 %v107
  %v124 = vunpack.c.l.bf16 %v108
  %v125 = vunpack.c.l.bf16 %v109
  %v126 = vunpack.c.l.bf16 %v110
  %v127 = vunpack.c.l.bf16 %v111
  %v128 = vunpack.c.l.bf16 %v112
  %129 = vadd.xlane.f32.xlu0 %v33
  %v130 = vpop.xlane.xlu0 %129
  %131 = vadd.xlane.f32.xlu0 %v34
  %v132 = vpop.xlane.xlu0 %131
  %133 = vadd.xlane.f32.xlu0 %v35
  %v134 = vpop.xlane.xlu0 %133
  %135 = vadd.xlane.f32.xlu0 %v36
  %v136 = vpop.xlane.xlu0 %135
  %137 = vadd.xlane.f32.xlu0 %v37
  %v138 = vpop.xlane.xlu0 %137
  %139 = vadd.xlane.f32.xlu0 %v38
  %v140 = vpop.xlane.xlu0 %139
  %141 = vadd.xlane.f32.xlu0 %v39
  %v142 = vpop.xlane.xlu0 %141
  %143 = vadd.xlane.f32.xlu0 %v40
  %v144 = vpop.xlane.xlu0 %143
  %145 = vadd.xlane.f32.xlu0 %v41
  %v146 = vpop.xlane.xlu0 %145
  %147 = vadd.xlane.f32.xlu0 %v42
  %v148 = vpop.xlane.xlu0 %147
  %149 = vadd.xlane.f32.xlu0 %v43
  %v150 = vpop.xlane.xlu0 %149
  %151 = vadd.xlane.f32.xlu0 %v44
  %v152 = vpop.xlane.xlu0 %151
  %153 = vadd.xlane.f32.xlu0 %v45
  %v154 = vpop.xlane.xlu0 %153
  %155 = vadd.xlane.f32.xlu0 %v46
  %v156 = vpop.xlane.xlu0 %155
  %157 = vadd.xlane.f32.xlu0 %v47
  %v158 = vpop.xlane.xlu0 %157
  %159 = vadd.xlane.f32.xlu0 %v48
  %v160 = vpop.xlane.xlu0 %159
  %v161 = vmul.f32 %v130, 0.25
  %v162 = vmul.f32 %v132, 0.25
  %v163 = vmul.f32 %v134, 0.25
  %v164 = vmul.f32 %v136, 0.25
  %v165 = vmul.f32 %v138, 0.25
  %v166 = vmul.f32 %v140, 0.25
  %v167 = vmul.f32 %v142, 0.25
  %v168 = vmul.f32 %v144, 0.25
  %v169 = vmul.f32 %v146, 0.25
  %v170 = vmul.f32 %v148, 0.25
  %v171 = vmul.f32 %v150, 0.25
  %v172 = vmul.f32 %v152, 0.25
  %v173 = vmul.f32 %v154, 0.25
  %v174 = vmul.f32 %v156, 0.25
  %v175 = vmul.f32 %v158, 0.25
  %v176 = vmul.f32 %v160, 0.25
  %177 = vadd.xlane.f32.xlu0 %v49
  %v178 = vpop.xlane.xlu0 %177
  %179 = vadd.xlane.f32.xlu0 %v50
  %v180 = vpop.xlane.xlu0 %179
  %181 = vadd.xlane.f32.xlu0 %v51
  %v182 = vpop.xlane.xlu0 %181
  %183 = vadd.xlane.f32.xlu0 %v52
  %v184 = vpop.xlane.xlu0 %183
  %185 = vadd.xlane.f32.xlu0 %v53
  %v186 = vpop.xlane.xlu0 %185
  %187 = vadd.xlane.f32.xlu0 %v54
  %v188 = vpop.xlane.xlu0 %187
  %189 = vadd.xlane.f32.xlu0 %v55
  %v190 = vpop.xlane.xlu0 %189
  %191 = vadd.xlane.f32.xlu0 %v56
  %v192 = vpop.xlane.xlu0 %191
  %193 = vadd.xlane.f32.xlu0 %v57
  %v194 = vpop.xlane.xlu0 %193
  %195 = vadd.xlane.f32.xlu0 %v58
  %v196 = vpop.xlane.xlu0 %195
  %197 = vadd.xlane.f32.xlu0 %v59
  %v198 = vpop.xlane.xlu0 %197
  %199 = vadd.xlane.f32.xlu0 %v60
  %v200 = vpop.xlane.xlu0 %199
  %201 = vadd.xlane.f32.xlu0 %v61
  %v202 = vpop.xlane.xlu0 %201
  %203 = vadd.xlane.f32.xlu0 %v62
  %v204 = vpop.xlane.xlu0 %203
  %205 = vadd.xlane.f32.xlu0 %v63
  %v206 = vpop.xlane.xlu0 %205
  %207 = vadd.xlane.f32.xlu0 %v64
  %v208 = vpop.xlane.xlu0 %207
  %v209 = vmul.f32 %v178, 0.25
  %v210 = vmul.f32 %v180, 0.25
  %v211 = vmul.f32 %v182, 0.25
  %v212 = vmul.f32 %v184, 0.25
  %v213 = vmul.f32 %v186, 0.25
  %v214 = vmul.f32 %v188, 0.25
  %v215 = vmul.f32 %v190, 0.25
  %v216 = vmul.f32 %v192, 0.25
  %v217 = vmul.f32 %v194, 0.25
  %v218 = vmul.f32 %v196, 0.25
  %v219 = vmul.f32 %v198, 0.25
  %v220 = vmul.f32 %v200, 0.25
  %v221 = vmul.f32 %v202, 0.25
  %v222 = vmul.f32 %v204, 0.25
  %v223 = vmul.f32 %v206, 0.25
  %v224 = vmul.f32 %v208, 0.25
  %225 = vadd.xlane.f32.xlu0 %v81
  %v226 = vpop.xlane.xlu0 %225
  %227 = vadd.xlane.f32.xlu0 %v82
  %v228 = vpop.xlane.xlu0 %227
  %229 = vadd.xlane.f32.xlu0 %v83
  %v230 = vpop.xlane.xlu0 %229
  %231 = vadd.xlane.f32.xlu0 %v84
  %v232 = vpop.xlane.xlu0 %231
  %233 = vadd.xlane.f32.xlu0 %v85
  %v234 = vpop.xlane.xlu0 %233
  %235 = vadd.xlane.f32.xlu0 %v86
  %v236 = vpop.xlane.xlu0 %235
  %237 = vadd.xlane.f32.xlu0 %v87
  %v238 = vpop.xlane.xlu0 %237
  %239 = vadd.xlane.f32.xlu0 %v88
  %v240 = vpop.xlane.xlu0 %239
  %241 = vadd.xlane.f32.xlu0 %v89
  %v242 = vpop.xlane.xlu0 %241
  %243 = vadd.xlane.f32.xlu0 %v90
  %v244 = vpop.xlane.xlu0 %243
  %245 = vadd.xlane.f32.xlu0 %v91
  %v246 = vpop.xlane.xlu0 %245
  %247 = vadd.xlane.f32.xlu0 %v92
  %v248 = vpop.xlane.xlu0 %247
  %249 = vadd.xlane.f32.xlu0 %v93
  %v250 = vpop.xlane.xlu0 %249
  %251 = vadd.xlane.f32.xlu0 %v94
  %v252 = vpop.xlane.xlu0 %251
  %253 = vadd.xlane.f32.xlu0 %v95
  %v254 = vpop.xlane.xlu0 %253
  %255 = vadd.xlane.f32.xlu0 %v96
  %v256 = vpop.xlane.xlu0 %255
  %v257 = vmul.f32 %v226, 0.25
  %v258 = vmul.f32 %v228, 0.25
  %v259 = vmul.f32 %v230, 0.25
  %v260 = vmul.f32 %v232, 0.25
  %v261 = vmul.f32 %v234, 0.25
  %v262 = vmul.f32 %v236, 0.25
  %v263 = vmul.f32 %v238, 0.25
  %v264 = vmul.f32 %v240, 0.25
  %v265 = vmul.f32 %v242, 0.25
  %v266 = vmul.f32 %v244, 0.25
  %v267 = vmul.f32 %v246, 0.25
  %v268 = vmul.f32 %v248, 0.25
  %v269 = vmul.f32 %v250, 0.25
  %v270 = vmul.f32 %v252, 0.25
  %v271 = vmul.f32 %v254, 0.25
  %v272 = vmul.f32 %v256, 0.25
  %273 = vadd.xlane.f32.xlu0 %v113
  %v274 = vpop.xlane.xlu0 %273
  %275 = vadd.xlane.f32.xlu0 %v114
  %v276 = vpop.xlane.xlu0 %275
  %277 = vadd.xlane.f32.xlu0 %v115
  %v278 = vpop.xlane.xlu0 %277
  %279 = vadd.xlane.f32.xlu0 %v116
  %v280 = vpop.xlane.xlu0 %279
  %281 = vadd.xlane.f32.xlu0 %v117
  %v282 = vpop.xlane.xlu0 %281
  %283 = vadd.xlane.f32.xlu0 %v118
  %v284 = vpop.xlane.xlu0 %283
  %285 = vadd.xlane.f32.xlu0 %v119
  %v286 = vpop.xlane.xlu0 %285
  %287 = vadd.xlane.f32.xlu0 %v120
  %v288 = vpop.xlane.xlu0 %287
  %289 = vadd.xlane.f32.xlu0 %v121
  %v290 = vpop.xlane.xlu0 %289
  %291 = vadd.xlane.f32.xlu0 %v122
  %v292 = vpop.xlane.xlu0 %291
  %293 = vadd.xlane.f32.xlu0 %v123
  %v294 = vpop.xlane.xlu0 %293
  %295 = vadd.xlane.f32.xlu0 %v124
  %v296 = vpop.xlane.xlu0 %295
  %297 = vadd.xlane.f32.xlu0 %v125
  %v298 = vpop.xlane.xlu0 %297
  %299 = vadd.xlane.f32.xlu0 %v126
  %v300 = vpop.xlane.xlu0 %299
  %301 = vadd.xlane.f32.xlu0 %v127
  %v302 = vpop.xlane.xlu0 %301
  %303 = vadd.xlane.f32.xlu0 %v128
  %v304 = vpop.xlane.xlu0 %303
  %v305 = vmul.f32 %v274, 0.25
  %v306 = vmul.f32 %v276, 0.25
  %v307 = vmul.f32 %v278, 0.25
  %v308 = vmul.f32 %v280, 0.25
  %v309 = vmul.f32 %v282, 0.25
  %v310 = vmul.f32 %v284, 0.25
  %v311 = vmul.f32 %v286, 0.25
  %v312 = vmul.f32 %v288, 0.25
  %v313 = vmul.f32 %v290, 0.25
  %v314 = vmul.f32 %v292, 0.25
  %v315 = vmul.f32 %v294, 0.25
  %v316 = vmul.f32 %v296, 0.25
  %v317 = vmul.f32 %v298, 0.25
  %v318 = vmul.f32 %v300, 0.25
  %v319 = vmul.f32 %v302, 0.25
  %v320 = vmul.f32 %v304, 0.25
  %v321 = vmax.f32 %v161, %v209
  %v322 = vmax.f32 %v162, %v210
  %v323 = vmax.f32 %v163, %v211
  %v324 = vmax.f32 %v164, %v212
  %v325 = vmax.f32 %v165, %v213
  %v326 = vmax.f32 %v166, %v214
  %v327 = vmax.f32 %v167, %v215
  %v328 = vmax.f32 %v168, %v216
  %v329 = vmax.f32 %v169, %v217
  %v330 = vmax.f32 %v170, %v218
  %v331 = vmax.f32 %v171, %v219
  %v332 = vmax.f32 %v172, %v220
  %v333 = vmax.f32 %v173, %v221
  %v334 = vmax.f32 %v174, %v222
  %v335 = vmax.f32 %v175, %v223
  %v336 = vmax.f32 %v176, %v224
  %v337 = vmax.f32 %v257, %v305
  %v338 = vmax.f32 %v258, %v306
  %v339 = vmax.f32 %v259, %v307
  %v340 = vmax.f32 %v260, %v308
  %v341 = vmax.f32 %v261, %v309
  %v342 = vmax.f32 %v262, %v310
  %v343 = vmax.f32 %v263, %v311
  %v344 = vmax.f32 %v264, %v312
  %v345 = vmax.f32 %v265, %v313
  %v346 = vmax.f32 %v266, %v314
  %v347 = vmax.f32 %v267, %v315
  %v348 = vmax.f32 %v268, %v316
  %v349 = vmax.f32 %v269, %v317
  %v350 = vmax.f32 %v270, %v318
  %v351 = vmax.f32 %v271, %v319
  %v352 = vmax.f32 %v272, %v320
  %v353 = vmax.f32 %v321, %v337
  %v354 = vmax.f32 %v322, %v338
  %v355 = vmax.f32 %v323, %v339
  %v356 = vmax.f32 %v324, %v340
  %v357 = vmax.f32 %v325, %v341
  %v358 = vmax.f32 %v326, %v342
  %v359 = vmax.f32 %v327, %v343
  %v360 = vmax.f32 %v328, %v344
  %v361 = vmax.f32 %v329, %v345
  %v362 = vmax.f32 %v330, %v346
  %v363 = vmax.f32 %v331, %v347
  %v364 = vmax.f32 %v332, %v348
  %v365 = vmax.f32 %v333, %v349
  %v366 = vmax.f32 %v334, %v350
  %v367 = vmax.f32 %v335, %v351
  %v368 = vmax.f32 %v336, %v352
  %v369 = vsub.f32 %v161, %v353
  %v370 = vsub.f32 %v162, %v354
  %v371 = vsub.f32 %v163, %v355
  %v372 = vsub.f32 %v164, %v356
  %v373 = vsub.f32 %v165, %v357
  %v374 = vsub.f32 %v166, %v358
  %v375 = vsub.f32 %v167, %v359
  %v376 = vsub.f32 %v168, %v360
  %v377 = vsub.f32 %v169, %v361
  %v378 = vsub.f32 %v170, %v362
  %v379 = vsub.f32 %v171, %v363
  %v380 = vsub.f32 %v172, %v364
  %v381 = vsub.f32 %v173, %v365
  %v382 = vsub.f32 %v174, %v366
  %v383 = vsub.f32 %v175, %v367
  %v384 = vsub.f32 %v176, %v368
  %v385 = vmul.f32 %v369, 1.442695
  %v386 = vpow.pop %v385
  %v387 = vmul.f32 %v370, 1.442695
  %v388 = vpow.pop %v387
  %v389 = vmul.f32 %v371, 1.442695
  %v390 = vpow.pop %v389
  %v391 = vmul.f32 %v372, 1.442695
  %v392 = vpow.pop %v391
  %v393 = vmul.f32 %v373, 1.442695
  %v394 = vpow.pop %v393
  %v395 = vmul.f32 %v374, 1.442695
  %v396 = vpow.pop %v395
  %v397 = vmul.f32 %v375, 1.442695
  %v398 = vpow.pop %v397
  %v399 = vmul.f32 %v376, 1.442695
  %v400 = vpow.pop %v399
  %v401 = vmul.f32 %v377, 1.442695
  %v402 = vpow.pop %v401
  %v403 = vmul.f32 %v378, 1.442695
  %v404 = vpow.pop %v403
  %v405 = vmul.f32 %v379, 1.442695
  %v406 = vpow.pop %v405
  %v407 = vmul.f32 %v380, 1.442695
  %v408 = vpow.pop %v407
  %v409 = vmul.f32 %v381, 1.442695
  %v410 = vpow.pop %v409
  %v411 = vmul.f32 %v382, 1.442695
  %v412 = vpow.pop %v411
  %v413 = vmul.f32 %v383, 1.442695
  %v414 = vpow.pop %v413
  %v415 = vmul.f32 %v384, 1.442695
  %v416 = vpow.pop %v415
  %v417 = vsub.f32 %v209, %v353
  %v418 = vsub.f32 %v210, %v354
  %v419 = vsub.f32 %v211, %v355
  %v420 = vsub.f32 %v212, %v356
  %v421 = vsub.f32 %v213, %v357
  %v422 = vsub.f32 %v214, %v358
  %v423 = vsub.f32 %v215, %v359
  %v424 = vsub.f32 %v216, %v360
  %v425 = vsub.f32 %v217, %v361
  %v426 = vsub.f32 %v218, %v362
  %v427 = vsub.f32 %v219, %v363
  %v428 = vsub.f32 %v220, %v364
  %v429 = vsub.f32 %v221, %v365
  %v430 = vsub.f32 %v222, %v366
  %v431 = vsub.f32 %v223, %v367
  %v432 = vsub.f32 %v224, %v368
  %v433 = vmul.f32 %v417, 1.442695
  %v434 = vpow.pop %v433
  %v435 = vmul.f32 %v418, 1.442695
  %v436 = vpow.pop %v435
  %v437 = vmul.f32 %v419, 1.442695
  %v438 = vpow.pop %v437
  %v439 = vmul.f32 %v420, 1.442695
  %v440 = vpow.pop %v439
  %v441 = vmul.f32 %v421, 1.442695
  %v442 = vpow.pop %v441
  %v443 = vmul.f32 %v422, 1.442695
  %v444 = vpow.pop %v443
  %v445 = vmul.f32 %v423, 1.442695
  %v446 = vpow.pop %v445
  %v447 = vmul.f32 %v424, 1.442695
  %v448 = vpow.pop %v447
  %v449 = vmul.f32 %v425, 1.442695
  %v450 = vpow.pop %v449
  %v451 = vmul.f32 %v426, 1.442695
  %v452 = vpow.pop %v451
  %v453 = vmul.f32 %v427, 1.442695
  %v454 = vpow.pop %v453
  %v455 = vmul.f32 %v428, 1.442695
  %v456 = vpow.pop %v455
  %v457 = vmul.f32 %v429, 1.442695
  %v458 = vpow.pop %v457
  %v459 = vmul.f32 %v430, 1.442695
  %v460 = vpow.pop %v459
  %v461 = vmul.f32 %v431, 1.442695
  %v462 = vpow.pop %v461
  %v463 = vmul.f32 %v432, 1.442695
  %v464 = vpow.pop %v463
  %v465 = vsub.f32 %v257, %v353
  %v466 = vsub.f32 %v258, %v354
  %v467 = vsub.f32 %v259, %v355
  %v468 = vsub.f32 %v260, %v356
  %v469 = vsub.f32 %v261, %v357
  %v470 = vsub.f32 %v262, %v358
  %v471 = vsub.f32 %v263, %v359
  %v472 = vsub.f32 %v264, %v360
  %v473 = vsub.f32 %v265, %v361
  %v474 = vsub.f32 %v266, %v362
  %v475 = vsub.f32 %v267, %v363
  %v476 = vsub.f32 %v268, %v364
  %v477 = vsub.f32 %v269, %v365
  %v478 = vsub.f32 %v270, %v366
  %v479 = vsub.f32 %v271, %v367
  %v480 = vsub.f32 %v272, %v368
  %v481 = vmul.f32 %v465, 1.442695
  %v482 = vpow.pop %v481
  %v483 = vmul.f32 %v466, 1.442695
  %v484 = vpow.pop %v483
  %v485 = vmul.f32 %v467, 1.442695
  %v486 = vpow.pop %v485
  %v487 = vmul.f32 %v468, 1.442695
  %v488 = vpow.pop %v487
  %v489 = vmul.f32 %v469, 1.442695
  %v490 = vpow.pop %v489
  %v491 = vmul.f32 %v470, 1.442695
  %v492 = vpow.pop %v491
  %v493 = vmul.f32 %v471, 1.442695
  %v494 = vpow.pop %v493
  %v495 = vmul.f32 %v472, 1.442695
  %v496 = vpow.pop %v495
  %v497 = vmul.f32 %v473, 1.442695
  %v498 = vpow.pop %v497
  %v499 = vmul.f32 %v474, 1.442695
  %v500 = vpow.pop %v499
  %v501 = vmul.f32 %v475, 1.442695
  %v502 = vpow.pop %v501
  %v503 = vmul.f32 %v476, 1.442695
  %v504 = vpow.pop %v503
  %v505 = vmul.f32 %v477, 1.442695
  %v506 = vpow.pop %v505
  %v507 = vmul.f32 %v478, 1.442695
  %v508 = vpow.pop %v507
  %v509 = vmul.f32 %v479, 1.442695
  %v510 = vpow.pop %v509
  %v511 = vmul.f32 %v480, 1.442695
  %v512 = vpow.pop %v511
  %v513 = vsub.f32 %v305, %v353
  %v514 = vsub.f32 %v306, %v354
  %v515 = vsub.f32 %v307, %v355
  %v516 = vsub.f32 %v308, %v356
  %v517 = vsub.f32 %v309, %v357
  %v518 = vsub.f32 %v310, %v358
  %v519 = vsub.f32 %v311, %v359
  %v520 = vsub.f32 %v312, %v360
  %v521 = vsub.f32 %v313, %v361
  %v522 = vsub.f32 %v314, %v362
  %v523 = vsub.f32 %v315, %v363
  %v524 = vsub.f32 %v316, %v364
  %v525 = vsub.f32 %v317, %v365
  %v526 = vsub.f32 %v318, %v366
  %v527 = vsub.f32 %v319, %v367
  %v528 = vsub.f32 %v320, %v368
  %v529 = vmul.f32 %v513, 1.442695
  %v530 = vpow.pop %v529
  %v531 = vmul.f32 %v514, 1.442695
  %v532 = vpow.pop %v531
  %v533 = vmul.f32 %v515, 1.442695
  %v534 = vpow.pop %v533
  %v535 = vmul.f32 %v516, 1.442695
  %v536 = vpow.pop %v535
  %v537 = vmul.f32 %v517, 1.442695
  %v538 = vpow.pop %v537
  %v539 = vmul.f32 %v518, 1.442695
  %v540 = vpow.pop %v539
  %v541 = vmul.f32 %v519, 1.442695
  %v542 = vpow.pop %v541
  %v543 = vmul.f32 %v520, 1.442695
  %v544 = vpow.pop %v543
  %v545 = vmul.f32 %v521, 1.442695
  %v546 = vpow.pop %v545
  %v547 = vmul.f32 %v522, 1.442695
  %v548 = vpow.pop %v547
  %v549 = vmul.f32 %v523, 1.442695
  %v550 = vpow.pop %v549
  %v551 = vmul.f32 %v524, 1.442695
  %v552 = vpow.pop %v551
  %v553 = vmul.f32 %v525, 1.442695
  %v554 = vpow.pop %v553
  %v555 = vmul.f32 %v526, 1.442695
  %v556 = vpow.pop %v555
  %v557 = vmul.f32 %v527, 1.442695
  %v558 = vpow.pop %v557
  %v559 = vmul.f32 %v528, 1.442695
  %v560 = vpow.pop %v559
  %v561 = vadd.f32 %v386, %v434
  %v562 = vadd.f32 %v388, %v436
  %v563 = vadd.f32 %v390, %v438
  %v564 = vadd.f32 %v392, %v440
  %v565 = vadd.f32 %v394, %v442
  %v566 = vadd.f32 %v396, %v444
  %v567 = vadd.f32 %v398, %v446
  %v568 = vadd.f32 %v400, %v448
  %v569 = vadd.f32 %v402, %v450
  %v570 = vadd.f32 %v404, %v452
  %v571 = vadd.f32 %v406, %v454
  %v572 = vadd.f32 %v408, %v456
  %v573 = vadd.f32 %v410, %v458
  %v574 = vadd.f32 %v412, %v460
  %v575 = vadd.f32 %v414, %v462
  %v576 = vadd.f32 %v416, %v464
  %v577 = vadd.f32 %v561, %v482
  %v578 = vadd.f32 %v562, %v484
  %v579 = vadd.f32 %v563, %v486
  %v580 = vadd.f32 %v564, %v488
  %v581 = vadd.f32 %v565, %v490
  %v582 = vadd.f32 %v566, %v492
  %v583 = vadd.f32 %v567, %v494
  %v584 = vadd.f32 %v568, %v496
  %v585 = vadd.f32 %v569, %v498
  %v586 = vadd.f32 %v570, %v500
  %v587 = vadd.f32 %v571, %v502
  %v588 = vadd.f32 %v572, %v504
  %v589 = vadd.f32 %v573, %v506
  %v590 = vadd.f32 %v574, %v508
  %v591 = vadd.f32 %v575, %v510
  %v592 = vadd.f32 %v576, %v512
  %v593 = vadd.f32 %v577, %v530
  %v594 = vadd.f32 %v578, %v532
  %v595 = vadd.f32 %v579, %v534
  %v596 = vadd.f32 %v580, %v536
  %v597 = vadd.f32 %v581, %v538
  %v598 = vadd.f32 %v582, %v540
  %v599 = vadd.f32 %v583, %v542
  %v600 = vadd.f32 %v584, %v544
  %v601 = vadd.f32 %v585, %v546
  %v602 = vadd.f32 %v586, %v548
  %v603 = vadd.f32 %v587, %v550
  %v604 = vadd.f32 %v588, %v552
  %v605 = vadd.f32 %v589, %v554
  %v606 = vadd.f32 %v590, %v556
  %v607 = vadd.f32 %v591, %v558
  %v608 = vadd.f32 %v592, %v560
  %v609 = vsub.f32 0.0, %v353
  %v610 = vsub.f32 0.0, %v354
  %v611 = vsub.f32 0.0, %v355
  %v612 = vsub.f32 0.0, %v356
  %v613 = vsub.f32 0.0, %v357
  %v614 = vsub.f32 0.0, %v358
  %v615 = vsub.f32 0.0, %v359
  %v616 = vsub.f32 0.0, %v360
  %v617 = vsub.f32 0.0, %v361
  %v618 = vsub.f32 0.0, %v362
  %v619 = vsub.f32 0.0, %v363
  %v620 = vsub.f32 0.0, %v364
  %v621 = vsub.f32 0.0, %v365
  %v622 = vsub.f32 0.0, %v366
  %v623 = vsub.f32 0.0, %v367
  %v624 = vsub.f32 0.0, %v368
  %v625 = vmul.f32 %v609, 1.442695
  %v626 = vpow.pop %v625
  %v627 = vmul.f32 %v610, 1.442695
  %v628 = vpow.pop %v627
  %v629 = vmul.f32 %v611, 1.442695
  %v630 = vpow.pop %v629
  %v631 = vmul.f32 %v612, 1.442695
  %v632 = vpow.pop %v631
  %v633 = vmul.f32 %v613, 1.442695
  %v634 = vpow.pop %v633
  %v635 = vmul.f32 %v614, 1.442695
  %v636 = vpow.pop %v635
  %v637 = vmul.f32 %v615, 1.442695
  %v638 = vpow.pop %v637
  %v639 = vmul.f32 %v616, 1.442695
  %v640 = vpow.pop %v639
  %v641 = vmul.f32 %v617, 1.442695
  %v642 = vpow.pop %v641
  %v643 = vmul.f32 %v618, 1.442695
  %v644 = vpow.pop %v643
  %v645 = vmul.f32 %v619, 1.442695
  %v646 = vpow.pop %v645
  %v647 = vmul.f32 %v620, 1.442695
  %v648 = vpow.pop %v647
  %v649 = vmul.f32 %v621, 1.442695
  %v650 = vpow.pop %v649
  %v651 = vmul.f32 %v622, 1.442695
  %v652 = vpow.pop %v651
  %v653 = vmul.f32 %v623, 1.442695
  %v654 = vpow.pop %v653
  %v655 = vmul.f32 %v624, 1.442695
  %v656 = vpow.pop %v655
  %v657 = vmul.f32 %v626, 1e-05
  %v658 = vmul.f32 %v628, 1e-05
  %v659 = vmul.f32 %v630, 1e-05
  %v660 = vmul.f32 %v632, 1e-05
  %v661 = vmul.f32 %v634, 1e-05
  %v662 = vmul.f32 %v636, 1e-05
  %v663 = vmul.f32 %v638, 1e-05
  %v664 = vmul.f32 %v640, 1e-05
  %v665 = vmul.f32 %v642, 1e-05
  %v666 = vmul.f32 %v644, 1e-05
  %v667 = vmul.f32 %v646, 1e-05
  %v668 = vmul.f32 %v648, 1e-05
  %v669 = vmul.f32 %v650, 1e-05
  %v670 = vmul.f32 %v652, 1e-05
  %v671 = vmul.f32 %v654, 1e-05
  %v672 = vmul.f32 %v656, 1e-05
  %v673 = vadd.f32 %v593, %v657
  %v674 = vadd.f32 %v594, %v658
  %v675 = vadd.f32 %v595, %v659
  %v676 = vadd.f32 %v596, %v660
  %v677 = vadd.f32 %v597, %v661
  %v678 = vadd.f32 %v598, %v662
  %v679 = vadd.f32 %v599, %v663
  %v680 = vadd.f32 %v600, %v664
  %v681 = vadd.f32 %v601, %v665
  %v682 = vadd.f32 %v602, %v666
  %v683 = vadd.f32 %v603, %v667
  %v684 = vadd.f32 %v604, %v668
  %v685 = vadd.f32 %v605, %v669
  %v686 = vadd.f32 %v606, %v670
  %v687 = vadd.f32 %v607, %v671
  %v688 = vadd.f32 %v608, %v672
  %v689 = vrcp.pop %v673
  %v690 = vrcp.pop %v674
  %v691 = vrcp.pop %v675
  %v692 = vrcp.pop %v676
  %v693 = vrcp.pop %v677
  %v694 = vrcp.pop %v678
  %v695 = vrcp.pop %v679
  %v696 = vrcp.pop %v680
  %v697 = vrcp.pop %v681
  %v698 = vrcp.pop %v682
  %v699 = vrcp.pop %v683
  %v700 = vrcp.pop %v684
  %v701 = vrcp.pop %v685
  %v702 = vrcp.pop %v686
  %v703 = vrcp.pop %v687
  %v704 = vrcp.pop %v688
  %v705 = vmul.f32 %v386, %v33
  %v706 = vmul.f32 %v388, %v34
  %v707 = vmul.f32 %v390, %v35
  %v708 = vmul.f32 %v392, %v36
  %v709 = vmul.f32 %v394, %v37
  %v710 = vmul.f32 %v396, %v38
  %v711 = vmul.f32 %v398, %v39
  %v712 = vmul.f32 %v400, %v40
  %v713 = vmul.f32 %v402, %v41
  %v714 = vmul.f32 %v404, %v42
  %v715 = vmul.f32 %v406, %v43
  %v716 = vmul.f32 %v408, %v44
  %v717 = vmul.f32 %v410, %v45
  %v718 = vmul.f32 %v412, %v46
  %v719 = vmul.f32 %v414, %v47
  %v720 = vmul.f32 %v416, %v48
  %v721 = vmul.f32 %v434, %v49
  %v722 = vmul.f32 %v436, %v50
  %v723 = vmul.f32 %v438, %v51
  %v724 = vmul.f32 %v440, %v52
  %v725 = vmul.f32 %v442, %v53
  %v726 = vmul.f32 %v444, %v54
  %v727 = vmul.f32 %v446, %v55
  %v728 = vmul.f32 %v448, %v56
  %v729 = vmul.f32 %v450, %v57
  %v730 = vmul.f32 %v452, %v58
  %v731 = vmul.f32 %v454, %v59
  %v732 = vmul.f32 %v456, %v60
  %v733 = vmul.f32 %v458, %v61
  %v734 = vmul.f32 %v460, %v62
  %v735 = vmul.f32 %v462, %v63
  %v736 = vmul.f32 %v464, %v64
  %v737 = vadd.f32 %v705, %v721
  %v738 = vadd.f32 %v706, %v722
  %v739 = vadd.f32 %v707, %v723
  %v740 = vadd.f32 %v708, %v724
  %v741 = vadd.f32 %v709, %v725
  %v742 = vadd.f32 %v710, %v726
  %v743 = vadd.f32 %v711, %v727
  %v744 = vadd.f32 %v712, %v728
  %v745 = vadd.f32 %v713, %v729
  %v746 = vadd.f32 %v714, %v730
  %v747 = vadd.f32 %v715, %v731
  %v748 = vadd.f32 %v716, %v732
  %v749 = vadd.f32 %v717, %v733
  %v750 = vadd.f32 %v718, %v734
  %v751 = vadd.f32 %v719, %v735
  %v752 = vadd.f32 %v720, %v736
  %v753 = vmul.f32 %v482, %v81
  %v754 = vmul.f32 %v484, %v82
  %v755 = vmul.f32 %v486, %v83
  %v756 = vmul.f32 %v488, %v84
  %v757 = vmul.f32 %v490, %v85
  %v758 = vmul.f32 %v492, %v86
  %v759 = vmul.f32 %v494, %v87
  %v760 = vmul.f32 %v496, %v88
  %v761 = vmul.f32 %v498, %v89
  %v762 = vmul.f32 %v500, %v90
  %v763 = vmul.f32 %v502, %v91
  %v764 = vmul.f32 %v504, %v92
  %v765 = vmul.f32 %v506, %v93
  %v766 = vmul.f32 %v508, %v94
  %v767 = vmul.f32 %v510, %v95
  %v768 = vmul.f32 %v512, %v96
  %v769 = vadd.f32 %v737, %v753
  %v770 = vadd.f32 %v738, %v754
  %v771 = vadd.f32 %v739, %v755
  %v772 = vadd.f32 %v740, %v756
  %v773 = vadd.f32 %v741, %v757
  %v774 = vadd.f32 %v742, %v758
  %v775 = vadd.f32 %v743, %v759
  %v776 = vadd.f32 %v744, %v760
  %v777 = vadd.f32 %v745, %v761
  %v778 = vadd.f32 %v746, %v762
  %v779 = vadd.f32 %v747, %v763
  %v780 = vadd.f32 %v748, %v764
  %v781 = vadd.f32 %v749, %v765
  %v782 = vadd.f32 %v750, %v766
  %v783 = vadd.f32 %v751, %v767
  %v784 = vadd.f32 %v752, %v768
  %v785 = vmul.f32 %v530, %v113
  %v786 = vmul.f32 %v532, %v114
  %v787 = vmul.f32 %v534, %v115
  %v788 = vmul.f32 %v536, %v116
  %v789 = vmul.f32 %v538, %v117
  %v790 = vmul.f32 %v540, %v118
  %v791 = vmul.f32 %v542, %v119
  %v792 = vmul.f32 %v544, %v120
  %v793 = vmul.f32 %v546, %v121
  %v794 = vmul.f32 %v548, %v122
  %v795 = vmul.f32 %v550, %v123
  %v796 = vmul.f32 %v552, %v124
  %v797 = vmul.f32 %v554, %v125
  %v798 = vmul.f32 %v556, %v126
  %v799 = vmul.f32 %v558, %v127
  %v800 = vmul.f32 %v560, %v128
  %v801 = vadd.f32 %v769, %v785
  %v802 = vadd.f32 %v770, %v786
  %v803 = vadd.f32 %v771, %v787
  %v804 = vadd.f32 %v772, %v788
  %v805 = vadd.f32 %v773, %v789
  %v806 = vadd.f32 %v774, %v790
  %v807 = vadd.f32 %v775, %v791
  %v808 = vadd.f32 %v776, %v792
  %v809 = vadd.f32 %v777, %v793
  %v810 = vadd.f32 %v778, %v794
  %v811 = vadd.f32 %v779, %v795
  %v812 = vadd.f32 %v780, %v796
  %v813 = vadd.f32 %v781, %v797
  %v814 = vadd.f32 %v782, %v798
  %v815 = vadd.f32 %v783, %v799
  %v816 = vadd.f32 %v784, %v800
  %v817 = vmul.f32 %v801, %v689
  %v818 = vmul.f32 %v802, %v690
  %v819 = vmul.f32 %v803, %v691
  %v820 = vmul.f32 %v804, %v692
  %v821 = vmul.f32 %v805, %v693
  %v822 = vmul.f32 %v806, %v694
  %v823 = vmul.f32 %v807, %v695
  %v824 = vmul.f32 %v808, %v696
  %v825 = vmul.f32 %v809, %v697
  %v826 = vmul.f32 %v810, %v698
  %v827 = vmul.f32 %v811, %v699
  %v828 = vmul.f32 %v812, %v700
  %v829 = vmul.f32 %v813, %v701
  %v830 = vmul.f32 %v814, %v702
  %v831 = vmul.f32 %v815, %v703
  %v832 = vmul.f32 %v816, %v704
  %v833 = vpack.c.bf16 %v818, %v817
  %v834 = vpack.c.bf16 %v820, %v819
  %v835 = vpack.c.bf16 %v822, %v821
  %v836 = vpack.c.bf16 %v824, %v823
  %v837 = vpack.c.bf16 %v826, %v825
  %v838 = vpack.c.bf16 %v828, %v827
  %v839 = vpack.c.bf16 %v830, %v829
  %v840 = vpack.c.bf16 %v832, %v831
  %v849 = vunpack.c.l.b16 %v833
  %v850 = vunpack.c.h.b16 %v833
  %v851 = vunpack.c.l.b16 %v834
  %v852 = vunpack.c.h.b16 %v834
  %v853 = vunpack.c.l.b16 %v835
  %v854 = vunpack.c.h.b16 %v835
  %v855 = vunpack.c.l.b16 %v836
  %v856 = vunpack.c.h.b16 %v836
  %v857 = vunpack.c.l.b16 %v837
  %v858 = vunpack.c.h.b16 %v837
  %v859 = vunpack.c.l.b16 %v838
  %v860 = vunpack.c.h.b16 %v838
  %v861 = vunpack.c.l.b16 %v839
  %v862 = vunpack.c.h.b16 %v839
  %v863 = vunpack.c.l.b16 %v840
  %v864 = vunpack.c.h.b16 %v840
  %v865 = vpack.c.b16 %v849, %v849
  %v866 = vpack.c.b16 %v850, %v850
  %v867 = vpack.c.b16 %v851, %v851
  %v868 = vpack.c.b16 %v852, %v852
  %v869 = vpack.c.b16 %v853, %v853
  %v870 = vpack.c.b16 %v854, %v854
  %v871 = vpack.c.b16 %v855, %v855
  %v872 = vpack.c.b16 %v856, %v856
  %v873 = vpack.c.b16 %v857, %v857
  %v874 = vpack.c.b16 %v858, %v858
  %v875 = vpack.c.b16 %v859, %v859
  %v876 = vpack.c.b16 %v860, %v860
  %v877 = vpack.c.b16 %v861, %v861
  %v878 = vpack.c.b16 %v862, %v862
  %v879 = vpack.c.b16 %v863, %v863
  %v880 = vpack.c.b16 %v864, %v864
  %897 = vst [vmem:[%s4] sm:$0xf] %v865
  %898 = vst [vmem:[%s4 + $0x4] sm:$0xf] %v866
  %899 = vst [vmem:[%s4 + $0x8] sm:$0xf] %v867
  %900 = vst [vmem:[%s4 + $0xc] sm:$0xf] %v868
  %901 = vst [vmem:[%s4 + $0x10] sm:$0xf] %v869
  %902 = vst [vmem:[%s4 + $0x14] sm:$0xf] %v870
  %903 = vst [vmem:[%s4 + $0x18] sm:$0xf] %v871
  %904 = vst [vmem:[%s4 + $0x1c] sm:$0xf] %v872
  %905 = vst [vmem:[%s4 + $0x20] sm:$0xf] %v873
  %906 = vst [vmem:[%s4 + $0x24] sm:$0xf] %v874
  %907 = vst [vmem:[%s4 + $0x28] sm:$0xf] %v875
  %908 = vst [vmem:[%s4 + $0x2c] sm:$0xf] %v876
  %909 = vst [vmem:[%s4 + $0x30] sm:$0xf] %v877
  %910 = vst [vmem:[%s4 + $0x34] sm:$0xf] %v878
  %911 = vst [vmem:[%s4 + $0x38] sm:$0xf] %v879
  %912 = vst [vmem:[%s4 + $0x3c] sm:$0xf] %v880
  // Predicated region
  $region18: #{up_dense_2_softmax_forward.4} parent=0 // pred_check
    _
  $region19: #{up_dense_2_softmax_forward.4} parent=0 // pred_check_branch
    %914 = sbr.rel (0) target = $region21
  $region20: #{up_dense_2_softmax_forward.4} parent=0 // pred_region
    _
  $region21: #{up_dense_2_softmax_forward.4} parent=0 // pred_fallthru
    _
  // Predicated region
  $region22: #{up_dense_2_softmax_forward.4} parent=0 // pred_check
    _
  $region23: #{up_dense_2_softmax_forward.4} parent=0 // pred_check_branch
    %916 = sbr.rel (0) target = $region25
  $region24: #{up_dense_2_softmax_forward.4} parent=0 // pred_region
    _
  $region25: #{up_dense_2_softmax_forward.4} parent=0 // pred_fallthru
    _

// kernel: up_dense_2_softmax_forward.5
$region0: #{up_dense_2_softmax_forward.5}
  #allocation0 [shape = 'u32[]', space=smem, size = 0x4, offset = 0x4, fixed_abs, tag = 'smem constant byte address 0x4 - core index']
  #allocation1 [shape = 'u32[144,128]{1,0:T(1,128)}', space=vmem, size = 0x12000, scoped, tag = 'internal scratch']
  #allocation2 [shape = 'f32[1,10,10,4]{3,2,1,0:T(8,128)}', space=vmem, size = 0x14000, scoped, tag = 'scratch operand']
  %s0 = inlined_call_operand.vmem [shape: bf16[2,10,10,8], index: 0, kind: input, shape index: {}]
  %s1 = inlined_call_operand.vmem [shape: bf16[1,72,4], index: 1, kind: input, shape index: {}]
  %s2 = inlined_call_operand.vmem [shape: f32[1,1,4], index: 2, kind: input, shape index: {}]
  %s3 = inlined_call_operand.vmem [shape: f32[1,1,4], index: 3, kind: input, shape index: {}]
  %s4 = inlined_call_operand.vmem [shape: bf16[1,36,128], index: 4, kind: input, shape index: {}]
  %s5 = inlined_call_operand.vmem [shape: f32[1,1,128], index: 5, kind: input, shape index: {}]
  %s6 = inlined_call_operand.vmem [shape: f32[1,1,128], index: 6, kind: input, shape index: {}]
  %s7 = inlined_call_operand.vmem [shape: bf16[2,8,8,128], index: 7, kind: output, shape index: {}]
  %s8 = sld [smem:[#allocation0]]
  $region61: #{up_dense_2_softmax_forward.5} parent=0
    _
  %s10 = ssub.s32 1, %s8
  %s11 = scalar_select 0, %s10, %s8
  loop: start=0, step=1, limit=4
  $region2: #{up_dense_2_softmax_forward.5} parent=0 // loop_pre_header
    _
  $region3: #{up_dense_2_softmax_forward.5} parent=0 // loop_header
    %s13 = sphi 0, %s17
    %p14 = scmp.ge.s32.totalorder %s13, 4
    %s20 = sphi 0, %s32
    %s21 = sphi 0, %s28
    %s22 = sphi 0, %s20
    %s23 = sphi 0, %s21
    %s24 = sphi 0, %s22
    %s25 = sphi 0, %s23
    %s39 = sphi 0, %s41
    %s42 = sphi 0, %s39
    %s43 = sphi 0, %s42
    %s59 = sphi 0, %s43
    %s65 = sphi 0, %s67
    %s68 = sphi 0, %s65
    %s69 = sphi 0, %s68
    %s85 = sphi 0, %s69
    %s91 = sphi 0, %s93
    %s94 = sphi 0, %s91
    %s95 = sphi 0, %s94
    %s111 = sphi 0, %s95
    %s117 = sphi 0, %s119
    %s120 = sphi 0, %s117
    %s121 = sphi 0, %s120
    %s137 = sphi 0, %s121
    %s143 = sphi 0, %s145
    %s146 = sphi 0, %s143
    %s147 = sphi 0, %s146
    %s163 = sphi 0, %s147
    %s169 = sphi 0, %s171
    %s172 = sphi 0, %s169
    %s173 = sphi 0, %s172
    %s189 = sphi 0, %s173
    %s195 = sphi 0, %s197
    %s198 = sphi 0, %s195
    %s199 = sphi 0, %s198
    %s215 = sphi 0, %s199
    %s225 = sphi 0, %s227
    %s228 = sphi 0, %s225
    %s229 = sphi 0, %s228
    %s245 = sphi 0, %s229
  $region4: #{up_dense_2_softmax_forward.5} parent=0 // loop_header_branch
    %16 = sbr.rel (%p14) target = $region8
  $region5: #{up_dense_2_softmax_forward.5} parent=0 // loop_body
    %s18 = ssub.s32 %s13, 1
    %s19 = ssub.s32 %s13, 2
    %s26 = sadd.s32 1, %s21
    %p27 = scmp.ge.s32.totalorder %s26, 2
    %s28 = scalar_select %p27, 0, %s26
    %s29 = sadd.s32 1, %s20
    %s30 = scalar_select %p27, %s29, %s20
    %p31 = scmp.ge.s32.totalorder %s30, 1
    %s32 = scalar_select %p31, 0, %s30
    %s33 = smul.u32 %s20, 2
    %s34 = sadd.s32 %s33, %s21
    %s35 = smul.u32 %s32, 2
    %s36 = sadd.s32 %s35, %s28
    %s37 = ssub.s32 %s34, %s36
    %p38 = scmp.eq.s32.totalorder %s37, 0
    %s40 = sadd.s32 %s39, 1
    %s41 = scalar_select %p38, %s39, %s40
    %p44 = pneg %p38
    %p45 = scmp.eq.s32.totalorder %s13, 1
    %p46 = por %p44, %p45
    %p47 = scmp.ne.s32.totalorder %s39, %s42
    %p48 = scmp.eq.s32.totalorder %s13, 0
    %p49 = por %p47, %p48
    %p50 = scmp.ne.s32.totalorder %s39, %s42
    %p51 = scmp.eq.s32.totalorder %s18, 1
    %p52 = por %p50, %p51
    %p53 = scmp.ne.s32.totalorder %s42, %s43
    %p54 = scmp.eq.s32.totalorder %s18, 0
    %p55 = por %p53, %p54
    %p56 = scmp.ne.s32.totalorder %s42, %s43
    %p57 = scmp.eq.s32.totalorder %s19, 1
    %p58 = por %p56, %p57
    %p60 = scmp.ne.s32.totalorder %s43, %s59
    %p61 = scmp.eq.s32.totalorder %s19, 0
    %p62 = por %p60, %p61
    %s63 = ssub.s32 %s20, %s32
    %p64 = scmp.eq.s32.totalorder %s63, 0
    %s66 = sadd.s32 %s65, 1
    %s67 = scalar_select %p64, %s65, %s66
    %p70 = pneg %p64
    %p71 = scmp.eq.s32.totalorder %s13, 1
    %p72 = por %p70, %p71
    %p73 = scmp.ne.s32.totalorder %s65, %s68
    %p74 = scmp.eq.s32.totalorder %s13, 0
    %p75 = por %p73, %p74
    %p76 = scmp.ne.s32.totalorder %s65, %s68
    %p77 = scmp.eq.s32.totalorder %s18, 1
    %p78 = por %p76, %p77
    %p79 = scmp.ne.s32.totalorder %s68, %s69
    %p80 = scmp.eq.s32.totalorder %s18, 0
    %p81 = por %p79, %p80
    %p82 = scmp.ne.s32.totalorder %s68, %s69
    %p83 = scmp.eq.s32.totalorder %s19, 1
    %p84 = por %p82, %p83
    %p86 = scmp.ne.s32.totalorder %s69, %s85
    %p87 = scmp.eq.s32.totalorder %s19, 0
    %p88 = por %p86, %p87
    %s89 = ssub.s32 %s20, %s32
    %p90 = scmp.eq.s32.totalorder %s89, 0
    %s92 = sadd.s32 %s91, 1
    %s93 = scalar_select %p90, %s91, %s92
    %p96 = pneg %p90
    %p97 = scmp.eq.s32.totalorder %s13, 1
    %p98 = por %p96, %p97
    %p99 = scmp.ne.s32.totalorder %s91, %s94
    %p100 = scmp.eq.s32.totalorder %s13, 0
    %p101 = por %p99, %p100
    %p102 = scmp.ne.s32.totalorder %s91, %s94
    %p103 = scmp.eq.s32.totalorder %s18, 1
    %p104 = por %p102, %p103
    %p105 = scmp.ne.s32.totalorder %s94, %s95
    %p106 = scmp.eq.s32.totalorder %s18, 0
    %p107 = por %p105, %p106
    %p108 = scmp.ne.s32.totalorder %s94, %s95
    %p109 = scmp.eq.s32.totalorder %s19, 1
    %p110 = por %p108, %p109
    %p112 = scmp.ne.s32.totalorder %s95, %s111
    %p113 = scmp.eq.s32.totalorder %s19, 0
    %p114 = por %p112, %p113
    %s115 = ssub.s32 %s20, %s32
    %p116 = scmp.eq.s32.totalorder %s115, 0
    %s118 = sadd.s32 %s117, 1
    %s119 = scalar_select %p116, %s117, %s118
    %p122 = pneg %p116
    %p123 = scmp.eq.s32.totalorder %s13, 1
    %p124 = por %p122, %p123
    %p125 = scmp.ne.s32.totalorder %s117, %s120
    %p126 = scmp.eq.s32.totalorder %s13, 0
    %p127 = por %p125, %p126
    %p128 = scmp.ne.s32.totalorder %s117, %s120
    %p129 = scmp.eq.s32.totalorder %s18, 1
    %p130 = por %p128, %p129
    %p131 = scmp.ne.s32.totalorder %s120, %s121
    %p132 = scmp.eq.s32.totalorder %s18, 0
    %p133 = por %p131, %p132
    %p134 = scmp.ne.s32.totalorder %s120, %s121
    %p135 = scmp.eq.s32.totalorder %s19, 1
    %p136 = por %p134, %p135
    %p138 = scmp.ne.s32.totalorder %s121, %s137
    %p139 = scmp.eq.s32.totalorder %s19, 0
    %p140 = por %p138, %p139
    %s141 = ssub.s32 %s20, %s32
    %p142 = scmp.eq.s32.totalorder %s141, 0
    %s144 = sadd.s32 %s143, 1
    %s145 = scalar_select %p142, %s143, %s144
    %p148 = pneg %p142
    %p149 = scmp.eq.s32.totalorder %s13, 1
    %p150 = por %p148, %p149
    %p151 = scmp.ne.s32.totalorder %s143, %s146
    %p152 = scmp.eq.s32.totalorder %s13, 0
    %p153 = por %p151, %p152
    %p154 = scmp.ne.s32.totalorder %s143, %s146
    %p155 = scmp.eq.s32.totalorder %s18, 1
    %p156 = por %p154, %p155
    %p157 = scmp.ne.s32.totalorder %s146, %s147
    %p158 = scmp.eq.s32.totalorder %s18, 0
    %p159 = por %p157, %p158
    %p160 = scmp.ne.s32.totalorder %s146, %s147
    %p161 = scmp.eq.s32.totalorder %s19, 1
    %p162 = por %p160, %p161
    %p164 = scmp.ne.s32.totalorder %s147, %s163
    %p165 = scmp.eq.s32.totalorder %s19, 0
    %p166 = por %p164, %p165
    %s167 = ssub.s32 %s20, %s32
    %p168 = scmp.eq.s32.totalorder %s167, 0
    %s170 = sadd.s32 %s169, 1
    %s171 = scalar_select %p168, %s169, %s170
    %p174 = pneg %p168
    %p175 = scmp.eq.s32.totalorder %s13, 1
    %p176 = por %p174, %p175
    %p177 = scmp.ne.s32.totalorder %s169, %s172
    %p178 = scmp.eq.s32.totalorder %s13, 0
    %p179 = por %p177, %p178
    %p180 = scmp.ne.s32.totalorder %s169, %s172
    %p181 = scmp.eq.s32.totalorder %s18, 1
    %p182 = por %p180, %p181
    %p183 = scmp.ne.s32.totalorder %s172, %s173
    %p184 = scmp.eq.s32.totalorder %s18, 0
    %p185 = por %p183, %p184
    %p186 = scmp.ne.s32.totalorder %s172, %s173
    %p187 = scmp.eq.s32.totalorder %s19, 1
    %p188 = por %p186, %p187
    %p190 = scmp.ne.s32.totalorder %s173, %s189
    %p191 = scmp.eq.s32.totalorder %s19, 0
    %p192 = por %p190, %p191
    %s193 = ssub.s32 %s20, %s32
    %p194 = scmp.eq.s32.totalorder %s193, 0
    %s196 = sadd.s32 %s195, 1
    %s197 = scalar_select %p194, %s195, %s196
    %p200 = pneg %p194
    %p201 = scmp.eq.s32.totalorder %s13, 1
    %p202 = por %p200, %p201
    %p203 = scmp.ne.s32.totalorder %s195, %s198
    %p204 = scmp.eq.s32.totalorder %s13, 0
    %p205 = por %p203, %p204
    %p206 = scmp.ne.s32.totalorder %s195, %s198
    %p207 = scmp.eq.s32.totalorder %s18, 1
    %p208 = por %p206, %p207
    %p209 = scmp.ne.s32.totalorder %s198, %s199
    %p210 = scmp.eq.s32.totalorder %s18, 0
    %p211 = por %p209, %p210
    %p212 = scmp.ne.s32.totalorder %s198, %s199
    %p213 = scmp.eq.s32.totalorder %s19, 1
    %p214 = por %p212, %p213
    %p216 = scmp.ne.s32.totalorder %s199, %s215
    %p217 = scmp.eq.s32.totalorder %s19, 0
    %p218 = por %p216, %p217
    %s219 = smul.u32 %s20, 2
    %s220 = sadd.s32 %s219, %s21
    %s221 = smul.u32 %s32, 2
    %s222 = sadd.s32 %s221, %s28
    %s223 = ssub.s32 %s220, %s222
    %p224 = scmp.eq.s32.totalorder %s223, 0
    %s226 = sadd.s32 %s225, 1
    %s227 = scalar_select %p224, %s225, %s226
    %p230 = pneg %p224
    %p231 = scmp.eq.s32.totalorder %s13, 1
    %p232 = por %p230, %p231
    %p233 = scmp.ne.s32.totalorder %s225, %s228
    %p234 = scmp.eq.s32.totalorder %s13, 0
    %p235 = por %p233, %p234
    %p236 = scmp.ne.s32.totalorder %s225, %s228
    %p237 = scmp.eq.s32.totalorder %s18, 1
    %p238 = por %p236, %p237
    %p239 = scmp.ne.s32.totalorder %s228, %s229
    %p240 = scmp.eq.s32.totalorder %s18, 0
    %p241 = por %p239, %p240
    %p242 = scmp.ne.s32.totalorder %s228, %s229
    %p243 = scmp.eq.s32.totalorder %s19, 1
    %p244 = por %p242, %p243
    %p246 = scmp.ne.s32.totalorder %s229, %s245
    %p247 = scmp.eq.s32.totalorder %s19, 0
    %p248 = por %p246, %p247
    %p249 = scmp.le.s32.totalorder 1, %s13
    %p250 = scmp.lt.s32.totalorder %s13, 3
    %p251 = pnand %p249, %p250
    %p252 = pneg %p251
    // Predicated region
    $region9: #{up_dense_2_softmax_forward.5} parent=5 // pred_check
      _
    $region10: #{up_dense_2_softmax_forward.5} parent=5 // pred_check_branch
      %254 = sbr.rel (%p251) target = $region12
    $region11: #{up_dense_2_softmax_forward.5} parent=5 // pred_region
      %s255 = ssub.s32 %s13, 1
      // Predicated region
      $region13: #{up_dense_2_softmax_forward.5} parent=11 // pred_check
        %p256 = pneg %p81
      $region14: #{up_dense_2_softmax_forward.5} parent=11 // pred_check_branch
        %258 = sbr.rel (%p256) target = $region16
      $region15: #{up_dense_2_softmax_forward.5} parent=11 // pred_region
        %p259 = scmp.lt.s32.totalorder %s22, 0
        %s260 = scalar_select %p259, %s22, 0
        %s261 = smul.addr %s260, 9
        %s262 = smul.addr %s261, 4
        %s263 = scalar_lea.vmem %s1, %s262
      $region16: #{up_dense_2_softmax_forward.5} parent=11 // pred_fallthru
        _
      // Predicated region
      $region17: #{up_dense_2_softmax_forward.5} parent=11 // pred_check
        %p264 = pneg %p107
      $region18: #{up_dense_2_softmax_forward.5} parent=11 // pred_check_branch
        %266 = sbr.rel (%p264) target = $region20
      $region19: #{up_dense_2_softmax_forward.5} parent=11 // pred_region
        %p267 = scmp.lt.s32.totalorder %s22, 0
        %s268 = scalar_select %p267, %s22, 0
        %s269 = scalar_lea.vmem %s2, %s268
      $region20: #{up_dense_2_softmax_forward.5} parent=11 // pred_fallthru
        _
      // Predicated region
      $region21: #{up_dense_2_softmax_forward.5} parent=11 // pred_check
        %p270 = pneg %p133
      $region22: #{up_dense_2_softmax_forward.5} parent=11 // pred_check_branch
        %272 = sbr.rel (%p270) target = $region24
      $region23: #{up_dense_2_softmax_forward.5} parent=11 // pred_region
        %p273 = scmp.lt.s32.totalorder %s22, 0
        %s274 = scalar_select %p273, %s22, 0
        %s275 = scalar_lea.vmem %s3, %s274
      $region24: #{up_dense_2_softmax_forward.5} parent=11 // pred_fallthru
        _
      // Predicated region
      $region25: #{up_dense_2_softmax_forward.5} parent=11 // pred_check
        %p276 = pneg %p159
      $region26: #{up_dense_2_softmax_forward.5} parent=11 // pred_check_branch
        %278 = sbr.rel (%p276) target = $region28
      $region27: #{up_dense_2_softmax_forward.5} parent=11 // pred_region
        %p279 = scmp.lt.s32.totalorder %s22, 0
        %s280 = scalar_select %p279, %s22, 0
        %s281 = smul.addr %s280, 5
        %s282 = smul.addr %s281, 4
        %s283 = scalar_lea.vmem %s4, %s282
      $region28: #{up_dense_2_softmax_forward.5} parent=11 // pred_fallthru
        _
      // Predicated region
      $region29: #{up_dense_2_softmax_forward.5} parent=11 // pred_check
        %p284 = pneg %p185
      $region30: #{up_dense_2_softmax_forward.5} parent=11 // pred_check_branch
        %286 = sbr.rel (%p284) target = $region32
      $region31: #{up_dense_2_softmax_forward.5} parent=11 // pred_region
        %p287 = scmp.lt.s32.totalorder %s22, 0
        %s288 = scalar_select %p287, %s22, 0
        %s289 = scalar_lea.vmem %s5, %s288
      $region32: #{up_dense_2_softmax_forward.5} parent=11 // pred_fallthru
        _
      // Predicated region
      $region33: #{up_dense_2_softmax_forward.5} parent=11 // pred_check
        %p290 = pneg %p211
      $region34: #{up_dense_2_softmax_forward.5} parent=11 // pred_check_branch
        %292 = sbr.rel (%p290) target = $region36
      $region35: #{up_dense_2_softmax_forward.5} parent=11 // pred_region
        %p293 = scmp.lt.s32.totalorder %s22, 0
        %s294 = scalar_select %p293, %s22, 0
        %s295 = scalar_lea.vmem %s6, %s294
      $region36: #{up_dense_2_softmax_forward.5} parent=11 // pred_fallthru
        _
    $region12: #{up_dense_2_softmax_forward.5} parent=5 // pred_fallthru
      _
    %p296 = scmp.lt.s32.totalorder %s13, 2
    // Predicated region
    $region37: #{up_dense_2_softmax_forward.5} parent=5 // pred_check
      %p297 = pneg %p296
    $region38: #{up_dense_2_softmax_forward.5} parent=5 // pred_check_branch
      %299 = sbr.rel (%p297) target = $region40
    $region39: #{up_dense_2_softmax_forward.5} parent=5 // pred_region
      // Predicated region
      $region41: #{up_dense_2_softmax_forward.5} parent=39 // pred_check
        %p300 = pneg %p49
      $region42: #{up_dense_2_softmax_forward.5} parent=39 // pred_check_branch
        %302 = sbr.rel (%p300) target = $region44
      $region43: #{up_dense_2_softmax_forward.5} parent=39 // pred_region
        %s303 = smul.u32 %s20, 2
        %s304 = sadd.s32 %s303, %s21
        %p305 = scmp.lt.s32.totalorder %s304, 1
        %s306 = scalar_select %p305, %s304, 1
        %s307 = smul.addr %s306, 20
        %s308 = smul.addr %s307, 4
        %s309 = scalar_lea.vmem %s0, %s308
        %s310 = smul.u32 %s20, 2
        %s311 = sadd.s32 %s310, %s21
      $region44: #{up_dense_2_softmax_forward.5} parent=39 // pred_fallthru
        _
    $region40: #{up_dense_2_softmax_forward.5} parent=5 // pred_fallthru
      _
    %p312 = scmp.le.s32.totalorder 1, %s13
    %p313 = scmp.lt.s32.totalorder %s13, 3
    %p314 = pnand %p312, %p313
    %p315 = pneg %p314
    // Predicated region
    $region45: #{up_dense_2_softmax_forward.5} parent=5 // pred_check
      _
    $region46: #{up_dense_2_softmax_forward.5} parent=5 // pred_check_branch
      %317 = sbr.rel (%p314) target = $region48
    $region47: #{up_dense_2_softmax_forward.5} parent=5 // pred_region
      %s318 = ssub.s32 %s13, 1
      %s319 = smul.u32 %s22, 2
      %s320 = sadd.s32 %s319, %s23
      %p321 = scmp.lt.s32.totalorder %s320, 1
      %s322 = scalar_select %p321, %s320, 1
      %s323 = smul.addr %s322, 20
      %s324 = smul.addr %s323, 4
      %s325 = scalar_lea.vmem %s0, %s324
      %p326 = pneg %p55
      %p327 = pneg %p52
      %p328 = scmp.lt.s32.totalorder %s22, 0
      %s329 = scalar_select %p328, %s22, 0
      %s330 = smul.addr %s329, 9
      %s331 = smul.addr %s330, 4
      %s332 = scalar_lea.vmem %s1, %s331
      %p333 = pneg %p81
      %p334 = pneg %p78
      %p335 = scmp.lt.s32.totalorder %s22, 0
      %s336 = scalar_select %p335, %s22, 0
      %s337 = scalar_lea.vmem %s2, %s336
      %p338 = pneg %p107
      %p339 = pneg %p104
      %p340 = scmp.lt.s32.totalorder %s22, 0
      %s341 = scalar_select %p340, %s22, 0
      %s342 = scalar_lea.vmem %s3, %s341
      %p343 = pneg %p133
      %p344 = pneg %p130
      %p345 = scmp.lt.s32.totalorder %s22, 0
      %s346 = scalar_select %p345, %s22, 0
      %s347 = smul.addr %s346, 5
      %s348 = smul.addr %s347, 4
      %s349 = scalar_lea.vmem %s4, %s348
      %p350 = pneg %p159
      %p351 = pneg %p156
      %p352 = scmp.lt.s32.totalorder %s22, 0
      %s353 = scalar_select %p352, %s22, 0
      %s354 = scalar_lea.vmem %s5, %s353
      %p355 = pneg %p185
      %p356 = pneg %p182
      %p357 = scmp.lt.s32.totalorder %s22, 0
      %s358 = scalar_select %p357, %s22, 0
      %s359 = scalar_lea.vmem %s6, %s358
      %p360 = pneg %p211
      %p361 = pneg %p208
      %p362 = pneg %p241
      %p363 = pneg %p238
      %s364 = smul.u32 %s22, 2
      %s365 = sadd.s32 %s364, %s23
      %p366 = scmp.lt.s32.totalorder %s365, 1
      %s367 = scalar_select %p366, %s365, 1
      %s368 = smul.addr %s367, 8
      %s369 = smul.addr %s368, 4
      %s370 = scalar_lea.vmem %s7, %s369
      %s371 = smul.u32 %s22, 2
      %s372 = sadd.s32 %s371, %s23
      %p373 = scmp.lt.s32.totalorder %s372, 1
      %s374 = scalar_select %p373, %s372, 1
      %s375 = smul.addr %s374, 20
      %s376 = smul.addr %s375, 4
      %s377 = scalar_lea.vmem %s0, %s376
      %s378 = smul.u32 %s22, 2
      %s379 = sadd.s32 %s378, %s23
      %p380 = scmp.lt.s32.totalorder %s22, 0
      %s381 = scalar_select %p380, %s22, 0
      %s382 = smul.addr %s381, 9
      %s383 = smul.addr %s382, 4
      %s384 = scalar_lea.vmem %s1, %s383
      %p385 = scmp.lt.s32.totalorder %s22, 0
      %s386 = scalar_select %p385, %s22, 0
      %s387 = scalar_lea.vmem %s2, %s386
      %p388 = scmp.lt.s32.totalorder %s22, 0
      %s389 = scalar_select %p388, %s22, 0
      %s390 = scalar_lea.vmem %s3, %s389
      %p391 = scmp.lt.s32.totalorder %s22, 0
      %s392 = scalar_select %p391, %s22, 0
      %s393 = smul.addr %s392, 5
      %s394 = smul.addr %s393, 4
      %s395 = scalar_lea.vmem %s4, %s394
      %p396 = scmp.lt.s32.totalorder %s22, 0
      %s397 = scalar_select %p396, %s22, 0
      %s398 = scalar_lea.vmem %s5, %s397
      %p399 = scmp.lt.s32.totalorder %s22, 0
      %s400 = scalar_select %p399, %s22, 0
      %s401 = scalar_lea.vmem %s6, %s400
      %s402 = smul.u32 %s22, 2
      %s403 = sadd.s32 %s402, %s23
      %p404 = scmp.lt.s32.totalorder %s403, 1
      %s405 = scalar_select %p404, %s403, 1
      %s406 = smul.addr %s405, 8
      %s407 = smul.addr %s406, 4
      %s408 = scalar_lea.vmem %s7, %s407
      %s409 = smul.u32 %s22, 2
      %s410 = sadd.s32 %s409, %s23
      %v412 = vld [vmem:[%s377] sm:$0xf]
      %v413 = vld [vmem:[%s377 + $0x8] sm:$0xf]
      %v414 = vld [vmem:[%s377 + $0x10] sm:$0xf]
      %v415 = vld [vmem:[%s377 + $0x18] sm:$0xf]
      %v416 = vld [vmem:[%s377 + $0x20] sm:$0xf]
      %v417 = vld [vmem:[%s377 + $0x28] sm:$0xf]
      %v418 = vld [vmem:[%s377 + $0x30] sm:$0xf]
      %v419 = vld [vmem:[%s377 + $0x38] sm:$0xf]
      %v420 = vld [vmem:[%s377 + $0x4] sm:$0x1]
      %v421 = vld [vmem:[%s377 + $0xc] sm:$0x1]
      %v422 = vld [vmem:[%s377 + $0x14] sm:$0x1]
      %v423 = vld [vmem:[%s377 + $0x1c] sm:$0x1]
      %v424 = vld [vmem:[%s377 + $0x24] sm:$0x1]
      %v425 = vld [vmem:[%s377 + $0x2c] sm:$0x1]
      %v426 = vld [vmem:[%s377 + $0x34] sm:$0x1]
      %v427 = vld [vmem:[%s377 + $0x3c] sm:$0x1]
      %vm428 = vsmask.f32 3328
      %vm429 = vsmask.f32 7440
      %vm430 = vmor %vm428, %vm429
      %v432 = vshrl.u32 %v412, 16
      %v434 = vrot.slane %v432, 4
      %v435 = vshll.u32 %v412, 16
      %v437 = vrot.slane %v435, 5
      %v438 = vor.u32 %v434, %v437
      %v439 = vrot.slane %v438, 4
      %v441 = vshll.u32 %v420, 16
      %v443 = vrot.slane %v441, 5
      %v444 = vsel %vm430, %v439, %v443
      %v446 = vshrl.u32 %v413, 16
      %v448 = vrot.slane %v446, 4
      %v449 = vshll.u32 %v413, 16
      %v451 = vrot.slane %v449, 5
      %v452 = vor.u32 %v448, %v451
      %v453 = vrot.slane %v452, 4
      %v455 = vshll.u32 %v421, 16
      %v457 = vrot.slane %v455, 5
      %v458 = vsel %vm430, %v453, %v457
      %v460 = vshrl.u32 %v414, 16
      %v462 = vrot.slane %v460, 4
      %v463 = vshll.u32 %v414, 16
      %v465 = vrot.slane %v463, 5
      %v466 = vor.u32 %v462, %v465
      %v467 = vrot.slane %v466, 4
      %v469 = vshll.u32 %v422, 16
      %v471 = vrot.slane %v469, 5
      %v472 = vsel %vm430, %v467, %v471
      %v474 = vshrl.u32 %v415, 16
      %v476 = vrot.slane %v474, 4
      %v477 = vshll.u32 %v415, 16
      %v479 = vrot.slane %v477, 5
      %v480 = vor.u32 %v476, %v479
      %v481 = vrot.slane %v480, 4
      %v483 = vshll.u32 %v423, 16
      %v485 = vrot.slane %v483, 5
      %v486 = vsel %vm430, %v481, %v485
      %v488 = vshrl.u32 %v416, 16
      %v490 = vrot.slane %v488, 4
      %v491 = vshll.u32 %v416, 16
      %v493 = vrot.slane %v491, 5
      %v494 = vor.u32 %v490, %v493
      %v495 = vrot.slane %v494, 4
      %v497 = vshll.u32 %v424, 16
      %v499 = vrot.slane %v497, 5
      %v500 = vsel %vm430, %v495, %v499
      %v502 = vshrl.u32 %v417, 16
      %v504 = vrot.slane %v502, 4
      %v505 = vshll.u32 %v417, 16
      %v507 = vrot.slane %v505, 5
      %v508 = vor.u32 %v504, %v507
      %v509 = vrot.slane %v508, 4
      %v511 = vshll.u32 %v425, 16
      %v513 = vrot.slane %v511, 5
      %v514 = vsel %vm430, %v509, %v513
      %v516 = vshrl.u32 %v418, 16
      %v518 = vrot.slane %v516, 4
      %v519 = vshll.u32 %v418, 16
      %v521 = vrot.slane %v519, 5
      %v522 = vor.u32 %v518, %v521
      %v523 = vrot.slane %v522, 4
      %v525 = vshll.u32 %v426, 16
      %v527 = vrot.slane %v525, 5
      %v528 = vsel %vm430, %v523, %v527
      %v530 = vshrl.u32 %v419, 16
      %v532 = vrot.slane %v530, 4
      %v533 = vshll.u32 %v419, 16
      %v535 = vrot.slane %v533, 5
      %v536 = vor.u32 %v532, %v535
      %v537 = vrot.slane %v536, 4
      %v539 = vshll.u32 %v427, 16
      %v541 = vrot.slane %v539, 5
      %v542 = vsel %vm430, %v537, %v541
      %v543 = vld [vmem:[%s377] sm:$0xe]
      %v544 = vld [vmem:[%s377 + $0x8] sm:$0xe]
      %v545 = vld [vmem:[%s377 + $0x10] sm:$0xe]
      %v546 = vld [vmem:[%s377 + $0x18] sm:$0xe]
      %v547 = vld [vmem:[%s377 + $0x20] sm:$0xe]
      %v548 = vld [vmem:[%s377 + $0x28] sm:$0xe]
      %v549 = vld [vmem:[%s377 + $0x30] sm:$0xe]
      %v550 = vld [vmem:[%s377 + $0x38] sm:$0xe]
      %vm567 = vcmask 1042432
      %vm568 = vcmask 1046532
      %vm569 = vmor %vm567, %vm568
      %v570 = vrot.slane %v543, 5
      %v571 = vrot.slane %v570, 4
      %v572 = vrot.slane %v420, 5
      %v573 = vsel %vm569, %v571, %v572
      %v574 = vrot.slane %v544, 5
      %v575 = vrot.slane %v574, 4
      %v576 = vrot.slane %v421, 5
      %v577 = vsel %vm569, %v575, %v576
      %v578 = vrot.slane %v545, 5
      %v579 = vrot.slane %v578, 4
      %v580 = vrot.slane %v422, 5
      %v581 = vsel %vm569, %v579, %v580
      %v582 = vrot.slane %v546, 5
      %v583 = vrot.slane %v582, 4
      %v584 = vrot.slane %v423, 5
      %v585 = vsel %vm569, %v583, %v584
      %v586 = vrot.slane %v547, 5
      %v587 = vrot.slane %v586, 4
      %v588 = vrot.slane %v424, 5
      %v589 = vsel %vm569, %v587, %v588
      %v590 = vrot.slane %v548, 5
      %v591 = vrot.slane %v590, 4
      %v592 = vrot.slane %v425, 5
      %v593 = vsel %vm569, %v591, %v592
      %v594 = vrot.slane %v549, 5
      %v595 = vrot.slane %v594, 4
      %v596 = vrot.slane %v426, 5
      %v597 = vsel %vm569, %v595, %v596
      %v598 = vrot.slane %v550, 5
      %v599 = vrot.slane %v598, 4
      %v600 = vrot.slane %v427, 5
      %v601 = vsel %vm569, %v599, %v600
      %s602 = scalar_lea.vmem %s377, 8
      %v603 = vld [vmem:[%s602] sm:$0xf]
      %v604 = vld [vmem:[%s602 + $0x8] sm:$0xf]
      %v605 = vld [vmem:[%s602 + $0x10] sm:$0xf]
      %v606 = vld [vmem:[%s602 + $0x18] sm:$0xf]
      %v607 = vld [vmem:[%s602 + $0x20] sm:$0xf]
      %v608 = vld [vmem:[%s602 + $0x28] sm:$0xf]
      %v609 = vld [vmem:[%s602 + $0x30] sm:$0xf]
      %v610 = vld [vmem:[%s602 + $0x38] sm:$0xf]
      %v611 = vld [vmem:[%s602 + $0x4] sm:$0x1]
      %v612 = vld [vmem:[%s602 + $0xc] sm:$0x1]
      %v613 = vld [vmem:[%s602 + $0x14] sm:$0x1]
      %v614 = vld [vmem:[%s602 + $0x1c] sm:$0x1]
      %v615 = vld [vmem:[%s602 + $0x24] sm:$0x1]
      %v616 = vld [vmem:[%s602 + $0x2c] sm:$0x1]
      %v617 = vld [vmem:[%s602 + $0x34] sm:$0x1]
      %v618 = vld [vmem:[%s602 + $0x3c] sm:$0x1]
      %v620 = vshrl.u32 %v603, 16
      %v622 = vrot.slane %v620, 4
      %v623 = vshll.u32 %v603, 16
      %v625 = vrot.slane %v623, 5
      %v626 = vor.u32 %v622, %v625
      %v627 = vrot.slane %v626, 4
      %v629 = vshll.u32 %v611, 16
      %v631 = vrot.slane %v629, 5
      %v632 = vsel %vm430, %v627, %v631
      %v634 = vshrl.u32 %v604, 16
      %v636 = vrot.slane %v634, 4
      %v637 = vshll.u32 %v604, 16
      %v639 = vrot.slane %v637, 5
      %v640 = vor.u32 %v636, %v639
      %v641 = vrot.slane %v640, 4
      %v643 = vshll.u32 %v612, 16
      %v645 = vrot.slane %v643, 5
      %v646 = vsel %vm430, %v641, %v645
      %v648 = vshrl.u32 %v605, 16
      %v650 = vrot.slane %v648, 4
      %v651 = vshll.u32 %v605, 16
      %v653 = vrot.slane %v651, 5
      %v654 = vor.u32 %v650, %v653
      %v655 = vrot.slane %v654, 4
      %v657 = vshll.u32 %v613, 16
      %v659 = vrot.slane %v657, 5
      %v660 = vsel %vm430, %v655, %v659
      %v662 = vshrl.u32 %v606, 16
      %v664 = vrot.slane %v662, 4
      %v665 = vshll.u32 %v606, 16
      %v667 = vrot.slane %v665, 5
      %v668 = vor.u32 %v664, %v667
      %v669 = vrot.slane %v668, 4
      %v671 = vshll.u32 %v614, 16
      %v673 = vrot.slane %v671, 5
      %v674 = vsel %vm430, %v669, %v673
      %v676 = vshrl.u32 %v607, 16
      %v678 = vrot.slane %v676, 4
      %v679 = vshll.u32 %v607, 16
      %v681 = vrot.slane %v679, 5
      %v682 = vor.u32 %v678, %v681
      %v683 = vrot.slane %v682, 4
      %v685 = vshll.u32 %v615, 16
      %v687 = vrot.slane %v685, 5
      %v688 = vsel %vm430, %v683, %v687
      %v690 = vshrl.u32 %v608, 16
      %v692 = vrot.slane %v690, 4
      %v693 = vshll.u32 %v608, 16
      %v695 = vrot.slane %v693, 5
      %v696 = vor.u32 %v692, %v695
      %v697 = vrot.slane %v696, 4
      %v699 = vshll.u32 %v616, 16
      %v701 = vrot.slane %v699, 5
      %v702 = vsel %vm430, %v697, %v701
      %v704 = vshrl.u32 %v609, 16
      %v706 = vrot.slane %v704, 4
      %v707 = vshll.u32 %v609, 16
      %v709 = vrot.slane %v707, 5
      %v710 = vor.u32 %v706, %v709
      %v711 = vrot.slane %v710, 4
      %v713 = vshll.u32 %v617, 16
      %v715 = vrot.slane %v713, 5
      %v716 = vsel %vm430, %v711, %v715
      %v718 = vshrl.u32 %v610, 16
      %v720 = vrot.slane %v718, 4
      %v721 = vshll.u32 %v610, 16
      %v723 = vrot.slane %v721, 5
      %v724 = vor.u32 %v720, %v723
      %v725 = vrot.slane %v724, 4
      %v727 = vshll.u32 %v618, 16
      %v729 = vrot.slane %v727, 5
      %v730 = vsel %vm430, %v725, %v729
      %v731 = vld [vmem:[%s602] sm:$0xe]
      %v732 = vld [vmem:[%s602 + $0x8] sm:$0xe]
      %v733 = vld [vmem:[%s602 + $0x10] sm:$0xe]
      %v734 = vld [vmem:[%s602 + $0x18] sm:$0xe]
      %v735 = vld [vmem:[%s602 + $0x20] sm:$0xe]
      %v736 = vld [vmem:[%s602 + $0x28] sm:$0xe]
      %v737 = vld [vmem:[%s602 + $0x30] sm:$0xe]
      %v738 = vld [vmem:[%s602 + $0x38] sm:$0xe]
      %v755 = vrot.slane %v731, 5
      %v756 = vrot.slane %v755, 4
      %v757 = vrot.slane %v611, 5
      %v758 = vsel %vm569, %v756, %v757
      %v759 = vrot.slane %v732, 5
      %v760 = vrot.slane %v759, 4
      %v761 = vrot.slane %v612, 5
      %v762 = vsel %vm569, %v760, %v761
      %v763 = vrot.slane %v733, 5
      %v764 = vrot.slane %v763, 4
      %v765 = vrot.slane %v613, 5
      %v766 = vsel %vm569, %v764, %v765
      %v767 = vrot.slane %v734, 5
      %v768 = vrot.slane %v767, 4
      %v769 = vrot.slane %v614, 5
      %v770 = vsel %vm569, %v768, %v769
      %v771 = vrot.slane %v735, 5
      %v772 = vrot.slane %v771, 4
      %v773 = vrot.slane %v615, 5
      %v774 = vsel %vm569, %v772, %v773
      %v775 = vrot.slane %v736, 5
      %v776 = vrot.slane %v775, 4
      %v777 = vrot.slane %v616, 5
      %v778 = vsel %vm569, %v776, %v777
      %v779 = vrot.slane %v737, 5
      %v780 = vrot.slane %v779, 4
      %v781 = vrot.slane %v617, 5
      %v782 = vsel %vm569, %v780, %v781
      %v783 = vrot.slane %v738, 5
      %v784 = vrot.slane %v783, 4
      %v785 = vrot.slane %v618, 5
      %v786 = vsel %vm569, %v784, %v785
      %s787 = scalar_lea.vmem %s377, 16
      %v788 = vld [vmem:[%s787] sm:$0xf]
      %v789 = vld [vmem:[%s787 + $0x8] sm:$0xf]
      %v790 = vld [vmem:[%s787 + $0x10] sm:$0xf]
      %v791 = vld [vmem:[%s787 + $0x18] sm:$0xf]
      %v792 = vld [vmem:[%s787 + $0x20] sm:$0xf]
      %v793 = vld [vmem:[%s787 + $0x28] sm:$0xf]
      %v794 = vld [vmem:[%s787 + $0x30] sm:$0xf]
      %v795 = vld [vmem:[%s787 + $0x38] sm:$0xf]
      %v796 = vld [vmem:[%s787 + $0x4] sm:$0x1]
      %v797 = vld [vmem:[%s787 + $0xc] sm:$0x1]
      %v798 = vld [vmem:[%s787 + $0x14] sm:$0x1]
      %v799 = vld [vmem:[%s787 + $0x1c] sm:$0x1]
      %v800 = vld [vmem:[%s787 + $0x24] sm:$0x1]
      %v801 = vld [vmem:[%s787 + $0x2c] sm:$0x1]
      %v802 = vld [vmem:[%s787 + $0x34] sm:$0x1]
      %v803 = vld [vmem:[%s787 + $0x3c] sm:$0x1]
      %v805 = vshrl.u32 %v788, 16
      %v807 = vrot.slane %v805, 4
      %v808 = vshll.u32 %v788, 16
      %v810 = vrot.slane %v808, 5
      %v811 = vor.u32 %v807, %v810
      %v812 = vrot.slane %v811, 4
      %v814 = vshll.u32 %v796, 16
      %v816 = vrot.slane %v814, 5
      %v817 = vsel %vm430, %v812, %v816
      %v819 = vshrl.u32 %v789, 16
      %v821 = vrot.slane %v819, 4
      %v822 = vshll.u32 %v789, 16
      %v824 = vrot.slane %v822, 5
      %v825 = vor.u32 %v821, %v824
      %v826 = vrot.slane %v825, 4
      %v828 = vshll.u32 %v797, 16
      %v830 = vrot.slane %v828, 5
      %v831 = vsel %vm430, %v826, %v830
      %v833 = vshrl.u32 %v790, 16
      %v835 = vrot.slane %v833, 4
      %v836 = vshll.u32 %v790, 16
      %v838 = vrot.slane %v836, 5
      %v839 = vor.u32 %v835, %v838
      %v840 = vrot.slane %v839, 4
      %v842 = vshll.u32 %v798, 16
      %v844 = vrot.slane %v842, 5
      %v845 = vsel %vm430, %v840, %v844
      %v847 = vshrl.u32 %v791, 16
      %v849 = vrot.slane %v847, 4
      %v850 = vshll.u32 %v791, 16
      %v852 = vrot.slane %v850, 5
      %v853 = vor.u32 %v849, %v852
      %v854 = vrot.slane %v853, 4
      %v856 = vshll.u32 %v799, 16
      %v858 = vrot.slane %v856, 5
      %v859 = vsel %vm430, %v854, %v858
      %v861 = vshrl.u32 %v792, 16
      %v863 = vrot.slane %v861, 4
      %v864 = vshll.u32 %v792, 16
      %v866 = vrot.slane %v864, 5
      %v867 = vor.u32 %v863, %v866
      %v868 = vrot.slane %v867, 4
      %v870 = vshll.u32 %v800, 16
      %v872 = vrot.slane %v870, 5
      %v873 = vsel %vm430, %v868, %v872
      %v875 = vshrl.u32 %v793, 16
      %v877 = vrot.slane %v875, 4
      %v878 = vshll.u32 %v793, 16
      %v880 = vrot.slane %v878, 5
      %v881 = vor.u32 %v877, %v880
      %v882 = vrot.slane %v881, 4
      %v884 = vshll.u32 %v801, 16
      %v886 = vrot.slane %v884, 5
      %v887 = vsel %vm430, %v882, %v886
      %v889 = vshrl.u32 %v794, 16
      %v891 = vrot.slane %v889, 4
      %v892 = vshll.u32 %v794, 16
      %v894 = vrot.slane %v892, 5
      %v895 = vor.u32 %v891, %v894
      %v896 = vrot.slane %v895, 4
      %v898 = vshll.u32 %v802, 16
      %v900 = vrot.slane %v898, 5
      %v901 = vsel %vm430, %v896, %v900
      %v903 = vshrl.u32 %v795, 16
      %v905 = vrot.slane %v903, 4
      %v906 = vshll.u32 %v795, 16
      %v908 = vrot.slane %v906, 5
      %v909 = vor.u32 %v905, %v908
      %v910 = vrot.slane %v909, 4
      %v912 = vshll.u32 %v803, 16
      %v914 = vrot.slane %v912, 5
      %v915 = vsel %vm430, %v910, %v914
      %v916 = vld [vmem:[%s787] sm:$0xe]
      %v917 = vld [vmem:[%s787 + $0x8] sm:$0xe]
      %v918 = vld [vmem:[%s787 + $0x10] sm:$0xe]
      %v919 = vld [vmem:[%s787 + $0x18] sm:$0xe]
      %v920 = vld [vmem:[%s787 + $0x20] sm:$0xe]
      %v921 = vld [vmem:[%s787 + $0x28] sm:$0xe]
      %v922 = vld [vmem:[%s787 + $0x30] sm:$0xe]
      %v923 = vld [vmem:[%s787 + $0x38] sm:$0xe]
      %v940 = vrot.slane %v916, 5
      %v941 = vrot.slane %v940, 4
      %v942 = vrot.slane %v796, 5
      %v943 = vsel %vm569, %v941, %v942
      %v944 = vrot.slane %v917, 5
      %v945 = vrot.slane %v944, 4
      %v946 = vrot.slane %v797, 5
      %v947 = vsel %vm569, %v945, %v946
      %v948 = vrot.slane %v918, 5
      %v949 = vrot.slane %v948, 4
      %v950 = vrot.slane %v798, 5
      %v951 = vsel %vm569, %v949, %v950
      %v952 = vrot.slane %v919, 5
      %v953 = vrot.slane %v952, 4
      %v954 = vrot.slane %v799, 5
      %v955 = vsel %vm569, %v953, %v954
      %v956 = vrot.slane %v920, 5
      %v957 = vrot.slane %v956, 4
      %v958 = vrot.slane %v800, 5
      %v959 = vsel %vm569, %v957, %v958
      %v960 = vrot.slane %v921, 5
      %v961 = vrot.slane %v960, 4
      %v962 = vrot.slane %v801, 5
      %v963 = vsel %vm569, %v961, %v962
      %v964 = vrot.slane %v922, 5
      %v965 = vrot.slane %v964, 4
      %v966 = vrot.slane %v802, 5
      %v967 = vsel %vm569, %v965, %v966
      %v968 = vrot.slane %v923, 5
      %v969 = vrot.slane %v968, 4
      %v970 = vrot.slane %v803, 5
      %v971 = vsel %vm569, %v969, %v970
      %v980 = vunpack.c.l.b16 %v412
      %v981 = vunpack.c.l.b16 %v413
      %v982 = vunpack.c.l.b16 %v414
      %v983 = vunpack.c.l.b16 %v415
      %v984 = vunpack.c.l.b16 %v416
      %v985 = vunpack.c.l.b16 %v417
      %v986 = vunpack.c.l.b16 %v418
      %v987 = vunpack.c.l.b16 %v419
      %v988 = vpack.c.b16 %v981, %v980
      %v989 = vpack.c.b16 %v983, %v982
      %v990 = vpack.c.b16 %v985, %v984
      %v991 = vpack.c.b16 %v987, %v986
      %v992 = vunpack.c.l.b16 %v444
      %v993 = vunpack.c.l.b16 %v458
      %v994 = vunpack.c.l.b16 %v472
      %v995 = vunpack.c.l.b16 %v486
      %v996 = vunpack.c.l.b16 %v500
      %v997 = vunpack.c.l.b16 %v514
      %v998 = vunpack.c.l.b16 %v528
      %v999 = vunpack.c.l.b16 %v542
      %v1000 = vpack.c.b16 %v993, %v992
      %v1001 = vpack.c.b16 %v995, %v994
      %v1002 = vpack.c.b16 %v997, %v996
      %v1003 = vpack.c.b16 %v999, %v998
      %1004 = vrot.lane.b32.xlu0 %v1000, 8
      %v1005 = vpop.permute.xlu0 %1004
      %1006 = vrot.lane.b32.xlu0 %v1001, 8
      %v1007 = vpop.permute.xlu0 %1006
      %1008 = vrot.lane.b32.xlu0 %v1002, 8
      %v1009 = vpop.permute.xlu0 %1008
      %1010 = vrot.lane.b32.xlu0 %v1003, 8
      %v1011 = vpop.permute.xlu0 %1010
      %v1012 = vunpack.c.l.b16 %v573
      %v1013 = vunpack.c.l.b16 %v577
      %v1014 = vunpack.c.l.b16 %v581
      %v1015 = vunpack.c.l.b16 %v585
      %v1016 = vunpack.c.l.b16 %v589
      %v1017 = vunpack.c.l.b16 %v593
      %v1018 = vunpack.c.l.b16 %v597
      %v1019 = vunpack.c.l.b16 %v601
      %v1020 = vpack.c.b16 %v1013, %v1012
      %v1021 = vpack.c.b16 %v1015, %v1014
      %v1022 = vpack.c.b16 %v1017, %v1016
      %v1023 = vpack.c.b16 %v1019, %v1018
      %1024 = vrot.lane.b32.xlu0 %v1020, 16
      %v1025 = vpop.permute.xlu0 %1024
      %1026 = vrot.lane.b32.xlu0 %v1021, 16
      %v1027 = vpop.permute.xlu0 %1026
      %1028 = vrot.lane.b32.xlu0 %v1022, 16
      %v1029 = vpop.permute.xlu0 %1028
      %1030 = vrot.lane.b32.xlu0 %v1023, 16
      %v1031 = vpop.permute.xlu0 %1030
      %v1040 = vunpack.c.l.b16 %v603
      %v1041 = vunpack.c.l.b16 %v604
      %v1042 = vunpack.c.l.b16 %v605
      %v1043 = vunpack.c.l.b16 %v606
      %v1044 = vunpack.c.l.b16 %v607
      %v1045 = vunpack.c.l.b16 %v608
      %v1046 = vunpack.c.l.b16 %v609
      %v1047 = vunpack.c.l.b16 %v610
      %v1048 = vpack.c.b16 %v1041, %v1040
      %v1049 = vpack.c.b16 %v1043, %v1042
      %v1050 = vpack.c.b16 %v1045, %v1044
      %v1051 = vpack.c.b16 %v1047, %v1046
      %1052 = vrot.lane.b32.xlu0 %v1048, 24
      %v1053 = vpop.permute.xlu0 %1052
      %1054 = vrot.lane.b32.xlu0 %v1049, 24
      %v1055 = vpop.permute.xlu0 %1054
      %1056 = vrot.lane.b32.xlu0 %v1050, 24
      %v1057 = vpop.permute.xlu0 %1056
      %1058 = vrot.lane.b32.xlu0 %v1051, 24
      %v1059 = vpop.permute.xlu0 %1058
      %v1060 = vunpack.c.l.b16 %v632
      %v1061 = vunpack.c.l.b16 %v646
      %v1062 = vunpack.c.l.b16 %v660
      %v1063 = vunpack.c.l.b16 %v674
      %v1064 = vunpack.c.l.b16 %v688
      %v1065 = vunpack.c.l.b16 %v702
      %v1066 = vunpack.c.l.b16 %v716
      %v1067 = vunpack.c.l.b16 %v730
      %v1068 = vpack.c.b16 %v1061, %v1060
      %v1069 = vpack.c.b16 %v1063, %v1062
      %v1070 = vpack.c.b16 %v1065, %v1064
      %v1071 = vpack.c.b16 %v1067, %v1066
      %1072 = vrot.lane.b32.xlu0 %v1068, 32
      %v1073 = vpop.permute.xlu0 %1072
      %1074 = vrot.lane.b32.xlu0 %v1069, 32
      %v1075 = vpop.permute.xlu0 %1074
      %1076 = vrot.lane.b32.xlu0 %v1070, 32
      %v1077 = vpop.permute.xlu0 %1076
      %1078 = vrot.lane.b32.xlu0 %v1071, 32
      %v1079 = vpop.permute.xlu0 %1078
      %v1080 = vunpack.c.l.b16 %v758
      %v1081 = vunpack.c.l.b16 %v762
      %v1082 = vunpack.c.l.b16 %v766
      %v1083 = vunpack.c.l.b16 %v770
      %v1084 = vunpack.c.l.b16 %v774
      %v1085 = vunpack.c.l.b16 %v778
      %v1086 = vunpack.c.l.b16 %v782
      %v1087 = vunpack.c.l.b16 %v786
      %v1088 = vpack.c.b16 %v1081, %v1080
      %v1089 = vpack.c.b16 %v1083, %v1082
      %v1090 = vpack.c.b16 %v1085, %v1084
      %v1091 = vpack.c.b16 %v1087, %v1086
      %1092 = vrot.lane.b32.xlu0 %v1088, 40
      %v1093 = vpop.permute.xlu0 %1092
      %1094 = vrot.lane.b32.xlu0 %v1089, 40
      %v1095 = vpop.permute.xlu0 %1094
      %1096 = vrot.lane.b32.xlu0 %v1090, 40
      %v1097 = vpop.permute.xlu0 %1096
      %1098 = vrot.lane.b32.xlu0 %v1091, 40
      %v1099 = vpop.permute.xlu0 %1098
      %v1108 = vunpack.c.l.b16 %v788
      %v1109 = vunpack.c.l.b16 %v789
      %v1110 = vunpack.c.l.b16 %v790
      %v1111 = vunpack.c.l.b16 %v791
      %v1112 = vunpack.c.l.b16 %v792
      %v1113 = vunpack.c.l.b16 %v793
      %v1114 = vunpack.c.l.b16 %v794
      %v1115 = vunpack.c.l.b16 %v795
      %v1116 = vpack.c.b16 %v1109, %v1108
      %v1117 = vpack.c.b16 %v1111, %v1110
      %v1118 = vpack.c.b16 %v1113, %v1112
      %v1119 = vpack.c.b16 %v1115, %v1114
      %1120 = vrot.lane.b32.xlu0 %v1116, 48
      %v1121 = vpop.permute.xlu0 %1120
      %1122 = vrot.lane.b32.xlu0 %v1117, 48
      %v1123 = vpop.permute.xlu0 %1122
      %1124 = vrot.lane.b32.xlu0 %v1118, 48
      %v1125 = vpop.permute.xlu0 %1124
      %1126 = vrot.lane.b32.xlu0 %v1119, 48
      %v1127 = vpop.permute.xlu0 %1126
      %v1128 = vunpack.c.l.b16 %v817
      %v1129 = vunpack.c.l.b16 %v831
      %v1130 = vunpack.c.l.b16 %v845
      %v1131 = vunpack.c.l.b16 %v859
      %v1132 = vunpack.c.l.b16 %v873
      %v1133 = vunpack.c.l.b16 %v887
      %v1134 = vunpack.c.l.b16 %v901
      %v1135 = vunpack.c.l.b16 %v915
      %v1136 = vpack.c.b16 %v1129, %v1128
      %v1137 = vpack.c.b16 %v1131, %v1130
      %v1138 = vpack.c.b16 %v1133, %v1132
      %v1139 = vpack.c.b16 %v1135, %v1134
      %1140 = vrot.lane.b32.xlu0 %v1136, 56
      %v1141 = vpop.permute.xlu0 %1140
      %1142 = vrot.lane.b32.xlu0 %v1137, 56
      %v1143 = vpop.permute.xlu0 %1142
      %1144 = vrot.lane.b32.xlu0 %v1138, 56
      %v1145 = vpop.permute.xlu0 %1144
      %1146 = vrot.lane.b32.xlu0 %v1139, 56
      %v1147 = vpop.permute.xlu0 %1146
      %v1148 = vunpack.c.l.b16 %v943
      %v1149 = vunpack.c.l.b16 %v947
      %v1150 = vunpack.c.l.b16 %v951
      %v1151 = vunpack.c.l.b16 %v955
      %v1152 = vunpack.c.l.b16 %v959
      %v1153 = vunpack.c.l.b16 %v963
      %v1154 = vunpack.c.l.b16 %v967
      %v1155 = vunpack.c.l.b16 %v971
      %v1156 = vpack.c.b16 %v1149, %v1148
      %v1157 = vpack.c.b16 %v1151, %v1150
      %v1158 = vpack.c.b16 %v1153, %v1152
      %v1159 = vpack.c.b16 %v1155, %v1154
      %1160 = vrot.lane.b32.xlu0 %v1156, 64
      %v1161 = vpop.permute.xlu0 %1160
      %1162 = vrot.lane.b32.xlu0 %v1157, 64
      %v1163 = vpop.permute.xlu0 %1162
      %1164 = vrot.lane.b32.xlu0 %v1158, 64
      %v1165 = vpop.permute.xlu0 %1164
      %1166 = vrot.lane.b32.xlu0 %v1159, 64
      %v1167 = vpop.permute.xlu0 %1166
      %vm1168 = vcmask 64512
      %v1171 = vsel %vm1168, %v988, %v1005
      %v1174 = vsel %vm1168, %v989, %v1007
      %v1177 = vsel %vm1168, %v990, %v1009
      %v1180 = vsel %vm1168, %v991, %v1011
      %vm1181 = vcmask 130048
      %v1183 = vsel %vm1181, %v1171, %v1025
      %v1185 = vsel %vm1181, %v1174, %v1027
      %v1187 = vsel %vm1181, %v1177, %v1029
      %v1189 = vsel %vm1181, %v1180, %v1031
      %vm1190 = vcmask 195584
      %v1192 = vsel %vm1190, %v1183, %v1053
      %v1194 = vsel %vm1190, %v1185, %v1055
      %v1196 = vsel %vm1190, %v1187, %v1057
      %v1198 = vsel %vm1190, %v1189, %v1059
      %vm1199 = vcmask 261120
      %v1201 = vsel %vm1199, %v1192, %v1073
      %v1203 = vsel %vm1199, %v1194, %v1075
      %v1205 = vsel %vm1199, %v1196, %v1077
      %v1207 = vsel %vm1199, %v1198, %v1079
      %vm1208 = vcmask 326656
      %v1210 = vsel %vm1208, %v1201, %v1093
      %v1212 = vsel %vm1208, %v1203, %v1095
      %v1214 = vsel %vm1208, %v1205, %v1097
      %v1216 = vsel %vm1208, %v1207, %v1099
      %vm1217 = vcmask 392192
      %v1219 = vsel %vm1217, %v1210, %v1121
      %v1221 = vsel %vm1217, %v1212, %v1123
      %v1223 = vsel %vm1217, %v1214, %v1125
      %v1225 = vsel %vm1217, %v1216, %v1127
      %vm1226 = vcmask 457728
      %v1228 = vsel %vm1226, %v1219, %v1141
      %v1230 = vsel %vm1226, %v1221, %v1143
      %v1232 = vsel %vm1226, %v1223, %v1145
      %v1234 = vsel %vm1226, %v1225, %v1147
      %vm1235 = vcmask 523264
      %v1237 = vsel %vm1235, %v1228, %v1161
      %v1239 = vsel %vm1235, %v1230, %v1163
      %v1241 = vsel %vm1235, %v1232, %v1165
      %v1243 = vsel %vm1235, %v1234, %v1167
      %v1244 = vld [vmem:[%s384] sm:$0xf]
      %v1245 = vld [vmem:[%s384 + $0x4] sm:$0xf]
      %v1246 = vld [vmem:[%s384 + $0x8] sm:$0xf]
      %v1247 = vld [vmem:[%s384 + $0xc] sm:$0xf]
      %v1248 = vld [vmem:[%s384 + $0x10] sm:$0xf]
      %v1249 = vld [vmem:[%s384 + $0x14] sm:$0xf]
      %v1250 = vld [vmem:[%s384 + $0x18] sm:$0xf]
      %v1251 = vld [vmem:[%s384 + $0x1c] sm:$0xf]
      %v1252 = vld [vmem:[%s384 + $0x20] sm:$0xf]
      %v1262 = vunpack.c.l.b16 %v1244
      %v1263 = vunpack.c.l.b16 %v1245
      %v1264 = vunpack.c.l.b16 %v1246
      %v1265 = vunpack.c.l.b16 %v1247
      %v1266 = vunpack.c.l.b16 %v1248
      %v1267 = vunpack.c.l.b16 %v1249
      %v1268 = vunpack.c.l.b16 %v1250
      %v1269 = vunpack.c.l.b16 %v1251
      %v1270 = vunpack.c.l.b16 %v1252
      %v1271 = vpack.c.b16 %v1263, %v1262
      %v1272 = vpack.c.b16 %v1265, %v1264
      %v1273 = vpack.c.b16 %v1267, %v1266
      %v1274 = vpack.c.b16 %v1269, %v1268
      %v1275 = vpack.c.b16 %v1270, %v1270
      %vm1280 = vcmask 588800
      %v1281 = vsel %vm1280, %v1237, 0
      %v1283 = vsel %vm1280, %v1239, 0
      %v1285 = vsel %vm1280, %v1241, 0
      %v1287 = vsel %vm1280, %v1243, 0
      %vm1289 = vcmask 1043456
      %v1291 = vsel %vm1289, %v1275, 0
      %1293 = vmatprep.subr.bf16.mxu0 0
      %1294 = vmatpush1.bf16.msra.mxu0 %v1271
      %1295 = vmatprep.subr.bf16.mxu0 0
      %1296 = vmatpush1.bf16.msra.mxu0 %v1272
      %1297 = vmatprep.subr.bf16.mxu0 0
      %1298 = vmatpush1.bf16.msra.mxu0 %v1273
      %1299 = vmatprep.subr.bf16.mxu0 0
      %1300 = vmatpush1.bf16.msra.mxu0 %v1274
      %1301 = vmatprep.subr.bf16.mxu0 0
      %1302 = vmatpush1.bf16.msra.mxu0 %v1291
      %1303 = vmatprep.subr.bf16.mxu0 0
      %1304 = vmatpush1.bf16.msra.mxu0 0
      %1305 = vmatprep.subr.bf16.mxu0 0
      %1306 = vmatpush1.bf16.msra.mxu0 0
      %1307 = vmatprep.subr.bf16.mxu0 0
      %1308 = vmatpush1.bf16.msra.mxu0 0
      %1309 = vmatprep.subr.bf16.mxu0 0
      %1310 = vmatpush1.bf16.msra.mxu0 0
      %1311 = vmatprep.subr.bf16.mxu0 0
      %1312 = vmatpush1.bf16.msra.mxu0 0
      %1313 = vmatprep.subr.bf16.mxu0 0
      %1314 = vmatpush1.bf16.msra.mxu0 0
      %1315 = vmatprep.subr.bf16.mxu0 0
      %1316 = vmatpush1.bf16.msra.mxu0 0
      %1317 = vmatprep.subr.bf16.mxu0 0
      %1318 = vmatpush1.bf16.msra.mxu0 0
      %1319 = vmatprep.subr.bf16.mxu0 0
      %1320 = vmatpush1.bf16.msra.mxu0 0
      %1321 = vmatprep.subr.bf16.mxu0 0
      %1322 = vmatpush1.bf16.msra.mxu0 0
      %1323 = vmatprep.subr.bf16.mxu0 0
      %1324 = vmatpush1.bf16.msra.mxu0 0
      %1325 = vmatprep.mubr.bf16.mxu0 0
      %1326 = vmatmul.mubr.bf16.gmra.mrb[0].mxu0 %v1281
      %v1327 = vpop.f32.mrb[0].mxu0
      %v1328 = vadd.f32 0.0, %v1327
      %v1329 = vpop.f32.mrb[0].mxu0
      %v1330 = vpop.f32.mrb[0].mxu0
      %v1331 = vadd.f32 0.0, %v1330
      %v1332 = vpop.f32.mrb[0].mxu0
      %1333 = vmatprep.mubr.bf16.mxu0 0
      %1334 = vmatmul.mubr.bf16.gmra.mrb[0].mxu0 %v1283
      %v1335 = vpop.f32.mrb[0].mxu0
      %v1336 = vadd.f32 0.0, %v1335
      %v1337 = vpop.f32.mrb[0].mxu0
      %v1338 = vpop.f32.mrb[0].mxu0
      %v1339 = vadd.f32 0.0, %v1338
      %v1340 = vpop.f32.mrb[0].mxu0
      %1341 = vmatprep.mubr.bf16.mxu0 0
      %1342 = vmatmul.mubr.bf16.gmra.mrb[0].mxu0 %v1285
      %v1343 = vpop.f32.mrb[0].mxu0
      %v1344 = vadd.f32 0.0, %v1343
      %v1345 = vpop.f32.mrb[0].mxu0
      %v1346 = vpop.f32.mrb[0].mxu0
      %v1347 = vadd.f32 0.0, %v1346
      %v1348 = vpop.f32.mrb[0].mxu0
      %1349 = vmatprep.mubr.bf16.mxu0 0
      %1350 = vmatmul.mubr.bf16.gmra.mrb[0].mxu0 %v1287
      %v1351 = vpop.f32.mrb[0].mxu0
      %v1352 = vadd.f32 0.0, %v1351
      %v1353 = vpop.f32.mrb[0].mxu0
      %v1354 = vpop.f32.mrb[0].mxu0
      %v1355 = vadd.f32 0.0, %v1354
      %v1356 = vpop.f32.mrb[0].mxu0
      %1357 = vdwg.mxu0
      %v1358 = vld [vmem:[%s387] sm:$0x1]
      %v1360 = vlaneseq
      %v1361 = vshrl.u32 %v1360, 7
      %v1362 = vsub.s32 0, %v1361
      %v1363 = vrot.slane %v1358, %v1362
      %v1365 = vmul.f32 %v1328, %v1363
      %v1366 = vmul.f32 %v1331, %v1363
      %v1367 = vmul.f32 %v1336, %v1363
      %v1368 = vmul.f32 %v1339, %v1363
      %v1369 = vmul.f32 %v1344, %v1363
      %v1370 = vmul.f32 %v1347, %v1363
      %v1371 = vmul.f32 %v1352, %v1363
      %v1372 = vmul.f32 %v1355, %v1363
      %v1373 = vld [vmem:[%s390] sm:$0x1]
      %v1375 = vlaneseq
      %v1376 = vshrl.u32 %v1375, 7
      %v1377 = vsub.s32 0, %v1376
      %v1378 = vrot.slane %v1373, %v1377
      %v1380 = vadd.f32 %v1365, %v1378
      %v1381 = vadd.f32 %v1366, %v1378
      %v1382 = vadd.f32 %v1367, %v1378
      %v1383 = vadd.f32 %v1368, %v1378
      %v1384 = vadd.f32 %v1369, %v1378
      %v1385 = vadd.f32 %v1370, %v1378
      %v1386 = vadd.f32 %v1371, %v1378
      %v1387 = vadd.f32 %v1372, %v1378
      %v1388 = vmax.f32 %v1380, 0.0
      %v1389 = vmax.f32 %v1381, 0.0
      %v1390 = vmax.f32 %v1382, 0.0
      %v1391 = vmax.f32 %v1383, 0.0
      %v1392 = vmax.f32 %v1384, 0.0
      %v1393 = vmax.f32 %v1385, 0.0
      %v1394 = vmax.f32 %v1386, 0.0
      %v1395 = vmax.f32 %v1387, 0.0
      %vm1396 = vcmask 31744
      %1397 = vst.msk [vmem:[#allocation2] sm:$0xff] %vm1396, 0.0
      %vm1398 = vcmask 25600
      %1399 = vst.msk [vmem:[#allocation2 + $0x8] sm:$0x3] %vm1398, 0.0
      %s1400 = scalar_lea.vmem [#allocation2], 144
      %1401 = vst.msk [vmem:[%s1400] sm:$0xff] %vm1396, 0.0
      %1402 = vst.msk [vmem:[%s1400 + $0x8] sm:$0x3] %vm1398, 0.0
      %vm1403 = vcmask 24576
      %1404 = vst.msk [vmem:[#allocation2] sm:$0x1] %vm1403, 0.0
      %1405 = vst.msk [vmem:[#allocation2 + $0x10] sm:$0x1] %vm1403, 0.0
      %1406 = vst.msk [vmem:[#allocation2 + $0x20] sm:$0x1] %vm1403, 0.0
      %1407 = vst.msk [vmem:[#allocation2 + $0x30] sm:$0x1] %vm1403, 0.0
      %1408 = vst.msk [vmem:[#allocation2 + $0x40] sm:$0x1] %vm1403, 0.0
      %1409 = vst.msk [vmem:[#allocation2 + $0x50] sm:$0x1] %vm1403, 0.0
      %1410 = vst.msk [vmem:[#allocation2 + $0x60] sm:$0x1] %vm1403, 0.0
      %1411 = vst.msk [vmem:[#allocation2 + $0x70] sm:$0x1] %vm1403, 0.0
      %1412 = vst.msk [vmem:[#allocation2 + $0x80] sm:$0x1] %vm1403, 0.0
      %1413 = vst.msk [vmem:[#allocation2 + $0x90] sm:$0x1] %vm1403, 0.0
      %1414 = vst.msk [vmem:[#allocation2 + $0x9] sm:$0x1] %vm1403, 0.0
      %1415 = vst.msk [vmem:[#allocation2 + $0x19] sm:$0x1] %vm1403, 0.0
      %1416 = vst.msk [vmem:[#allocation2 + $0x29] sm:$0x1] %vm1403, 0.0
      %1417 = vst.msk [vmem:[#allocation2 + $0x39] sm:$0x1] %vm1403, 0.0
      %1418 = vst.msk [vmem:[#allocation2 + $0x49] sm:$0x1] %vm1403, 0.0
      %1419 = vst.msk [vmem:[#allocation2 + $0x59] sm:$0x1] %vm1403, 0.0
      %1420 = vst.msk [vmem:[#allocation2 + $0x69] sm:$0x1] %vm1403, 0.0
      %1421 = vst.msk [vmem:[#allocation2 + $0x79] sm:$0x1] %vm1403, 0.0
      %1422 = vst.msk [vmem:[#allocation2 + $0x89] sm:$0x1] %vm1403, 0.0
      %1423 = vst.msk [vmem:[#allocation2 + $0x99] sm:$0x1] %vm1403, 0.0
      %s1424 = scalar_lea.vmem [#allocation2], 16
      %1425 = vst.msk [vmem:[%s1424 + $0x1] sm:$0xff] %vm1396, %v1388
      %1426 = vst.msk [vmem:[%s1424 + $0x11] sm:$0xff] %vm1396, %v1389
      %1427 = vst.msk [vmem:[%s1424 + $0x21] sm:$0xff] %vm1396, %v1390
      %1428 = vst.msk [vmem:[%s1424 + $0x31] sm:$0xff] %vm1396, %v1391
      %1429 = vst.msk [vmem:[%s1424 + $0x41] sm:$0xff] %vm1396, %v1392
      %1430 = vst.msk [vmem:[%s1424 + $0x51] sm:$0xff] %vm1396, %v1393
      %1431 = vst.msk [vmem:[%s1424 + $0x61] sm:$0xff] %vm1396, %v1394
      %1432 = vst.msk [vmem:[%s1424 + $0x71] sm:$0xff] %vm1396, %v1395
      %v1433 = vld [vmem:[#allocation2] sm:$0xff]
      %v1434 = vld [vmem:[#allocation2 + $0x10] sm:$0xff]
      %v1435 = vld [vmem:[#allocation2 + $0x20] sm:$0xff]
      %v1436 = vld [vmem:[#allocation2 + $0x30] sm:$0xff]
      %v1437 = vld [vmem:[#allocation2 + $0x40] sm:$0xff]
      %v1438 = vld [vmem:[#allocation2 + $0x50] sm:$0xff]
      %v1439 = vld [vmem:[#allocation2 + $0x60] sm:$0xff]
      %v1440 = vld [vmem:[#allocation2 + $0x70] sm:$0xff]
      %v1441 = vld [vmem:[#allocation2 + $0x1] sm:$0xff]
      %v1442 = vld [vmem:[#allocation2 + $0x11] sm:$0xff]
      %v1443 = vld [vmem:[#allocation2 + $0x21] sm:$0xff]
      %v1444 = vld [vmem:[#allocation2 + $0x31] sm:$0xff]
      %v1445 = vld [vmem:[#allocation2 + $0x41] sm:$0xff]
      %v1446 = vld [vmem:[#allocation2 + $0x51] sm:$0xff]
      %v1447 = vld [vmem:[#allocation2 + $0x61] sm:$0xff]
      %v1448 = vld [vmem:[#allocation2 + $0x71] sm:$0xff]
      %v1449 = vld [vmem:[#allocation2 + $0x2] sm:$0xff]
      %v1450 = vld [vmem:[#allocation2 + $0x12] sm:$0xff]
      %v1451 = vld [vmem:[#allocation2 + $0x22] sm:$0xff]
      %v1452 = vld [vmem:[#allocation2 + $0x32] sm:$0xff]
      %v1453 = vld [vmem:[#allocation2 + $0x42] sm:$0xff]
      %v1454 = vld [vmem:[#allocation2 + $0x52] sm:$0xff]
      %v1455 = vld [vmem:[#allocation2 + $0x62] sm:$0xff]
      %v1456 = vld [vmem:[#allocation2 + $0x72] sm:$0xff]
      %v1457 = vld [vmem:[%s1424] sm:$0xff]
      %v1458 = vld [vmem:[%s1424 + $0x10] sm:$0xff]
      %v1459 = vld [vmem:[%s1424 + $0x20] sm:$0xff]
      %v1460 = vld [vmem:[%s1424 + $0x30] sm:$0xff]
      %v1461 = vld [vmem:[%s1424 + $0x40] sm:$0xff]
      %v1462 = vld [vmem:[%s1424 + $0x50] sm:$0xff]
      %v1463 = vld [vmem:[%s1424 + $0x60] sm:$0xff]
      %v1464 = vld [vmem:[%s1424 + $0x70] sm:$0xff]
      %v1465 = vld [vmem:[%s1424 + $0x1] sm:$0xff]
      %v1466 = vld [vmem:[%s1424 + $0x11] sm:$0xff]
      %v1467 = vld [vmem:[%s1424 + $0x21] sm:$0xff]
      %v1468 = vld [vmem:[%s1424 + $0x31] sm:$0xff]
      %v1469 = vld [vmem:[%s1424 + $0x41] sm:$0xff]
      %v1470 = vld [vmem:[%s1424 + $0x51] sm:$0xff]
      %v1471 = vld [vmem:[%s1424 + $0x61] sm:$0xff]
      %v1472 = vld [vmem:[%s1424 + $0x71] sm:$0xff]
      %v1473 = vld [vmem:[%s1424 + $0x2] sm:$0xff]
      %v1474 = vld [vmem:[%s1424 + $0x12] sm:$0xff]
      %v1475 = vld [vmem:[%s1424 + $0x22] sm:$0xff]
      %v1476 = vld [vmem:[%s1424 + $0x32] sm:$0xff]
      %v1477 = vld [vmem:[%s1424 + $0x42] sm:$0xff]
      %v1478 = vld [vmem:[%s1424 + $0x52] sm:$0xff]
      %v1479 = vld [vmem:[%s1424 + $0x62] sm:$0xff]
      %v1480 = vld [vmem:[%s1424 + $0x72] sm:$0xff]
      %s1481 = scalar_lea.vmem [#allocation2], 32
      %v1482 = vld [vmem:[%s1481] sm:$0xff]
      %v1483 = vld [vmem:[%s1481 + $0x10] sm:$0xff]
      %v1484 = vld [vmem:[%s1481 + $0x20] sm:$0xff]
      %v1485 = vld [vmem:[%s1481 + $0x30] sm:$0xff]
      %v1486 = vld [vmem:[%s1481 + $0x40] sm:$0xff]
      %v1487 = vld [vmem:[%s1481 + $0x50] sm:$0xff]
      %v1488 = vld [vmem:[%s1481 + $0x60] sm:$0xff]
      %v1489 = vld [vmem:[%s1481 + $0x70] sm:$0xff]
      %v1490 = vld [vmem:[%s1481 + $0x1] sm:$0xff]
      %v1491 = vld [vmem:[%s1481 + $0x11] sm:$0xff]
      %v1492 = vld [vmem:[%s1481 + $0x21] sm:$0xff]
      %v1493 = vld [vmem:[%s1481 + $0x31] sm:$0xff]
      %v1494 = vld [vmem:[%s1481 + $0x41] sm:$0xff]
      %v1495 = vld [vmem:[%s1481 + $0x51] sm:$0xff]
      %v1496 = vld [vmem:[%s1481 + $0x61] sm:$0xff]
      %v1497 = vld [vmem:[%s1481 + $0x71] sm:$0xff]
      %v1498 = vld [vmem:[%s1481 + $0x2] sm:$0xff]
      %v1499 = vld [vmem:[%s1481 + $0x12] sm:$0xff]
      %v1500 = vld [vmem:[%s1481 + $0x22] sm:$0xff]
      %v1501 = vld [vmem:[%s1481 + $0x32] sm:$0xff]
      %v1502 = vld [vmem:[%s1481 + $0x42] sm:$0xff]
      %v1503 = vld [vmem:[%s1481 + $0x52] sm:$0xff]
      %v1504 = vld [vmem:[%s1481 + $0x62] sm:$0xff]
      %v1505 = vld [vmem:[%s1481 + $0x72] sm:$0xff]
      %1514 = vrot.lane.b32.xlu0 %v1441, 4
      %v1515 = vpop.permute.xlu0 %1514
      %1516 = vrot.lane.b32.xlu0 %v1442, 4
      %v1517 = vpop.permute.xlu0 %1516
      %1518 = vrot.lane.b32.xlu0 %v1443, 4
      %v1519 = vpop.permute.xlu0 %1518
      %1520 = vrot.lane.b32.xlu0 %v1444, 4
      %v1521 = vpop.permute.xlu0 %1520
      %1522 = vrot.lane.b32.xlu0 %v1445, 4
      %v1523 = vpop.permute.xlu0 %1522
      %1524 = vrot.lane.b32.xlu0 %v1446, 4
      %v1525 = vpop.permute.xlu0 %1524
      %1526 = vrot.lane.b32.xlu0 %v1447, 4
      %v1527 = vpop.permute.xlu0 %1526
      %1528 = vrot.lane.b32.xlu0 %v1448, 4
      %v1529 = vpop.permute.xlu0 %1528
      %1546 = vrot.lane.b32.xlu0 %v1449, 8
      %v1547 = vpop.permute.xlu0 %1546
      %1548 = vrot.lane.b32.xlu0 %v1450, 8
      %v1549 = vpop.permute.xlu0 %1548
      %1550 = vrot.lane.b32.xlu0 %v1451, 8
      %v1551 = vpop.permute.xlu0 %1550
      %1552 = vrot.lane.b32.xlu0 %v1452, 8
      %v1553 = vpop.permute.xlu0 %1552
      %1554 = vrot.lane.b32.xlu0 %v1453, 8
      %v1555 = vpop.permute.xlu0 %1554
      %1556 = vrot.lane.b32.xlu0 %v1454, 8
      %v1557 = vpop.permute.xlu0 %1556
      %1558 = vrot.lane.b32.xlu0 %v1455, 8
      %v1559 = vpop.permute.xlu0 %1558
      %1560 = vrot.lane.b32.xlu0 %v1456, 8
      %v1561 = vpop.permute.xlu0 %1560
      %1578 = vrot.lane.b32.xlu0 %v1457, 12
      %v1579 = vpop.permute.xlu0 %1578
      %1580 = vrot.lane.b32.xlu0 %v1458, 12
      %v1581 = vpop.permute.xlu0 %1580
      %1582 = vrot.lane.b32.xlu0 %v1459, 12
      %v1583 = vpop.permute.xlu0 %1582
      %1584 = vrot.lane.b32.xlu0 %v1460, 12
      %v1585 = vpop.permute.xlu0 %1584
      %1586 = vrot.lane.b32.xlu0 %v1461, 12
      %v1587 = vpop.permute.xlu0 %1586
      %1588 = vrot.lane.b32.xlu0 %v1462, 12
      %v1589 = vpop.permute.xlu0 %1588
      %1590 = vrot.lane.b32.xlu0 %v1463, 12
      %v1591 = vpop.permute.xlu0 %1590
      %1592 = vrot.lane.b32.xlu0 %v1464, 12
      %v1593 = vpop.permute.xlu0 %1592
      %1610 = vrot.lane.b32.xlu0 %v1465, 16
      %v1611 = vpop.permute.xlu0 %1610
      %1612 = vrot.lane.b32.xlu0 %v1466, 16
      %v1613 = vpop.permute.xlu0 %1612
      %1614 = vrot.lane.b32.xlu0 %v1467, 16
      %v1615 = vpop.permute.xlu0 %1614
      %1616 = vrot.lane.b32.xlu0 %v1468, 16
      %v1617 = vpop.permute.xlu0 %1616
      %1618 = vrot.lane.b32.xlu0 %v1469, 16
      %v1619 = vpop.permute.xlu0 %1618
      %1620 = vrot.lane.b32.xlu0 %v1470, 16
      %v1621 = vpop.permute.xlu0 %1620
      %1622 = vrot.lane.b32.xlu0 %v1471, 16
      %v1623 = vpop.permute.xlu0 %1622
      %1624 = vrot.lane.b32.xlu0 %v1472, 16
      %v1625 = vpop.permute.xlu0 %1624
      %1642 = vrot.lane.b32.xlu0 %v1473, 20
      %v1643 = vpop.permute.xlu0 %1642
      %1644 = vrot.lane.b32.xlu0 %v1474, 20
      %v1645 = vpop.permute.xlu0 %1644
      %1646 = vrot.lane.b32.xlu0 %v1475, 20
      %v1647 = vpop.permute.xlu0 %1646
      %1648 = vrot.lane.b32.xlu0 %v1476, 20
      %v1649 = vpop.permute.xlu0 %1648
      %1650 = vrot.lane.b32.xlu0 %v1477, 20
      %v1651 = vpop.permute.xlu0 %1650
      %1652 = vrot.lane.b32.xlu0 %v1478, 20
      %v1653 = vpop.permute.xlu0 %1652
      %1654 = vrot.lane.b32.xlu0 %v1479, 20
      %v1655 = vpop.permute.xlu0 %1654
      %1656 = vrot.lane.b32.xlu0 %v1480, 20
      %v1657 = vpop.permute.xlu0 %1656
      %1674 = vrot.lane.b32.xlu0 %v1482, 24
      %v1675 = vpop.permute.xlu0 %1674
      %1676 = vrot.lane.b32.xlu0 %v1483, 24
      %v1677 = vpop.permute.xlu0 %1676
      %1678 = vrot.lane.b32.xlu0 %v1484, 24
      %v1679 = vpop.permute.xlu0 %1678
      %1680 = vrot.lane.b32.xlu0 %v1485, 24
      %v1681 = vpop.permute.xlu0 %1680
      %1682 = vrot.lane.b32.xlu0 %v1486, 24
      %v1683 = vpop.permute.xlu0 %1682
      %1684 = vrot.lane.b32.xlu0 %v1487, 24
      %v1685 = vpop.permute.xlu0 %1684
      %1686 = vrot.lane.b32.xlu0 %v1488, 24
      %v1687 = vpop.permute.xlu0 %1686
      %1688 = vrot.lane.b32.xlu0 %v1489, 24
      %v1689 = vpop.permute.xlu0 %1688
      %1706 = vrot.lane.b32.xlu0 %v1490, 28
      %v1707 = vpop.permute.xlu0 %1706
      %1708 = vrot.lane.b32.xlu0 %v1491, 28
      %v1709 = vpop.permute.xlu0 %1708
      %1710 = vrot.lane.b32.xlu0 %v1492, 28
      %v1711 = vpop.permute.xlu0 %1710
      %1712 = vrot.lane.b32.xlu0 %v1493, 28
      %v1713 = vpop.permute.xlu0 %1712
      %1714 = vrot.lane.b32.xlu0 %v1494, 28
      %v1715 = vpop.permute.xlu0 %1714
      %1716 = vrot.lane.b32.xlu0 %v1495, 28
      %v1717 = vpop.permute.xlu0 %1716
      %1718 = vrot.lane.b32.xlu0 %v1496, 28
      %v1719 = vpop.permute.xlu0 %1718
      %1720 = vrot.lane.b32.xlu0 %v1497, 28
      %v1721 = vpop.permute.xlu0 %1720
      %1738 = vrot.lane.b32.xlu0 %v1498, 32
      %v1739 = vpop.permute.xlu0 %1738
      %1740 = vrot.lane.b32.xlu0 %v1499, 32
      %v1741 = vpop.permute.xlu0 %1740
      %1742 = vrot.lane.b32.xlu0 %v1500, 32
      %v1743 = vpop.permute.xlu0 %1742
      %1744 = vrot.lane.b32.xlu0 %v1501, 32
      %v1745 = vpop.permute.xlu0 %1744
      %1746 = vrot.lane.b32.xlu0 %v1502, 32
      %v1747 = vpop.permute.xlu0 %1746
      %1748 = vrot.lane.b32.xlu0 %v1503, 32
      %v1749 = vpop.permute.xlu0 %1748
      %1750 = vrot.lane.b32.xlu0 %v1504, 32
      %v1751 = vpop.permute.xlu0 %1750
      %1752 = vrot.lane.b32.xlu0 %v1505, 32
      %v1753 = vpop.permute.xlu0 %1752
      %v1762 = vsel %vm1396, %v1433, %v1515
      %v1763 = vsel %vm1396, %v1434, %v1517
      %v1764 = vsel %vm1396, %v1435, %v1519
      %v1765 = vsel %vm1396, %v1436, %v1521
      %v1766 = vsel %vm1396, %v1437, %v1523
      %v1767 = vsel %vm1396, %v1438, %v1525
      %v1768 = vsel %vm1396, %v1439, %v1527
      %v1769 = vsel %vm1396, %v1440, %v1529
      %v1770 = vsel %vm1168, %v1762, %v1547
      %v1771 = vsel %vm1168, %v1763, %v1549
      %v1772 = vsel %vm1168, %v1764, %v1551
      %v1773 = vsel %vm1168, %v1765, %v1553
      %v1774 = vsel %vm1168, %v1766, %v1555
      %v1775 = vsel %vm1168, %v1767, %v1557
      %v1776 = vsel %vm1168, %v1768, %v1559
      %v1777 = vsel %vm1168, %v1769, %v1561
      %vm1778 = vcmask 97280
      %v1779 = vsel %vm1778, %v1770, %v1579
      %v1780 = vsel %vm1778, %v1771, %v1581
      %v1781 = vsel %vm1778, %v1772, %v1583
      %v1782 = vsel %vm1778, %v1773, %v1585
      %v1783 = vsel %vm1778, %v1774, %v1587
      %v1784 = vsel %vm1778, %v1775, %v1589
      %v1785 = vsel %vm1778, %v1776, %v1591
      %v1786 = vsel %vm1778, %v1777, %v1593
      %v1787 = vsel %vm1181, %v1779, %v1611
      %v1788 = vsel %vm1181, %v1780, %v1613
      %v1789 = vsel %vm1181, %v1781, %v1615
      %v1790 = vsel %vm1181, %v1782, %v1617
      %v1791 = vsel %vm1181, %v1783, %v1619
      %v1792 = vsel %vm1181, %v1784, %v1621
      %v1793 = vsel %vm1181, %v1785, %v1623
      %v1794 = vsel %vm1181, %v1786, %v1625
      %vm1795 = vcmask 162816
      %v1796 = vsel %vm1795, %v1787, %v1643
      %v1797 = vsel %vm1795, %v1788, %v1645
      %v1798 = vsel %vm1795, %v1789, %v1647
      %v1799 = vsel %vm1795, %v1790, %v1649
      %v1800 = vsel %vm1795, %v1791, %v1651
      %v1801 = vsel %vm1795, %v1792, %v1653
      %v1802 = vsel %vm1795, %v1793, %v1655
      %v1803 = vsel %vm1795, %v1794, %v1657
      %v1804 = vsel %vm1190, %v1796, %v1675
      %v1805 = vsel %vm1190, %v1797, %v1677
      %v1806 = vsel %vm1190, %v1798, %v1679
      %v1807 = vsel %vm1190, %v1799, %v1681
      %v1808 = vsel %vm1190, %v1800, %v1683
      %v1809 = vsel %vm1190, %v1801, %v1685
      %v1810 = vsel %vm1190, %v1802, %v1687
      %v1811 = vsel %vm1190, %v1803, %v1689
      %vm1812 = vcmask 228352
      %v1813 = vsel %vm1812, %v1804, %v1707
      %v1814 = vsel %vm1812, %v1805, %v1709
      %v1815 = vsel %vm1812, %v1806, %v1711
      %v1816 = vsel %vm1812, %v1807, %v1713
      %v1817 = vsel %vm1812, %v1808, %v1715
      %v1818 = vsel %vm1812, %v1809, %v1717
      %v1819 = vsel %vm1812, %v1810, %v1719
      %v1820 = vsel %vm1812, %v1811, %v1721
      %v1821 = vsel %vm1199, %v1813, %v1739
      %v1822 = vsel %vm1199, %v1814, %v1741
      %v1823 = vsel %vm1199, %v1815, %v1743
      %v1824 = vsel %vm1199, %v1816, %v1745
      %v1825 = vsel %vm1199, %v1817, %v1747
      %v1826 = vsel %vm1199, %v1818, %v1749
      %v1827 = vsel %vm1199, %v1819, %v1751
      %v1828 = vsel %vm1199, %v1820, %v1753
      %v1829 = vpack.c.bf16 %v1822, %v1821
      %v1830 = vpack.c.bf16 %v1824, %v1823
      %v1831 = vpack.c.bf16 %v1826, %v1825
      %v1832 = vpack.c.bf16 %v1828, %v1827
      %v1833 = vld [vmem:[%s395] sm:$0xf]
      %v1834 = vld [vmem:[%s395 + $0x4] sm:$0xf]
      %v1835 = vld [vmem:[%s395 + $0x8] sm:$0xf]
      %v1836 = vld [vmem:[%s395 + $0xc] sm:$0xf]
      %v1837 = vld [vmem:[%s395 + $0x10] sm:$0x3]
      %v1843 = vunpack.c.l.b16 %v1833
      %v1844 = vunpack.c.l.b16 %v1834
      %v1845 = vunpack.c.l.b16 %v1835
      %v1846 = vunpack.c.l.b16 %v1836
      %v1847 = vunpack.c.l.b16 %v1837
      %v1848 = vpack.c.b16 %v1844, %v1843
      %v1849 = vpack.c.b16 %v1846, %v1845
      %v1850 = vpack.c.b16 %v1847, %v1847
      %vm1853 = vcmask 293888
      %v1855 = vsel %vm1853, %v1829, 0
      %v1858 = vsel %vm1853, %v1830, 0
      %v1861 = vsel %vm1853, %v1831, 0
      %v1864 = vsel %vm1853, %v1832, 0
      %vm1866 = vcmask 1041408
      %v1868 = vsel %vm1866, %v1850, 0
      %1870 = vmatprep.subr.bf16.mxu0 0
      %1871 = vmatpush1.bf16.msra.mxu0 %v1848
      %1872 = vmatprep.subr.bf16.mxu0 0
      %1873 = vmatpush1.bf16.msra.mxu0 %v1849
      %1874 = vmatprep.subr.bf16.mxu0 0
      %1875 = vmatpush1.bf16.msra.mxu0 %v1868
      %1876 = vmatprep.subr.bf16.mxu0 0
      %1877 = vmatpush1.bf16.msra.mxu0 0
      %1878 = vmatprep.subr.bf16.mxu0 0
      %1879 = vmatpush1.bf16.msra.mxu0 0
      %1880 = vmatprep.subr.bf16.mxu0 0
      %1881 = vmatpush1.bf16.msra.mxu0 0
      %1882 = vmatprep.subr.bf16.mxu0 0
      %1883 = vmatpush1.bf16.msra.mxu0 0
      %1884 = vmatprep.subr.bf16.mxu0 0
      %1885 = vmatpush1.bf16.msra.mxu0 0
      %1886 = vmatprep.subr.bf16.mxu0 0
      %1887 = vmatpush1.bf16.msra.mxu0 0
      %1888 = vmatprep.subr.bf16.mxu0 0
      %1889 = vmatpush1.bf16.msra.mxu0 0
      %1890 = vmatprep.subr.bf16.mxu0 0
      %1891 = vmatpush1.bf16.msra.mxu0 0
      %1892 = vmatprep.subr.bf16.mxu0 0
      %1893 = vmatpush1.bf16.msra.mxu0 0
      %1894 = vmatprep.subr.bf16.mxu0 0
      %1895 = vmatpush1.bf16.msra.mxu0 0
      %1896 = vmatprep.subr.bf16.mxu0 0
      %1897 = vmatpush1.bf16.msra.mxu0 0
      %1898 = vmatprep.subr.bf16.mxu0 0
      %1899 = vmatpush1.bf16.msra.mxu0 0
      %1900 = vmatprep.subr.bf16.mxu0 0
      %1901 = vmatpush1.bf16.msra.mxu0 0
      %1902 = vmatprep.mubr.bf16.mxu0 0
      %1903 = vmatmul.mubr.bf16.gmra.mrb[0].mxu0 %v1855
      %v1904 = vpop.f32.mrb[0].mxu0
      %v1905 = vadd.f32 0.0, %v1904
      %v1906 = vpop.f32.mrb[0].mxu0
      %v1907 = vpop.f32.mrb[0].mxu0
      %v1908 = vadd.f32 0.0, %v1907
      %v1909 = vpop.f32.mrb[0].mxu0
      %1910 = vmatprep.mubr.bf16.mxu0 0
      %1911 = vmatmul.mubr.bf16.gmra.mrb[0].mxu0 %v1858
      %v1912 = vpop.f32.mrb[0].mxu0
      %v1913 = vadd.f32 0.0, %v1912
      %v1914 = vpop.f32.mrb[0].mxu0
      %v1915 = vpop.f32.mrb[0].mxu0
      %v1916 = vadd.f32 0.0, %v1915
      %v1917 = vpop.f32.mrb[0].mxu0
      %1918 = vmatprep.mubr.bf16.mxu0 0
      %1919 = vmatmul.mubr.bf16.gmra.mrb[0].mxu0 %v1861
      %v1920 = vpop.f32.mrb[0].mxu0
      %v1921 = vadd.f32 0.0, %v1920
      %v1922 = vpop.f32.mrb[0].mxu0
      %v1923 = vpop.f32.mrb[0].mxu0
      %v1924 = vadd.f32 0.0, %v1923
      %v1925 = vpop.f32.mrb[0].mxu0
      %1926 = vmatprep.mubr.bf16.mxu0 0
      %1927 = vmatmul.mubr.bf16.gmra.mrb[0].mxu0 %v1864
      %v1928 = vpop.f32.mrb[0].mxu0
      %v1929 = vadd.f32 0.0, %v1928
      %v1930 = vpop.f32.mrb[0].mxu0
      %v1931 = vpop.f32.mrb[0].mxu0
      %v1932 = vadd.f32 0.0, %v1931
      %v1933 = vpop.f32.mrb[0].mxu0
      %1934 = vdwg.mxu0
      %v1935 = vld [vmem:[%s398] sm:$0x1]
      %v1937 = vlaneseq
      %v1938 = vshrl.u32 %v1937, 7
      %v1939 = vsub.s32 0, %v1938
      %v1940 = vrot.slane %v1935, %v1939
      %v1942 = vmul.f32 %v1905, %v1940
      %v1943 = vmul.f32 %v1908, %v1940
      %v1944 = vmul.f32 %v1913, %v1940
      %v1945 = vmul.f32 %v1916, %v1940
      %v1946 = vmul.f32 %v1921, %v1940
      %v1947 = vmul.f32 %v1924, %v1940
      %v1948 = vmul.f32 %v1929, %v1940
      %v1949 = vmul.f32 %v1932, %v1940
      %v1950 = vld [vmem:[%s401] sm:$0x1]
      %v1952 = vlaneseq
      %v1953 = vshrl.u32 %v1952, 7
      %v1954 = vsub.s32 0, %v1953
      %v1955 = vrot.slane %v1950, %v1954
      %v1957 = vadd.f32 %v1942, %v1955
      %v1958 = vadd.f32 %v1943, %v1955
      %v1959 = vadd.f32 %v1944, %v1955
      %v1960 = vadd.f32 %v1945, %v1955
      %v1961 = vadd.f32 %v1946, %v1955
      %v1962 = vadd.f32 %v1947, %v1955
      %v1963 = vadd.f32 %v1948, %v1955
      %v1964 = vadd.f32 %v1949, %v1955
      %v1965 = vmax.f32 %v1957, 0.0
      %v1966 = vmax.f32 %v1958, 0.0
      %v1967 = vmax.f32 %v1959, 0.0
      %v1968 = vmax.f32 %v1960, 0.0
      %v1969 = vmax.f32 %v1961, 0.0
      %v1970 = vmax.f32 %v1962, 0.0
      %v1971 = vmax.f32 %v1963, 0.0
      %v1972 = vmax.f32 %v1964, 0.0
      %v1973 = vpack.c.bf16 %v1965, %v1965
      %v1974 = vpack.c.bf16 %v1966, %v1966
      %v1975 = vpack.c.bf16 %v1967, %v1967
      %v1976 = vpack.c.bf16 %v1968, %v1968
      %v1977 = vpack.c.bf16 %v1969, %v1969
      %v1978 = vpack.c.bf16 %v1970, %v1970
      %v1979 = vpack.c.bf16 %v1971, %v1971
      %v1980 = vpack.c.bf16 %v1972, %v1972
      %1981 = vst [vmem:[%s408] sm:$0xf] %v1973
      %1982 = vst [vmem:[%s408 + $0x4] sm:$0xf] %v1974
      %1983 = vst [vmem:[%s408 + $0x8] sm:$0xf] %v1975
      %1984 = vst [vmem:[%s408 + $0xc] sm:$0xf] %v1976
      %1985 = vst [vmem:[%s408 + $0x10] sm:$0xf] %v1977
      %1986 = vst [vmem:[%s408 + $0x14] sm:$0xf] %v1978
      %1987 = vst [vmem:[%s408 + $0x18] sm:$0xf] %v1979
      %1988 = vst [vmem:[%s408 + $0x1c] sm:$0xf] %v1980
      %s1989 = smul.u32 %s22, 2
      %s1990 = sadd.s32 %s1989, %s23
      %p1991 = scmp.lt.s32.totalorder %s1990, 1
      %s1992 = scalar_select %p1991, %s1990, 1
      %s1993 = smul.addr %s1992, 8
      %s1994 = smul.addr %s1993, 4
      %s1995 = scalar_lea.vmem %s7, %s1994
      // Predicated region
      $region49: #{up_dense_2_softmax_forward.5} parent=47 // pred_check
        %p1996 = pneg %p238
      $region50: #{up_dense_2_softmax_forward.5} parent=47 // pred_check_branch
        %1998 = sbr.rel (%p1996) target = $region52
      $region51: #{up_dense_2_softmax_forward.5} parent=47 // pred_region
        %s1999 = smul.u32 %s22, 2
        %s2000 = sadd.s32 %s1999, %s23
      $region52: #{up_dense_2_softmax_forward.5} parent=47 // pred_fallthru
        _
    $region48: #{up_dense_2_softmax_forward.5} parent=5 // pred_fallthru
      _
    %p2001 = scmp.le.s32.totalorder 2, %s13
    // Predicated region
    $region53: #{up_dense_2_softmax_forward.5} parent=5 // pred_check
      %p2002 = pneg %p2001
    $region54: #{up_dense_2_softmax_forward.5} parent=5 // pred_check_branch
      %2004 = sbr.rel (%p2002) target = $region56
    $region55: #{up_dense_2_softmax_forward.5} parent=5 // pred_region
      %s2005 = ssub.s32 %s13, 2
      // Predicated region
      $region57: #{up_dense_2_softmax_forward.5} parent=55 // pred_check
        %p2006 = pneg %p244
      $region58: #{up_dense_2_softmax_forward.5} parent=55 // pred_check_branch
        %2008 = sbr.rel (%p2006) target = $region60
      $region59: #{up_dense_2_softmax_forward.5} parent=55 // pred_region
        %s2009 = smul.u32 %s24, 2
        %s2010 = sadd.s32 %s2009, %s25
        %p2011 = scmp.lt.s32.totalorder %s2010, 1
        %s2012 = scalar_select %p2011, %s2010, 1
        %s2013 = smul.addr %s2012, 8
        %s2014 = smul.addr %s2013, 4
        %s2015 = scalar_lea.vmem %s7, %s2014
      $region60: #{up_dense_2_softmax_forward.5} parent=55 // pred_fallthru
        _
    $region56: #{up_dense_2_softmax_forward.5} parent=5 // pred_fallthru
      _
  $region6: #{up_dense_2_softmax_forward.5} parent=0 // loop_footer
    %s17 = sadd.s32 1, %s13
  $region7: #{up_dense_2_softmax_forward.5} parent=0 // loop_footer_branch
    %12 = sbr.rel target = $region3
  $region8: #{up_dense_2_softmax_forward.5} parent=0 // loop_exit
    _

// kernel: up_dense_2_softmax_forward.3
$region0: #{up_dense_2_softmax_forward.3}
  #allocation0 [shape = 'u32[]', space=smem, size = 0x4, offset = 0x4, fixed_abs, tag = 'smem constant byte address 0x4 - core index']
  #allocation1 [shape = 'u32[144,128]{1,0:T(1,128)}', space=vmem, size = 0x12000, scoped, tag = 'internal scratch']
  #allocation2 [shape = 'f32[2,10,10,4]{3,2,1,0:T(8,128)}', space=vmem, size = 0x28000, scoped, tag = 'scratch operand']
  %s0 = inlined_call_operand.vmem [shape: bf16[8,10,10,8], index: 0, kind: input, shape index: {}]
  %s1 = inlined_call_operand.vmem [shape: bf16[4,72,4], index: 1, kind: input, shape index: {}]
  %s2 = inlined_call_operand.vmem [shape: f32[4,1,4], index: 2, kind: input, shape index: {}]
  %s3 = inlined_call_operand.vmem [shape: f32[4,1,4], index: 3, kind: input, shape index: {}]
  %s4 = inlined_call_operand.vmem [shape: bf16[4,36,128], index: 4, kind: input, shape index: {}]
  %s5 = inlined_call_operand.vmem [shape: f32[4,1,128], index: 5, kind: input, shape index: {}]
  %s6 = inlined_call_operand.vmem [shape: f32[4,1,128], index: 6, kind: input, shape index: {}]
  %s7 = inlined_call_operand.vmem [shape: bf16[8,8,8,128], index: 7, kind: output, shape index: {}]
  %s8 = sld [smem:[#allocation0]]
  $region61: #{up_dense_2_softmax_forward.3} parent=0
    _
  %s10 = ssub.s32 1, %s8
  %s11 = scalar_select 0, %s10, %s8
  loop: start=0, step=1, limit=6
  $region2: #{up_dense_2_softmax_forward.3} parent=0 // loop_pre_header
    _
  $region3: #{up_dense_2_softmax_forward.3} parent=0 // loop_header
    %s13 = sphi 0, %s17
    %p14 = scmp.ge.s32.totalorder %s13, 6
    %s20 = sphi 0, %s32
    %s21 = sphi 0, %s28
    %s22 = sphi 0, %s20
    %s23 = sphi 0, %s21
    %s24 = sphi 0, %s22
    %s25 = sphi 0, %s23
    %s37 = sphi 0, %s39
    %s40 = sphi 0, %s37
    %s41 = sphi 0, %s40
    %s57 = sphi 0, %s41
    %s63 = sphi 0, %s65
    %s66 = sphi 0, %s63
    %s67 = sphi 0, %s66
    %s83 = sphi 0, %s67
    %s89 = sphi 0, %s91
    %s92 = sphi 0, %s89
    %s93 = sphi 0, %s92
    %s109 = sphi 0, %s93
    %s115 = sphi 0, %s117
    %s118 = sphi 0, %s115
    %s119 = sphi 0, %s118
    %s135 = sphi 0, %s119
    %s141 = sphi 0, %s143
    %s144 = sphi 0, %s141
    %s145 = sphi 0, %s144
    %s161 = sphi 0, %s145
    %s167 = sphi 0, %s169
    %s170 = sphi 0, %s167
    %s171 = sphi 0, %s170
    %s187 = sphi 0, %s171
    %s193 = sphi 0, %s195
    %s196 = sphi 0, %s193
    %s197 = sphi 0, %s196
    %s213 = sphi 0, %s197
    %s221 = sphi 0, %s223
    %s224 = sphi 0, %s221
    %s225 = sphi 0, %s224
    %s241 = sphi 0, %s225
  $region4: #{up_dense_2_softmax_forward.3} parent=0 // loop_header_branch
    %16 = sbr.rel (%p14) target = $region8
  $region5: #{up_dense_2_softmax_forward.3} parent=0 // loop_body
    %s18 = ssub.s32 %s13, 1
    %s19 = ssub.s32 %s13, 2
    %s26 = sadd.s32 1, %s21
    %p27 = scmp.ge.s32.totalorder %s26, 1
    %s28 = scalar_select %p27, 0, %s26
    %s29 = sadd.s32 1, %s20
    %s30 = scalar_select %p27, %s29, %s20
    %p31 = scmp.ge.s32.totalorder %s30, 4
    %s32 = scalar_select %p31, 0, %s30
    %s33 = sadd.s32 %s20, %s21
    %s34 = sadd.s32 %s32, %s28
    %s35 = ssub.s32 %s33, %s34
    %p36 = scmp.eq.s32.totalorder %s35, 0
    %s38 = sadd.s32 %s37, 1
    %s39 = scalar_select %p36, %s37, %s38
    %p42 = pneg %p36
    %p43 = scmp.eq.s32.totalorder %s13, 3
    %p44 = por %p42, %p43
    %p45 = scmp.ne.s32.totalorder %s37, %s40
    %p46 = scmp.eq.s32.totalorder %s13, 0
    %p47 = por %p45, %p46
    %p48 = scmp.ne.s32.totalorder %s37, %s40
    %p49 = scmp.eq.s32.totalorder %s18, 3
    %p50 = por %p48, %p49
    %p51 = scmp.ne.s32.totalorder %s40, %s41
    %p52 = scmp.eq.s32.totalorder %s18, 0
    %p53 = por %p51, %p52
    %p54 = scmp.ne.s32.totalorder %s40, %s41
    %p55 = scmp.eq.s32.totalorder %s19, 3
    %p56 = por %p54, %p55
    %p58 = scmp.ne.s32.totalorder %s41, %s57
    %p59 = scmp.eq.s32.totalorder %s19, 0
    %p60 = por %p58, %p59
    %s61 = ssub.s32 %s20, %s32
    %p62 = scmp.eq.s32.totalorder %s61, 0
    %s64 = sadd.s32 %s63, 1
    %s65 = scalar_select %p62, %s63, %s64
    %p68 = pneg %p62
    %p69 = scmp.eq.s32.totalorder %s13, 3
    %p70 = por %p68, %p69
    %p71 = scmp.ne.s32.totalorder %s63, %s66
    %p72 = scmp.eq.s32.totalorder %s13, 0
    %p73 = por %p71, %p72
    %p74 = scmp.ne.s32.totalorder %s63, %s66
    %p75 = scmp.eq.s32.totalorder %s18, 3
    %p76 = por %p74, %p75
    %p77 = scmp.ne.s32.totalorder %s66, %s67
    %p78 = scmp.eq.s32.totalorder %s18, 0
    %p79 = por %p77, %p78
    %p80 = scmp.ne.s32.totalorder %s66, %s67
    %p81 = scmp.eq.s32.totalorder %s19, 3
    %p82 = por %p80, %p81
    %p84 = scmp.ne.s32.totalorder %s67, %s83
    %p85 = scmp.eq.s32.totalorder %s19, 0
    %p86 = por %p84, %p85
    %s87 = ssub.s32 %s20, %s32
    %p88 = scmp.eq.s32.totalorder %s87, 0
    %s90 = sadd.s32 %s89, 1
    %s91 = scalar_select %p88, %s89, %s90
    %p94 = pneg %p88
    %p95 = scmp.eq.s32.totalorder %s13, 3
    %p96 = por %p94, %p95
    %p97 = scmp.ne.s32.totalorder %s89, %s92
    %p98 = scmp.eq.s32.totalorder %s13, 0
    %p99 = por %p97, %p98
    %p100 = scmp.ne.s32.totalorder %s89, %s92
    %p101 = scmp.eq.s32.totalorder %s18, 3
    %p102 = por %p100, %p101
    %p103 = scmp.ne.s32.totalorder %s92, %s93
    %p104 = scmp.eq.s32.totalorder %s18, 0
    %p105 = por %p103, %p104
    %p106 = scmp.ne.s32.totalorder %s92, %s93
    %p107 = scmp.eq.s32.totalorder %s19, 3
    %p108 = por %p106, %p107
    %p110 = scmp.ne.s32.totalorder %s93, %s109
    %p111 = scmp.eq.s32.totalorder %s19, 0
    %p112 = por %p110, %p111
    %s113 = ssub.s32 %s20, %s32
    %p114 = scmp.eq.s32.totalorder %s113, 0
    %s116 = sadd.s32 %s115, 1
    %s117 = scalar_select %p114, %s115, %s116
    %p120 = pneg %p114
    %p121 = scmp.eq.s32.totalorder %s13, 3
    %p122 = por %p120, %p121
    %p123 = scmp.ne.s32.totalorder %s115, %s118
    %p124 = scmp.eq.s32.totalorder %s13, 0
    %p125 = por %p123, %p124
    %p126 = scmp.ne.s32.totalorder %s115, %s118
    %p127 = scmp.eq.s32.totalorder %s18, 3
    %p128 = por %p126, %p127
    %p129 = scmp.ne.s32.totalorder %s118, %s119
    %p130 = scmp.eq.s32.totalorder %s18, 0
    %p131 = por %p129, %p130
    %p132 = scmp.ne.s32.totalorder %s118, %s119
    %p133 = scmp.eq.s32.totalorder %s19, 3
    %p134 = por %p132, %p133
    %p136 = scmp.ne.s32.totalorder %s119, %s135
    %p137 = scmp.eq.s32.totalorder %s19, 0
    %p138 = por %p136, %p137
    %s139 = ssub.s32 %s20, %s32
    %p140 = scmp.eq.s32.totalorder %s139, 0
    %s142 = sadd.s32 %s141, 1
    %s143 = scalar_select %p140, %s141, %s142
    %p146 = pneg %p140
    %p147 = scmp.eq.s32.totalorder %s13, 3
    %p148 = por %p146, %p147
    %p149 = scmp.ne.s32.totalorder %s141, %s144
    %p150 = scmp.eq.s32.totalorder %s13, 0
    %p151 = por %p149, %p150
    %p152 = scmp.ne.s32.totalorder %s141, %s144
    %p153 = scmp.eq.s32.totalorder %s18, 3
    %p154 = por %p152, %p153
    %p155 = scmp.ne.s32.totalorder %s144, %s145
    %p156 = scmp.eq.s32.totalorder %s18, 0
    %p157 = por %p155, %p156
    %p158 = scmp.ne.s32.totalorder %s144, %s145
    %p159 = scmp.eq.s32.totalorder %s19, 3
    %p160 = por %p158, %p159
    %p162 = scmp.ne.s32.totalorder %s145, %s161
    %p163 = scmp.eq.s32.totalorder %s19, 0
    %p164 = por %p162, %p163
    %s165 = ssub.s32 %s20, %s32
    %p166 = scmp.eq.s32.totalorder %s165, 0
    %s168 = sadd.s32 %s167, 1
    %s169 = scalar_select %p166, %s167, %s168
    %p172 = pneg %p166
    %p173 = scmp.eq.s32.totalorder %s13, 3
    %p174 = por %p172, %p173
    %p175 = scmp.ne.s32.totalorder %s167, %s170
    %p176 = scmp.eq.s32.totalorder %s13, 0
    %p177 = por %p175, %p176
    %p178 = scmp.ne.s32.totalorder %s167, %s170
    %p179 = scmp.eq.s32.totalorder %s18, 3
    %p180 = por %p178, %p179
    %p181 = scmp.ne.s32.totalorder %s170, %s171
    %p182 = scmp.eq.s32.totalorder %s18, 0
    %p183 = por %p181, %p182
    %p184 = scmp.ne.s32.totalorder %s170, %s171
    %p185 = scmp.eq.s32.totalorder %s19, 3
    %p186 = por %p184, %p185
    %p188 = scmp.ne.s32.totalorder %s171, %s187
    %p189 = scmp.eq.s32.totalorder %s19, 0
    %p190 = por %p188, %p189
    %s191 = ssub.s32 %s20, %s32
    %p192 = scmp.eq.s32.totalorder %s191, 0
    %s194 = sadd.s32 %s193, 1
    %s195 = scalar_select %p192, %s193, %s194
    %p198 = pneg %p192
    %p199 = scmp.eq.s32.totalorder %s13, 3
    %p200 = por %p198, %p199
    %p201 = scmp.ne.s32.totalorder %s193, %s196
    %p202 = scmp.eq.s32.totalorder %s13, 0
    %p203 = por %p201, %p202
    %p204 = scmp.ne.s32.totalorder %s193, %s196
    %p205 = scmp.eq.s32.totalorder %s18, 3
    %p206 = por %p204, %p205
    %p207 = scmp.ne.s32.totalorder %s196, %s197
    %p208 = scmp.eq.s32.totalorder %s18, 0
    %p209 = por %p207, %p208
    %p210 = scmp.ne.s32.totalorder %s196, %s197
    %p211 = scmp.eq.s32.totalorder %s19, 3
    %p212 = por %p210, %p211
    %p214 = scmp.ne.s32.totalorder %s197, %s213
    %p215 = scmp.eq.s32.totalorder %s19, 0
    %p216 = por %p214, %p215
    %s217 = sadd.s32 %s20, %s21
    %s218 = sadd.s32 %s32, %s28
    %s219 = ssub.s32 %s217, %s218
    %p220 = scmp.eq.s32.totalorder %s219, 0
    %s222 = sadd.s32 %s221, 1
    %s223 = scalar_select %p220, %s221, %s222
    %p226 = pneg %p220
    %p227 = scmp.eq.s32.totalorder %s13, 3
    %p228 = por %p226, %p227
    %p229 = scmp.ne.s32.totalorder %s221, %s224
    %p230 = scmp.eq.s32.totalorder %s13, 0
    %p231 = por %p229, %p230
    %p232 = scmp.ne.s32.totalorder %s221, %s224
    %p233 = scmp.eq.s32.totalorder %s18, 3
    %p234 = por %p232, %p233
    %p235 = scmp.ne.s32.totalorder %s224, %s225
    %p236 = scmp.eq.s32.totalorder %s18, 0
    %p237 = por %p235, %p236
    %p238 = scmp.ne.s32.totalorder %s224, %s225
    %p239 = scmp.eq.s32.totalorder %s19, 3
    %p240 = por %p238, %p239
    %p242 = scmp.ne.s32.totalorder %s225, %s241
    %p243 = scmp.eq.s32.totalorder %s19, 0
    %p244 = por %p242, %p243
    %p245 = scmp.le.s32.totalorder 1, %s13
    %p246 = scmp.lt.s32.totalorder %s13, 5
    %p247 = pnand %p245, %p246
    %p248 = pneg %p247
    // Predicated region
    $region9: #{up_dense_2_softmax_forward.3} parent=5 // pred_check
      _
    $region10: #{up_dense_2_softmax_forward.3} parent=5 // pred_check_branch
      %250 = sbr.rel (%p247) target = $region12
    $region11: #{up_dense_2_softmax_forward.3} parent=5 // pred_region
      %s251 = ssub.s32 %s13, 1
    $region12: #{up_dense_2_softmax_forward.3} parent=5 // pred_fallthru
      _
    %p252 = scmp.lt.s32.totalorder %s13, 4
    // Predicated region
    $region13: #{up_dense_2_softmax_forward.3} parent=5 // pred_check
      %p253 = pneg %p252
    $region14: #{up_dense_2_softmax_forward.3} parent=5 // pred_check_branch
      %255 = sbr.rel (%p253) target = $region16
    $region15: #{up_dense_2_softmax_forward.3} parent=5 // pred_region
      // Predicated region
      $region17: #{up_dense_2_softmax_forward.3} parent=15 // pred_check
        %p256 = pneg %p47
      $region18: #{up_dense_2_softmax_forward.3} parent=15 // pred_check_branch
        %258 = sbr.rel (%p256) target = $region20
      $region19: #{up_dense_2_softmax_forward.3} parent=15 // pred_region
        %s259 = sadd.s32 %s20, %s21
        %s260 = smul.u32 2, %s259
        %p261 = scmp.lt.s32.totalorder %s260, 7
        %s262 = scalar_select %p261, %s260, 7
        %s263 = smul.addr %s262, 20
        %s264 = smul.addr %s263, 4
        %s265 = scalar_lea.vmem %s0, %s264
        %s266 = sadd.s32 %s20, %s21
        %s267 = smul.u32 2, %s266
      $region20: #{up_dense_2_softmax_forward.3} parent=15 // pred_fallthru
        _
      // Predicated region
      $region21: #{up_dense_2_softmax_forward.3} parent=15 // pred_check
        %p268 = pneg %p73
      $region22: #{up_dense_2_softmax_forward.3} parent=15 // pred_check_branch
        %270 = sbr.rel (%p268) target = $region24
      $region23: #{up_dense_2_softmax_forward.3} parent=15 // pred_region
        %p271 = scmp.lt.s32.totalorder %s20, 3
        %s272 = scalar_select %p271, %s20, 3
        %s273 = smul.addr %s272, 9
        %s274 = smul.addr %s273, 4
        %s275 = scalar_lea.vmem %s1, %s274
      $region24: #{up_dense_2_softmax_forward.3} parent=15 // pred_fallthru
        _
      // Predicated region
      $region25: #{up_dense_2_softmax_forward.3} parent=15 // pred_check
        %p276 = pneg %p99
      $region26: #{up_dense_2_softmax_forward.3} parent=15 // pred_check_branch
        %278 = sbr.rel (%p276) target = $region28
      $region27: #{up_dense_2_softmax_forward.3} parent=15 // pred_region
        %p279 = scmp.lt.s32.totalorder %s20, 3
        %s280 = scalar_select %p279, %s20, 3
        %s281 = scalar_lea.vmem %s2, %s280
      $region28: #{up_dense_2_softmax_forward.3} parent=15 // pred_fallthru
        _
      // Predicated region
      $region29: #{up_dense_2_softmax_forward.3} parent=15 // pred_check
        %p282 = pneg %p125
      $region30: #{up_dense_2_softmax_forward.3} parent=15 // pred_check_branch
        %284 = sbr.rel (%p282) target = $region32
      $region31: #{up_dense_2_softmax_forward.3} parent=15 // pred_region
        %p285 = scmp.lt.s32.totalorder %s20, 3
        %s286 = scalar_select %p285, %s20, 3
        %s287 = scalar_lea.vmem %s3, %s286
      $region32: #{up_dense_2_softmax_forward.3} parent=15 // pred_fallthru
        _
      // Predicated region
      $region33: #{up_dense_2_softmax_forward.3} parent=15 // pred_check
        %p288 = pneg %p151
      $region34: #{up_dense_2_softmax_forward.3} parent=15 // pred_check_branch
        %290 = sbr.rel (%p288) target = $region36
      $region35: #{up_dense_2_softmax_forward.3} parent=15 // pred_region
        %p291 = scmp.lt.s32.totalorder %s20, 3
        %s292 = scalar_select %p291, %s20, 3
        %s293 = smul.addr %s292, 5
        %s294 = smul.addr %s293, 4
        %s295 = scalar_lea.vmem %s4, %s294
      $region36: #{up_dense_2_softmax_forward.3} parent=15 // pred_fallthru
        _
      // Predicated region
      $region37: #{up_dense_2_softmax_forward.3} parent=15 // pred_check
        %p296 = pneg %p177
      $region38: #{up_dense_2_softmax_forward.3} parent=15 // pred_check_branch
        %298 = sbr.rel (%p296) target = $region40
      $region39: #{up_dense_2_softmax_forward.3} parent=15 // pred_region
        %p299 = scmp.lt.s32.totalorder %s20, 3
        %s300 = scalar_select %p299, %s20, 3
        %s301 = scalar_lea.vmem %s5, %s300
      $region40: #{up_dense_2_softmax_forward.3} parent=15 // pred_fallthru
        _
      // Predicated region
      $region41: #{up_dense_2_softmax_forward.3} parent=15 // pred_check
        %p302 = pneg %p203
      $region42: #{up_dense_2_softmax_forward.3} parent=15 // pred_check_branch
        %304 = sbr.rel (%p302) target = $region44
      $region43: #{up_dense_2_softmax_forward.3} parent=15 // pred_region
        %p305 = scmp.lt.s32.totalorder %s20, 3
        %s306 = scalar_select %p305, %s20, 3
        %s307 = scalar_lea.vmem %s6, %s306
      $region44: #{up_dense_2_softmax_forward.3} parent=15 // pred_fallthru
        _
    $region16: #{up_dense_2_softmax_forward.3} parent=5 // pred_fallthru
      _
    %p308 = scmp.le.s32.totalorder 1, %s13
    %p309 = scmp.lt.s32.totalorder %s13, 5
    %p310 = pnand %p308, %p309
    %p311 = pneg %p310
    // Predicated region
    $region45: #{up_dense_2_softmax_forward.3} parent=5 // pred_check
      _
    $region46: #{up_dense_2_softmax_forward.3} parent=5 // pred_check_branch
      %313 = sbr.rel (%p310) target = $region48
    $region47: #{up_dense_2_softmax_forward.3} parent=5 // pred_region
      %s314 = ssub.s32 %s13, 1
      %s315 = sadd.s32 %s22, %s23
      %s316 = smul.u32 2, %s315
      %p317 = scmp.lt.s32.totalorder %s316, 7
      %s318 = scalar_select %p317, %s316, 7
      %s319 = smul.addr %s318, 20
      %s320 = smul.addr %s319, 4
      %s321 = scalar_lea.vmem %s0, %s320
      %p322 = pneg %p53
      %p323 = pneg %p50
      %p324 = scmp.lt.s32.totalorder %s22, 3
      %s325 = scalar_select %p324, %s22, 3
      %s326 = smul.addr %s325, 9
      %s327 = smul.addr %s326, 4
      %s328 = scalar_lea.vmem %s1, %s327
      %p329 = pneg %p79
      %p330 = pneg %p76
      %p331 = scmp.lt.s32.totalorder %s22, 3
      %s332 = scalar_select %p331, %s22, 3
      %s333 = scalar_lea.vmem %s2, %s332
      %p334 = pneg %p105
      %p335 = pneg %p102
      %p336 = scmp.lt.s32.totalorder %s22, 3
      %s337 = scalar_select %p336, %s22, 3
      %s338 = scalar_lea.vmem %s3, %s337
      %p339 = pneg %p131
      %p340 = pneg %p128
      %p341 = scmp.lt.s32.totalorder %s22, 3
      %s342 = scalar_select %p341, %s22, 3
      %s343 = smul.addr %s342, 5
      %s344 = smul.addr %s343, 4
      %s345 = scalar_lea.vmem %s4, %s344
      %p346 = pneg %p157
      %p347 = pneg %p154
      %p348 = scmp.lt.s32.totalorder %s22, 3
      %s349 = scalar_select %p348, %s22, 3
      %s350 = scalar_lea.vmem %s5, %s349
      %p351 = pneg %p183
      %p352 = pneg %p180
      %p353 = scmp.lt.s32.totalorder %s22, 3
      %s354 = scalar_select %p353, %s22, 3
      %s355 = scalar_lea.vmem %s6, %s354
      %p356 = pneg %p209
      %p357 = pneg %p206
      %p358 = pneg %p237
      %p359 = pneg %p234
      %s360 = sadd.s32 %s22, %s23
      %s361 = smul.u32 2, %s360
      %p362 = scmp.lt.s32.totalorder %s361, 7
      %s363 = scalar_select %p362, %s361, 7
      %s364 = smul.addr %s363, 8
      %s365 = smul.addr %s364, 4
      %s366 = scalar_lea.vmem %s7, %s365
      %s367 = sadd.s32 %s22, %s23
      %s368 = smul.u32 2, %s367
      %p369 = scmp.lt.s32.totalorder %s368, 7
      %s370 = scalar_select %p369, %s368, 7
      %s371 = smul.addr %s370, 20
      %s372 = smul.addr %s371, 4
      %s373 = scalar_lea.vmem %s0, %s372
      %s374 = sadd.s32 %s22, %s23
      %s375 = smul.u32 2, %s374
      %p376 = scmp.lt.s32.totalorder %s22, 3
      %s377 = scalar_select %p376, %s22, 3
      %s378 = smul.addr %s377, 9
      %s379 = smul.addr %s378, 4
      %s380 = scalar_lea.vmem %s1, %s379
      %p381 = scmp.lt.s32.totalorder %s22, 3
      %s382 = scalar_select %p381, %s22, 3
      %s383 = scalar_lea.vmem %s2, %s382
      %p384 = scmp.lt.s32.totalorder %s22, 3
      %s385 = scalar_select %p384, %s22, 3
      %s386 = scalar_lea.vmem %s3, %s385
      %p387 = scmp.lt.s32.totalorder %s22, 3
      %s388 = scalar_select %p387, %s22, 3
      %s389 = smul.addr %s388, 5
      %s390 = smul.addr %s389, 4
      %s391 = scalar_lea.vmem %s4, %s390
      %p392 = scmp.lt.s32.totalorder %s22, 3
      %s393 = scalar_select %p392, %s22, 3
      %s394 = scalar_lea.vmem %s5, %s393
      %p395 = scmp.lt.s32.totalorder %s22, 3
      %s396 = scalar_select %p395, %s22, 3
      %s397 = scalar_lea.vmem %s6, %s396
      %s398 = sadd.s32 %s22, %s23
      %s399 = smul.u32 2, %s398
      %p400 = scmp.lt.s32.totalorder %s399, 7
      %s401 = scalar_select %p400, %s399, 7
      %s402 = smul.addr %s401, 8
      %s403 = smul.addr %s402, 4
      %s404 = scalar_lea.vmem %s7, %s403
      %s405 = sadd.s32 %s22, %s23
      %s406 = smul.u32 2, %s405
      %v408 = vld [vmem:[%s373] sm:$0xf]
      %v409 = vld [vmem:[%s373 + $0x8] sm:$0xf]
      %v410 = vld [vmem:[%s373 + $0x10] sm:$0xf]
      %v411 = vld [vmem:[%s373 + $0x18] sm:$0xf]
      %v412 = vld [vmem:[%s373 + $0x20] sm:$0xf]
      %v413 = vld [vmem:[%s373 + $0x28] sm:$0xf]
      %v414 = vld [vmem:[%s373 + $0x30] sm:$0xf]
      %v415 = vld [vmem:[%s373 + $0x38] sm:$0xf]
      %v416 = vld [vmem:[%s373 + $0x50] sm:$0xf]
      %v417 = vld [vmem:[%s373 + $0x58] sm:$0xf]
      %v418 = vld [vmem:[%s373 + $0x60] sm:$0xf]
      %v419 = vld [vmem:[%s373 + $0x68] sm:$0xf]
      %v420 = vld [vmem:[%s373 + $0x70] sm:$0xf]
      %v421 = vld [vmem:[%s373 + $0x78] sm:$0xf]
      %v422 = vld [vmem:[%s373 + $0x80] sm:$0xf]
      %v423 = vld [vmem:[%s373 + $0x88] sm:$0xf]
      %v424 = vld [vmem:[%s373 + $0x4] sm:$0x1]
      %v425 = vld [vmem:[%s373 + $0xc] sm:$0x1]
      %v426 = vld [vmem:[%s373 + $0x14] sm:$0x1]
      %v427 = vld [vmem:[%s373 + $0x1c] sm:$0x1]
      %v428 = vld [vmem:[%s373 + $0x24] sm:$0x1]
      %v429 = vld [vmem:[%s373 + $0x2c] sm:$0x1]
      %v430 = vld [vmem:[%s373 + $0x34] sm:$0x1]
      %v431 = vld [vmem:[%s373 + $0x3c] sm:$0x1]
      %v432 = vld [vmem:[%s373 + $0x54] sm:$0x1]
      %v433 = vld [vmem:[%s373 + $0x5c] sm:$0x1]
      %v434 = vld [vmem:[%s373 + $0x64] sm:$0x1]
      %v435 = vld [vmem:[%s373 + $0x6c] sm:$0x1]
      %v436 = vld [vmem:[%s373 + $0x74] sm:$0x1]
      %v437 = vld [vmem:[%s373 + $0x7c] sm:$0x1]
      %v438 = vld [vmem:[%s373 + $0x84] sm:$0x1]
      %v439 = vld [vmem:[%s373 + $0x8c] sm:$0x1]
      %vm440 = vsmask.f32 3328
      %vm441 = vsmask.f32 7440
      %vm442 = vmor %vm440, %vm441
      %v444 = vshrl.u32 %v408, 16
      %v446 = vrot.slane %v444, 4
      %v447 = vshll.u32 %v408, 16
      %v449 = vrot.slane %v447, 5
      %v450 = vor.u32 %v446, %v449
      %v451 = vrot.slane %v450, 4
      %v453 = vshll.u32 %v424, 16
      %v455 = vrot.slane %v453, 5
      %v456 = vsel %vm442, %v451, %v455
      %v458 = vshrl.u32 %v409, 16
      %v460 = vrot.slane %v458, 4
      %v461 = vshll.u32 %v409, 16
      %v463 = vrot.slane %v461, 5
      %v464 = vor.u32 %v460, %v463
      %v465 = vrot.slane %v464, 4
      %v467 = vshll.u32 %v425, 16
      %v469 = vrot.slane %v467, 5
      %v470 = vsel %vm442, %v465, %v469
      %v472 = vshrl.u32 %v410, 16
      %v474 = vrot.slane %v472, 4
      %v475 = vshll.u32 %v410, 16
      %v477 = vrot.slane %v475, 5
      %v478 = vor.u32 %v474, %v477
      %v479 = vrot.slane %v478, 4
      %v481 = vshll.u32 %v426, 16
      %v483 = vrot.slane %v481, 5
      %v484 = vsel %vm442, %v479, %v483
      %v486 = vshrl.u32 %v411, 16
      %v488 = vrot.slane %v486, 4
      %v489 = vshll.u32 %v411, 16
      %v491 = vrot.slane %v489, 5
      %v492 = vor.u32 %v488, %v491
      %v493 = vrot.slane %v492, 4
      %v495 = vshll.u32 %v427, 16
      %v497 = vrot.slane %v495, 5
      %v498 = vsel %vm442, %v493, %v497
      %v500 = vshrl.u32 %v412, 16
      %v502 = vrot.slane %v500, 4
      %v503 = vshll.u32 %v412, 16
      %v505 = vrot.slane %v503, 5
      %v506 = vor.u32 %v502, %v505
      %v507 = vrot.slane %v506, 4
      %v509 = vshll.u32 %v428, 16
      %v511 = vrot.slane %v509, 5
      %v512 = vsel %vm442, %v507, %v511
      %v514 = vshrl.u32 %v413, 16
      %v516 = vrot.slane %v514, 4
      %v517 = vshll.u32 %v413, 16
      %v519 = vrot.slane %v517, 5
      %v520 = vor.u32 %v516, %v519
      %v521 = vrot.slane %v520, 4
      %v523 = vshll.u32 %v429, 16
      %v525 = vrot.slane %v523, 5
      %v526 = vsel %vm442, %v521, %v525
      %v528 = vshrl.u32 %v414, 16
      %v530 = vrot.slane %v528, 4
      %v531 = vshll.u32 %v414, 16
      %v533 = vrot.slane %v531, 5
      %v534 = vor.u32 %v530, %v533
      %v535 = vrot.slane %v534, 4
      %v537 = vshll.u32 %v430, 16
      %v539 = vrot.slane %v537, 5
      %v540 = vsel %vm442, %v535, %v539
      %v542 = vshrl.u32 %v415, 16
      %v544 = vrot.slane %v542, 4
      %v545 = vshll.u32 %v415, 16
      %v547 = vrot.slane %v545, 5
      %v548 = vor.u32 %v544, %v547
      %v549 = vrot.slane %v548, 4
      %v551 = vshll.u32 %v431, 16
      %v553 = vrot.slane %v551, 5
      %v554 = vsel %vm442, %v549, %v553
      %v556 = vshrl.u32 %v416, 16
      %v558 = vrot.slane %v556, 4
      %v559 = vshll.u32 %v416, 16
      %v561 = vrot.slane %v559, 5
      %v562 = vor.u32 %v558, %v561
      %v563 = vrot.slane %v562, 4
      %v565 = vshll.u32 %v432, 16
      %v567 = vrot.slane %v565, 5
      %v568 = vsel %vm442, %v563, %v567
      %v570 = vshrl.u32 %v417, 16
      %v572 = vrot.slane %v570, 4
      %v573 = vshll.u32 %v417, 16
      %v575 = vrot.slane %v573, 5
      %v576 = vor.u32 %v572, %v575
      %v577 = vrot.slane %v576, 4
      %v579 = vshll.u32 %v433, 16
      %v581 = vrot.slane %v579, 5
      %v582 = vsel %vm442, %v577, %v581
      %v584 = vshrl.u32 %v418, 16
      %v586 = vrot.slane %v584, 4
      %v587 = vshll.u32 %v418, 16
      %v589 = vrot.slane %v587, 5
      %v590 = vor.u32 %v586, %v589
      %v591 = vrot.slane %v590, 4
      %v593 = vshll.u32 %v434, 16
      %v595 = vrot.slane %v593, 5
      %v596 = vsel %vm442, %v591, %v595
      %v598 = vshrl.u32 %v419, 16
      %v600 = vrot.slane %v598, 4
      %v601 = vshll.u32 %v419, 16
      %v603 = vrot.slane %v601, 5
      %v604 = vor.u32 %v600, %v603
      %v605 = vrot.slane %v604, 4
      %v607 = vshll.u32 %v435, 16
      %v609 = vrot.slane %v607, 5
      %v610 = vsel %vm442, %v605, %v609
      %v612 = vshrl.u32 %v420, 16
      %v614 = vrot.slane %v612, 4
      %v615 = vshll.u32 %v420, 16
      %v617 = vrot.slane %v615, 5
      %v618 = vor.u32 %v614, %v617
      %v619 = vrot.slane %v618, 4
      %v621 = vshll.u32 %v436, 16
      %v623 = vrot.slane %v621, 5
      %v624 = vsel %vm442, %v619, %v623
      %v626 = vshrl.u32 %v421, 16
      %v628 = vrot.slane %v626, 4
      %v629 = vshll.u32 %v421, 16
      %v631 = vrot.slane %v629, 5
      %v632 = vor.u32 %v628, %v631
      %v633 = vrot.slane %v632, 4
      %v635 = vshll.u32 %v437, 16
      %v637 = vrot.slane %v635, 5
      %v638 = vsel %vm442, %v633, %v637
      %v640 = vshrl.u32 %v422, 16
      %v642 = vrot.slane %v640, 4
      %v643 = vshll.u32 %v422, 16
      %v645 = vrot.slane %v643, 5
      %v646 = vor.u32 %v642, %v645
      %v647 = vrot.slane %v646, 4
      %v649 = vshll.u32 %v438, 16
      %v651 = vrot.slane %v649, 5
      %v652 = vsel %vm442, %v647, %v651
      %v654 = vshrl.u32 %v423, 16
      %v656 = vrot.slane %v654, 4
      %v657 = vshll.u32 %v423, 16
      %v659 = vrot.slane %v657, 5
      %v660 = vor.u32 %v656, %v659
      %v661 = vrot.slane %v660, 4
      %v663 = vshll.u32 %v439, 16
      %v665 = vrot.slane %v663, 5
      %v666 = vsel %vm442, %v661, %v665
      %v667 = vld [vmem:[%s373] sm:$0xe]
      %v668 = vld [vmem:[%s373 + $0x8] sm:$0xe]
      %v669 = vld [vmem:[%s373 + $0x10] sm:$0xe]
      %v670 = vld [vmem:[%s373 + $0x18] sm:$0xe]
      %v671 = vld [vmem:[%s373 + $0x20] sm:$0xe]
      %v672 = vld [vmem:[%s373 + $0x28] sm:$0xe]
      %v673 = vld [vmem:[%s373 + $0x30] sm:$0xe]
      %v674 = vld [vmem:[%s373 + $0x38] sm:$0xe]
      %v675 = vld [vmem:[%s373 + $0x50] sm:$0xe]
      %v676 = vld [vmem:[%s373 + $0x58] sm:$0xe]
      %v677 = vld [vmem:[%s373 + $0x60] sm:$0xe]
      %v678 = vld [vmem:[%s373 + $0x68] sm:$0xe]
      %v679 = vld [vmem:[%s373 + $0x70] sm:$0xe]
      %v680 = vld [vmem:[%s373 + $0x78] sm:$0xe]
      %v681 = vld [vmem:[%s373 + $0x80] sm:$0xe]
      %v682 = vld [vmem:[%s373 + $0x88] sm:$0xe]
      %vm715 = vcmask 1042432
      %vm716 = vcmask 1046532
      %vm717 = vmor %vm715, %vm716
      %v718 = vrot.slane %v667, 5
      %v719 = vrot.slane %v718, 4
      %v720 = vrot.slane %v424, 5
      %v721 = vsel %vm717, %v719, %v720
      %v722 = vrot.slane %v668, 5
      %v723 = vrot.slane %v722, 4
      %v724 = vrot.slane %v425, 5
      %v725 = vsel %vm717, %v723, %v724
      %v726 = vrot.slane %v669, 5
      %v727 = vrot.slane %v726, 4
      %v728 = vrot.slane %v426, 5
      %v729 = vsel %vm717, %v727, %v728
      %v730 = vrot.slane %v670, 5
      %v731 = vrot.slane %v730, 4
      %v732 = vrot.slane %v427, 5
      %v733 = vsel %vm717, %v731, %v732
      %v734 = vrot.slane %v671, 5
      %v735 = vrot.slane %v734, 4
      %v736 = vrot.slane %v428, 5
      %v737 = vsel %vm717, %v735, %v736
      %v738 = vrot.slane %v672, 5
      %v739 = vrot.slane %v738, 4
      %v740 = vrot.slane %v429, 5
      %v741 = vsel %vm717, %v739, %v740
      %v742 = vrot.slane %v673, 5
      %v743 = vrot.slane %v742, 4
      %v744 = vrot.slane %v430, 5
      %v745 = vsel %vm717, %v743, %v744
      %v746 = vrot.slane %v674, 5
      %v747 = vrot.slane %v746, 4
      %v748 = vrot.slane %v431, 5
      %v749 = vsel %vm717, %v747, %v748
      %v750 = vrot.slane %v675, 5
      %v751 = vrot.slane %v750, 4
      %v752 = vrot.slane %v432, 5
      %v753 = vsel %vm717, %v751, %v752
      %v754 = vrot.slane %v676, 5
      %v755 = vrot.slane %v754, 4
      %v756 = vrot.slane %v433, 5
      %v757 = vsel %vm717, %v755, %v756
      %v758 = vrot.slane %v677, 5
      %v759 = vrot.slane %v758, 4
      %v760 = vrot.slane %v434, 5
      %v761 = vsel %vm717, %v759, %v760
      %v762 = vrot.slane %v678, 5
      %v763 = vrot.slane %v762, 4
      %v764 = vrot.slane %v435, 5
      %v765 = vsel %vm717, %v763, %v764
      %v766 = vrot.slane %v679, 5
      %v767 = vrot.slane %v766, 4
      %v768 = vrot.slane %v436, 5
      %v769 = vsel %vm717, %v767, %v768
      %v770 = vrot.slane %v680, 5
      %v771 = vrot.slane %v770, 4
      %v772 = vrot.slane %v437, 5
      %v773 = vsel %vm717, %v771, %v772
      %v774 = vrot.slane %v681, 5
      %v775 = vrot.slane %v774, 4
      %v776 = vrot.slane %v438, 5
      %v777 = vsel %vm717, %v775, %v776
      %v778 = vrot.slane %v682, 5
      %v779 = vrot.slane %v778, 4
      %v780 = vrot.slane %v439, 5
      %v781 = vsel %vm717, %v779, %v780
      %s782 = scalar_lea.vmem %s373, 8
      %v783 = vld [vmem:[%s782] sm:$0xf]
      %v784 = vld [vmem:[%s782 + $0x8] sm:$0xf]
      %v785 = vld [vmem:[%s782 + $0x10] sm:$0xf]
      %v786 = vld [vmem:[%s782 + $0x18] sm:$0xf]
      %v787 = vld [vmem:[%s782 + $0x20] sm:$0xf]
      %v788 = vld [vmem:[%s782 + $0x28] sm:$0xf]
      %v789 = vld [vmem:[%s782 + $0x30] sm:$0xf]
      %v790 = vld [vmem:[%s782 + $0x38] sm:$0xf]
      %v791 = vld [vmem:[%s782 + $0x50] sm:$0xf]
      %v792 = vld [vmem:[%s782 + $0x58] sm:$0xf]
      %v793 = vld [vmem:[%s782 + $0x60] sm:$0xf]
      %v794 = vld [vmem:[%s782 + $0x68] sm:$0xf]
      %v795 = vld [vmem:[%s782 + $0x70] sm:$0xf]
      %v796 = vld [vmem:[%s782 + $0x78] sm:$0xf]
      %v797 = vld [vmem:[%s782 + $0x80] sm:$0xf]
      %v798 = vld [vmem:[%s782 + $0x88] sm:$0xf]
      %v799 = vld [vmem:[%s782 + $0x4] sm:$0x1]
      %v800 = vld [vmem:[%s782 + $0xc] sm:$0x1]
      %v801 = vld [vmem:[%s782 + $0x14] sm:$0x1]
      %v802 = vld [vmem:[%s782 + $0x1c] sm:$0x1]
      %v803 = vld [vmem:[%s782 + $0x24] sm:$0x1]
      %v804 = vld [vmem:[%s782 + $0x2c] sm:$0x1]
      %v805 = vld [vmem:[%s782 + $0x34] sm:$0x1]
      %v806 = vld [vmem:[%s782 + $0x3c] sm:$0x1]
      %v807 = vld [vmem:[%s782 + $0x54] sm:$0x1]
      %v808 = vld [vmem:[%s782 + $0x5c] sm:$0x1]
      %v809 = vld [vmem:[%s782 + $0x64] sm:$0x1]
      %v810 = vld [vmem:[%s782 + $0x6c] sm:$0x1]
      %v811 = vld [vmem:[%s782 + $0x74] sm:$0x1]
      %v812 = vld [vmem:[%s782 + $0x7c] sm:$0x1]
      %v813 = vld [vmem:[%s782 + $0x84] sm:$0x1]
      %v814 = vld [vmem:[%s782 + $0x8c] sm:$0x1]
      %v816 = vshrl.u32 %v783, 16
      %v818 = vrot.slane %v816, 4
      %v819 = vshll.u32 %v783, 16
      %v821 = vrot.slane %v819, 5
      %v822 = vor.u32 %v818, %v821
      %v823 = vrot.slane %v822, 4
      %v825 = vshll.u32 %v799, 16
      %v827 = vrot.slane %v825, 5
      %v828 = vsel %vm442, %v823, %v827
      %v830 = vshrl.u32 %v784, 16
      %v832 = vrot.slane %v830, 4
      %v833 = vshll.u32 %v784, 16
      %v835 = vrot.slane %v833, 5
      %v836 = vor.u32 %v832, %v835
      %v837 = vrot.slane %v836, 4
      %v839 = vshll.u32 %v800, 16
      %v841 = vrot.slane %v839, 5
      %v842 = vsel %vm442, %v837, %v841
      %v844 = vshrl.u32 %v785, 16
      %v846 = vrot.slane %v844, 4
      %v847 = vshll.u32 %v785, 16
      %v849 = vrot.slane %v847, 5
      %v850 = vor.u32 %v846, %v849
      %v851 = vrot.slane %v850, 4
      %v853 = vshll.u32 %v801, 16
      %v855 = vrot.slane %v853, 5
      %v856 = vsel %vm442, %v851, %v855
      %v858 = vshrl.u32 %v786, 16
      %v860 = vrot.slane %v858, 4
      %v861 = vshll.u32 %v786, 16
      %v863 = vrot.slane %v861, 5
      %v864 = vor.u32 %v860, %v863
      %v865 = vrot.slane %v864, 4
      %v867 = vshll.u32 %v802, 16
      %v869 = vrot.slane %v867, 5
      %v870 = vsel %vm442, %v865, %v869
      %v872 = vshrl.u32 %v787, 16
      %v874 = vrot.slane %v872, 4
      %v875 = vshll.u32 %v787, 16
      %v877 = vrot.slane %v875, 5
      %v878 = vor.u32 %v874, %v877
      %v879 = vrot.slane %v878, 4
      %v881 = vshll.u32 %v803, 16
      %v883 = vrot.slane %v881, 5
      %v884 = vsel %vm442, %v879, %v883
      %v886 = vshrl.u32 %v788, 16
      %v888 = vrot.slane %v886, 4
      %v889 = vshll.u32 %v788, 16
      %v891 = vrot.slane %v889, 5
      %v892 = vor.u32 %v888, %v891
      %v893 = vrot.slane %v892, 4
      %v895 = vshll.u32 %v804, 16
      %v897 = vrot.slane %v895, 5
      %v898 = vsel %vm442, %v893, %v897
      %v900 = vshrl.u32 %v789, 16
      %v902 = vrot.slane %v900, 4
      %v903 = vshll.u32 %v789, 16
      %v905 = vrot.slane %v903, 5
      %v906 = vor.u32 %v902, %v905
      %v907 = vrot.slane %v906, 4
      %v909 = vshll.u32 %v805, 16
      %v911 = vrot.slane %v909, 5
      %v912 = vsel %vm442, %v907, %v911
      %v914 = vshrl.u32 %v790, 16
      %v916 = vrot.slane %v914, 4
      %v917 = vshll.u32 %v790, 16
      %v919 = vrot.slane %v917, 5
      %v920 = vor.u32 %v916, %v919
      %v921 = vrot.slane %v920, 4
      %v923 = vshll.u32 %v806, 16
      %v925 = vrot.slane %v923, 5
      %v926 = vsel %vm442, %v921, %v925
      %v928 = vshrl.u32 %v791, 16
      %v930 = vrot.slane %v928, 4
      %v931 = vshll.u32 %v791, 16
      %v933 = vrot.slane %v931, 5
      %v934 = vor.u32 %v930, %v933
      %v935 = vrot.slane %v934, 4
      %v937 = vshll.u32 %v807, 16
      %v939 = vrot.slane %v937, 5
      %v940 = vsel %vm442, %v935, %v939
      %v942 = vshrl.u32 %v792, 16
      %v944 = vrot.slane %v942, 4
      %v945 = vshll.u32 %v792, 16
      %v947 = vrot.slane %v945, 5
      %v948 = vor.u32 %v944, %v947
      %v949 = vrot.slane %v948, 4
      %v951 = vshll.u32 %v808, 16
      %v953 = vrot.slane %v951, 5
      %v954 = vsel %vm442, %v949, %v953
      %v956 = vshrl.u32 %v793, 16
      %v958 = vrot.slane %v956, 4
      %v959 = vshll.u32 %v793, 16
      %v961 = vrot.slane %v959, 5
      %v962 = vor.u32 %v958, %v961
      %v963 = vrot.slane %v962, 4
      %v965 = vshll.u32 %v809, 16
      %v967 = vrot.slane %v965, 5
      %v968 = vsel %vm442, %v963, %v967
      %v970 = vshrl.u32 %v794, 16
      %v972 = vrot.slane %v970, 4
      %v973 = vshll.u32 %v794, 16
      %v975 = vrot.slane %v973, 5
      %v976 = vor.u32 %v972, %v975
      %v977 = vrot.slane %v976, 4
      %v979 = vshll.u32 %v810, 16
      %v981 = vrot.slane %v979, 5
      %v982 = vsel %vm442, %v977, %v981
      %v984 = vshrl.u32 %v795, 16
      %v986 = vrot.slane %v984, 4
      %v987 = vshll.u32 %v795, 16
      %v989 = vrot.slane %v987, 5
      %v990 = vor.u32 %v986, %v989
      %v991 = vrot.slane %v990, 4
      %v993 = vshll.u32 %v811, 16
      %v995 = vrot.slane %v993, 5
      %v996 = vsel %vm442, %v991, %v995
      %v998 = vshrl.u32 %v796, 16
      %v1000 = vrot.slane %v998, 4
      %v1001 = vshll.u32 %v796, 16
      %v1003 = vrot.slane %v1001, 5
      %v1004 = vor.u32 %v1000, %v1003
      %v1005 = vrot.slane %v1004, 4
      %v1007 = vshll.u32 %v812, 16
      %v1009 = vrot.slane %v1007, 5
      %v1010 = vsel %vm442, %v1005, %v1009
      %v1012 = vshrl.u32 %v797, 16
      %v1014 = vrot.slane %v1012, 4
      %v1015 = vshll.u32 %v797, 16
      %v1017 = vrot.slane %v1015, 5
      %v1018 = vor.u32 %v1014, %v1017
      %v1019 = vrot.slane %v1018, 4
      %v1021 = vshll.u32 %v813, 16
      %v1023 = vrot.slane %v1021, 5
      %v1024 = vsel %vm442, %v1019, %v1023
      %v1026 = vshrl.u32 %v798, 16
      %v1028 = vrot.slane %v1026, 4
      %v1029 = vshll.u32 %v798, 16
      %v1031 = vrot.slane %v1029, 5
      %v1032 = vor.u32 %v1028, %v1031
      %v1033 = vrot.slane %v1032, 4
      %v1035 = vshll.u32 %v814, 16
      %v1037 = vrot.slane %v1035, 5
      %v1038 = vsel %vm442, %v1033, %v1037
      %v1039 = vld [vmem:[%s782] sm:$0xe]
      %v1040 = vld [vmem:[%s782 + $0x8] sm:$0xe]
      %v1041 = vld [vmem:[%s782 + $0x10] sm:$0xe]
      %v1042 = vld [vmem:[%s782 + $0x18] sm:$0xe]
      %v1043 = vld [vmem:[%s782 + $0x20] sm:$0xe]
      %v1044 = vld [vmem:[%s782 + $0x28] sm:$0xe]
      %v1045 = vld [vmem:[%s782 + $0x30] sm:$0xe]
      %v1046 = vld [vmem:[%s782 + $0x38] sm:$0xe]
      %v1047 = vld [vmem:[%s782 + $0x50] sm:$0xe]
      %v1048 = vld [vmem:[%s782 + $0x58] sm:$0xe]
      %v1049 = vld [vmem:[%s782 + $0x60] sm:$0xe]
      %v1050 = vld [vmem:[%s782 + $0x68] sm:$0xe]
      %v1051 = vld [vmem:[%s782 + $0x70] sm:$0xe]
      %v1052 = vld [vmem:[%s782 + $0x78] sm:$0xe]
      %v1053 = vld [vmem:[%s782 + $0x80] sm:$0xe]
      %v1054 = vld [vmem:[%s782 + $0x88] sm:$0xe]
      %v1087 = vrot.slane %v1039, 5
      %v1088 = vrot.slane %v1087, 4
      %v1089 = vrot.slane %v799, 5
      %v1090 = vsel %vm717, %v1088, %v1089
      %v1091 = vrot.slane %v1040, 5
      %v1092 = vrot.slane %v1091, 4
      %v1093 = vrot.slane %v800, 5
      %v1094 = vsel %vm717, %v1092, %v1093
      %v1095 = vrot.slane %v1041, 5
      %v1096 = vrot.slane %v1095, 4
      %v1097 = vrot.slane %v801, 5
      %v1098 = vsel %vm717, %v1096, %v1097
      %v1099 = vrot.slane %v1042, 5
      %v1100 = vrot.slane %v1099, 4
      %v1101 = vrot.slane %v802, 5
      %v1102 = vsel %vm717, %v1100, %v1101
      %v1103 = vrot.slane %v1043, 5
      %v1104 = vrot.slane %v1103, 4
      %v1105 = vrot.slane %v803, 5
      %v1106 = vsel %vm717, %v1104, %v1105
      %v1107 = vrot.slane %v1044, 5
      %v1108 = vrot.slane %v1107, 4
      %v1109 = vrot.slane %v804, 5
      %v1110 = vsel %vm717, %v1108, %v1109
      %v1111 = vrot.slane %v1045, 5
      %v1112 = vrot.slane %v1111, 4
      %v1113 = vrot.slane %v805, 5
      %v1114 = vsel %vm717, %v1112, %v1113
      %v1115 = vrot.slane %v1046, 5
      %v1116 = vrot.slane %v1115, 4
      %v1117 = vrot.slane %v806, 5
      %v1118 = vsel %vm717, %v1116, %v1117
      %v1119 = vrot.slane %v1047, 5
      %v1120 = vrot.slane %v1119, 4
      %v1121 = vrot.slane %v807, 5
      %v1122 = vsel %vm717, %v1120, %v1121
      %v1123 = vrot.slane %v1048, 5
      %v1124 = vrot.slane %v1123, 4
      %v1125 = vrot.slane %v808, 5
      %v1126 = vsel %vm717, %v1124, %v1125
      %v1127 = vrot.slane %v1049, 5
      %v1128 = vrot.slane %v1127, 4
      %v1129 = vrot.slane %v809, 5
      %v1130 = vsel %vm717, %v1128, %v1129
      %v1131 = vrot.slane %v1050, 5
      %v1132 = vrot.slane %v1131, 4
      %v1133 = vrot.slane %v810, 5
      %v1134 = vsel %vm717, %v1132, %v1133
      %v1135 = vrot.slane %v1051, 5
      %v1136 = vrot.slane %v1135, 4
      %v1137 = vrot.slane %v811, 5
      %v1138 = vsel %vm717, %v1136, %v1137
      %v1139 = vrot.slane %v1052, 5
      %v1140 = vrot.slane %v1139, 4
      %v1141 = vrot.slane %v812, 5
      %v1142 = vsel %vm717, %v1140, %v1141
      %v1143 = vrot.slane %v1053, 5
      %v1144 = vrot.slane %v1143, 4
      %v1145 = vrot.slane %v813, 5
      %v1146 = vsel %vm717, %v1144, %v1145
      %v1147 = vrot.slane %v1054, 5
      %v1148 = vrot.slane %v1147, 4
      %v1149 = vrot.slane %v814, 5
      %v1150 = vsel %vm717, %v1148, %v1149
      %s1151 = scalar_lea.vmem %s373, 16
      %v1152 = vld [vmem:[%s1151] sm:$0xf]
      %v1153 = vld [vmem:[%s1151 + $0x8] sm:$0xf]
      %v1154 = vld [vmem:[%s1151 + $0x10] sm:$0xf]
      %v1155 = vld [vmem:[%s1151 + $0x18] sm:$0xf]
      %v1156 = vld [vmem:[%s1151 + $0x20] sm:$0xf]
      %v1157 = vld [vmem:[%s1151 + $0x28] sm:$0xf]
      %v1158 = vld [vmem:[%s1151 + $0x30] sm:$0xf]
      %v1159 = vld [vmem:[%s1151 + $0x38] sm:$0xf]
      %v1160 = vld [vmem:[%s1151 + $0x50] sm:$0xf]
      %v1161 = vld [vmem:[%s1151 + $0x58] sm:$0xf]
      %v1162 = vld [vmem:[%s1151 + $0x60] sm:$0xf]
      %v1163 = vld [vmem:[%s1151 + $0x68] sm:$0xf]
      %v1164 = vld [vmem:[%s1151 + $0x70] sm:$0xf]
      %v1165 = vld [vmem:[%s1151 + $0x78] sm:$0xf]
      %v1166 = vld [vmem:[%s1151 + $0x80] sm:$0xf]
      %v1167 = vld [vmem:[%s1151 + $0x88] sm:$0xf]
      %v1168 = vld [vmem:[%s1151 + $0x4] sm:$0x1]
      %v1169 = vld [vmem:[%s1151 + $0xc] sm:$0x1]
      %v1170 = vld [vmem:[%s1151 + $0x14] sm:$0x1]
      %v1171 = vld [vmem:[%s1151 + $0x1c] sm:$0x1]
      %v1172 = vld [vmem:[%s1151 + $0x24] sm:$0x1]
      %v1173 = vld [vmem:[%s1151 + $0x2c] sm:$0x1]
      %v1174 = vld [vmem:[%s1151 + $0x34] sm:$0x1]
      %v1175 = vld [vmem:[%s1151 + $0x3c] sm:$0x1]
      %v1176 = vld [vmem:[%s1151 + $0x54] sm:$0x1]
      %v1177 = vld [vmem:[%s1151 + $0x5c] sm:$0x1]
      %v1178 = vld [vmem:[%s1151 + $0x64] sm:$0x1]
      %v1179 = vld [vmem:[%s1151 + $0x6c] sm:$0x1]
      %v1180 = vld [vmem:[%s1151 + $0x74] sm:$0x1]
      %v1181 = vld [vmem:[%s1151 + $0x7c] sm:$0x1]
      %v1182 = vld [vmem:[%s1151 + $0x84] sm:$0x1]
      %v1183 = vld [vmem:[%s1151 + $0x8c] sm:$0x1]
      %v1185 = vshrl.u32 %v1152, 16
      %v1187 = vrot.slane %v1185, 4
      %v1188 = vshll.u32 %v1152, 16
      %v1190 = vrot.slane %v1188, 5
      %v1191 = vor.u32 %v1187, %v1190
      %v1192 = vrot.slane %v1191, 4
      %v1194 = vshll.u32 %v1168, 16
      %v1196 = vrot.slane %v1194, 5
      %v1197 = vsel %vm442, %v1192, %v1196
      %v1199 = vshrl.u32 %v1153, 16
      %v1201 = vrot.slane %v1199, 4
      %v1202 = vshll.u32 %v1153, 16
      %v1204 = vrot.slane %v1202, 5
      %v1205 = vor.u32 %v1201, %v1204
      %v1206 = vrot.slane %v1205, 4
      %v1208 = vshll.u32 %v1169, 16
      %v1210 = vrot.slane %v1208, 5
      %v1211 = vsel %vm442, %v1206, %v1210
      %v1213 = vshrl.u32 %v1154, 16
      %v1215 = vrot.slane %v1213, 4
      %v1216 = vshll.u32 %v1154, 16
      %v1218 = vrot.slane %v1216, 5
      %v1219 = vor.u32 %v1215, %v1218
      %v1220 = vrot.slane %v1219, 4
      %v1222 = vshll.u32 %v1170, 16
      %v1224 = vrot.slane %v1222, 5
      %v1225 = vsel %vm442, %v1220, %v1224
      %v1227 = vshrl.u32 %v1155, 16
      %v1229 = vrot.slane %v1227, 4
      %v1230 = vshll.u32 %v1155, 16
      %v1232 = vrot.slane %v1230, 5
      %v1233 = vor.u32 %v1229, %v1232
      %v1234 = vrot.slane %v1233, 4
      %v1236 = vshll.u32 %v1171, 16
      %v1238 = vrot.slane %v1236, 5
      %v1239 = vsel %vm442, %v1234, %v1238
      %v1241 = vshrl.u32 %v1156, 16
      %v1243 = vrot.slane %v1241, 4
      %v1244 = vshll.u32 %v1156, 16
      %v1246 = vrot.slane %v1244, 5
      %v1247 = vor.u32 %v1243, %v1246
      %v1248 = vrot.slane %v1247, 4
      %v1250 = vshll.u32 %v1172, 16
      %v1252 = vrot.slane %v1250, 5
      %v1253 = vsel %vm442, %v1248, %v1252
      %v1255 = vshrl.u32 %v1157, 16
      %v1257 = vrot.slane %v1255, 4
      %v1258 = vshll.u32 %v1157, 16
      %v1260 = vrot.slane %v1258, 5
      %v1261 = vor.u32 %v1257, %v1260
      %v1262 = vrot.slane %v1261, 4
      %v1264 = vshll.u32 %v1173, 16
      %v1266 = vrot.slane %v1264, 5
      %v1267 = vsel %vm442, %v1262, %v1266
      %v1269 = vshrl.u32 %v1158, 16
      %v1271 = vrot.slane %v1269, 4
      %v1272 = vshll.u32 %v1158, 16
      %v1274 = vrot.slane %v1272, 5
      %v1275 = vor.u32 %v1271, %v1274
      %v1276 = vrot.slane %v1275, 4
      %v1278 = vshll.u32 %v1174, 16
      %v1280 = vrot.slane %v1278, 5
      %v1281 = vsel %vm442, %v1276, %v1280
      %v1283 = vshrl.u32 %v1159, 16
      %v1285 = vrot.slane %v1283, 4
      %v1286 = vshll.u32 %v1159, 16
      %v1288 = vrot.slane %v1286, 5
      %v1289 = vor.u32 %v1285, %v1288
      %v1290 = vrot.slane %v1289, 4
      %v1292 = vshll.u32 %v1175, 16
      %v1294 = vrot.slane %v1292, 5
      %v1295 = vsel %vm442, %v1290, %v1294
      %v1297 = vshrl.u32 %v1160, 16
      %v1299 = vrot.slane %v1297, 4
      %v1300 = vshll.u32 %v1160, 16
      %v1302 = vrot.slane %v1300, 5
      %v1303 = vor.u32 %v1299, %v1302
      %v1304 = vrot.slane %v1303, 4
      %v1306 = vshll.u32 %v1176, 16
      %v1308 = vrot.slane %v1306, 5
      %v1309 = vsel %vm442, %v1304, %v1308
      %v1311 = vshrl.u32 %v1161, 16
      %v1313 = vrot.slane %v1311, 4
      %v1314 = vshll.u32 %v1161, 16
      %v1316 = vrot.slane %v1314, 5
      %v1317 = vor.u32 %v1313, %v1316
      %v1318 = vrot.slane %v1317, 4
      %v1320 = vshll.u32 %v1177, 16
      %v1322 = vrot.slane %v1320, 5
      %v1323 = vsel %vm442, %v1318, %v1322
      %v1325 = vshrl.u32 %v1162, 16
      %v1327 = vrot.slane %v1325, 4
      %v1328 = vshll.u32 %v1162, 16
      %v1330 = vrot.slane %v1328, 5
      %v1331 = vor.u32 %v1327, %v1330
      %v1332 = vrot.slane %v1331, 4
      %v1334 = vshll.u32 %v1178, 16
      %v1336 = vrot.slane %v1334, 5
      %v1337 = vsel %vm442, %v1332, %v1336
      %v1339 = vshrl.u32 %v1163, 16
      %v1341 = vrot.slane %v1339, 4
      %v1342 = vshll.u32 %v1163, 16
      %v1344 = vrot.slane %v1342, 5
      %v1345 = vor.u32 %v1341, %v1344
      %v1346 = vrot.slane %v1345, 4
      %v1348 = vshll.u32 %v1179, 16
      %v1350 = vrot.slane %v1348, 5
      %v1351 = vsel %vm442, %v1346, %v1350
      %v1353 = vshrl.u32 %v1164, 16
      %v1355 = vrot.slane %v1353, 4
      %v1356 = vshll.u32 %v1164, 16
      %v1358 = vrot.slane %v1356, 5
      %v1359 = vor.u32 %v1355, %v1358
      %v1360 = vrot.slane %v1359, 4
      %v1362 = vshll.u32 %v1180, 16
      %v1364 = vrot.slane %v1362, 5
      %v1365 = vsel %vm442, %v1360, %v1364
      %v1367 = vshrl.u32 %v1165, 16
      %v1369 = vrot.slane %v1367, 4
      %v1370 = vshll.u32 %v1165, 16
      %v1372 = vrot.slane %v1370, 5
      %v1373 = vor.u32 %v1369, %v1372
      %v1374 = vrot.slane %v1373, 4
      %v1376 = vshll.u32 %v1181, 16
      %v1378 = vrot.slane %v1376, 5
      %v1379 = vsel %vm442, %v1374, %v1378
      %v1381 = vshrl.u32 %v1166, 16
      %v1383 = vrot.slane %v1381, 4
      %v1384 = vshll.u32 %v1166, 16
      %v1386 = vrot.slane %v1384, 5
      %v1387 = vor.u32 %v1383, %v1386
      %v1388 = vrot.slane %v1387, 4
      %v1390 = vshll.u32 %v1182, 16
      %v1392 = vrot.slane %v1390, 5
      %v1393 = vsel %vm442, %v1388, %v1392
      %v1395 = vshrl.u32 %v1167, 16
      %v1397 = vrot.slane %v1395, 4
      %v1398 = vshll.u32 %v1167, 16
      %v1400 = vrot.slane %v1398, 5
      %v1401 = vor.u32 %v1397, %v1400
      %v1402 = vrot.slane %v1401, 4
      %v1404 = vshll.u32 %v1183, 16
      %v1406 = vrot.slane %v1404, 5
      %v1407 = vsel %vm442, %v1402, %v1406
      %v1408 = vld [vmem:[%s1151] sm:$0xe]
      %v1409 = vld [vmem:[%s1151 + $0x8] sm:$0xe]
      %v1410 = vld [vmem:[%s1151 + $0x10] sm:$0xe]
      %v1411 = vld [vmem:[%s1151 + $0x18] sm:$0xe]
      %v1412 = vld [vmem:[%s1151 + $0x20] sm:$0xe]
      %v1413 = vld [vmem:[%s1151 + $0x28] sm:$0xe]
      %v1414 = vld [vmem:[%s1151 + $0x30] sm:$0xe]
      %v1415 = vld [vmem:[%s1151 + $0x38] sm:$0xe]
      %v1416 = vld [vmem:[%s1151 + $0x50] sm:$0xe]
      %v1417 = vld [vmem:[%s1151 + $0x58] sm:$0xe]
      %v1418 = vld [vmem:[%s1151 + $0x60] sm:$0xe]
      %v1419 = vld [vmem:[%s1151 + $0x68] sm:$0xe]
      %v1420 = vld [vmem:[%s1151 + $0x70] sm:$0xe]
      %v1421 = vld [vmem:[%s1151 + $0x78] sm:$0xe]
      %v1422 = vld [vmem:[%s1151 + $0x80] sm:$0xe]
      %v1423 = vld [vmem:[%s1151 + $0x88] sm:$0xe]
      %v1456 = vrot.slane %v1408, 5
      %v1457 = vrot.slane %v1456, 4
      %v1458 = vrot.slane %v1168, 5
      %v1459 = vsel %vm717, %v1457, %v1458
      %v1460 = vrot.slane %v1409, 5
      %v1461 = vrot.slane %v1460, 4
      %v1462 = vrot.slane %v1169, 5
      %v1463 = vsel %vm717, %v1461, %v1462
      %v1464 = vrot.slane %v1410, 5
      %v1465 = vrot.slane %v1464, 4
      %v1466 = vrot.slane %v1170, 5
      %v1467 = vsel %vm717, %v1465, %v1466
      %v1468 = vrot.slane %v1411, 5
      %v1469 = vrot.slane %v1468, 4
      %v1470 = vrot.slane %v1171, 5
      %v1471 = vsel %vm717, %v1469, %v1470
      %v1472 = vrot.slane %v1412, 5
      %v1473 = vrot.slane %v1472, 4
      %v1474 = vrot.slane %v1172, 5
      %v1475 = vsel %vm717, %v1473, %v1474
      %v1476 = vrot.slane %v1413, 5
      %v1477 = vrot.slane %v1476, 4
      %v1478 = vrot.slane %v1173, 5
      %v1479 = vsel %vm717, %v1477, %v1478
      %v1480 = vrot.slane %v1414, 5
      %v1481 = vrot.slane %v1480, 4
      %v1482 = vrot.slane %v1174, 5
      %v1483 = vsel %vm717, %v1481, %v1482
      %v1484 = vrot.slane %v1415, 5
      %v1485 = vrot.slane %v1484, 4
      %v1486 = vrot.slane %v1175, 5
      %v1487 = vsel %vm717, %v1485, %v1486
      %v1488 = vrot.slane %v1416, 5
      %v1489 = vrot.slane %v1488, 4
      %v1490 = vrot.slane %v1176, 5
      %v1491 = vsel %vm717, %v1489, %v1490
      %v1492 = vrot.slane %v1417, 5
      %v1493 = vrot.slane %v1492, 4
      %v1494 = vrot.slane %v1177, 5
      %v1495 = vsel %vm717, %v1493, %v1494
      %v1496 = vrot.slane %v1418, 5
      %v1497 = vrot.slane %v1496, 4
      %v1498 = vrot.slane %v1178, 5
      %v1499 = vsel %vm717, %v1497, %v1498
      %v1500 = vrot.slane %v1419, 5
      %v1501 = vrot.slane %v1500, 4
      %v1502 = vrot.slane %v1179, 5
      %v1503 = vsel %vm717, %v1501, %v1502
      %v1504 = vrot.slane %v1420, 5
      %v1505 = vrot.slane %v1504, 4
      %v1506 = vrot.slane %v1180, 5
      %v1507 = vsel %vm717, %v1505, %v1506
      %v1508 = vrot.slane %v1421, 5
      %v1509 = vrot.slane %v1508, 4
      %v1510 = vrot.slane %v1181, 5
      %v1511 = vsel %vm717, %v1509, %v1510
      %v1512 = vrot.slane %v1422, 5
      %v1513 = vrot.slane %v1512, 4
      %v1514 = vrot.slane %v1182, 5
      %v1515 = vsel %vm717, %v1513, %v1514
      %v1516 = vrot.slane %v1423, 5
      %v1517 = vrot.slane %v1516, 4
      %v1518 = vrot.slane %v1183, 5
      %v1519 = vsel %vm717, %v1517, %v1518
      %v1536 = vunpack.c.l.b16 %v408
      %v1537 = vunpack.c.l.b16 %v409
      %v1538 = vunpack.c.l.b16 %v410
      %v1539 = vunpack.c.l.b16 %v411
      %v1540 = vunpack.c.l.b16 %v412
      %v1541 = vunpack.c.l.b16 %v413
      %v1542 = vunpack.c.l.b16 %v414
      %v1543 = vunpack.c.l.b16 %v415
      %v1544 = vunpack.c.l.b16 %v416
      %v1545 = vunpack.c.l.b16 %v417
      %v1546 = vunpack.c.l.b16 %v418
      %v1547 = vunpack.c.l.b16 %v419
      %v1548 = vunpack.c.l.b16 %v420
      %v1549 = vunpack.c.l.b16 %v421
      %v1550 = vunpack.c.l.b16 %v422
      %v1551 = vunpack.c.l.b16 %v423
      %v1552 = vpack.c.b16 %v1537, %v1536
      %v1553 = vpack.c.b16 %v1539, %v1538
      %v1554 = vpack.c.b16 %v1541, %v1540
      %v1555 = vpack.c.b16 %v1543, %v1542
      %v1556 = vpack.c.b16 %v1545, %v1544
      %v1557 = vpack.c.b16 %v1547, %v1546
      %v1558 = vpack.c.b16 %v1549, %v1548
      %v1559 = vpack.c.b16 %v1551, %v1550
      %v1560 = vunpack.c.l.b16 %v456
      %v1561 = vunpack.c.l.b16 %v470
      %v1562 = vunpack.c.l.b16 %v484
      %v1563 = vunpack.c.l.b16 %v498
      %v1564 = vunpack.c.l.b16 %v512
      %v1565 = vunpack.c.l.b16 %v526
      %v1566 = vunpack.c.l.b16 %v540
      %v1567 = vunpack.c.l.b16 %v554
      %v1568 = vunpack.c.l.b16 %v568
      %v1569 = vunpack.c.l.b16 %v582
      %v1570 = vunpack.c.l.b16 %v596
      %v1571 = vunpack.c.l.b16 %v610
      %v1572 = vunpack.c.l.b16 %v624
      %v1573 = vunpack.c.l.b16 %v638
      %v1574 = vunpack.c.l.b16 %v652
      %v1575 = vunpack.c.l.b16 %v666
      %v1576 = vpack.c.b16 %v1561, %v1560
      %v1577 = vpack.c.b16 %v1563, %v1562
      %v1578 = vpack.c.b16 %v1565, %v1564
      %v1579 = vpack.c.b16 %v1567, %v1566
      %v1580 = vpack.c.b16 %v1569, %v1568
      %v1581 = vpack.c.b16 %v1571, %v1570
      %v1582 = vpack.c.b16 %v1573, %v1572
      %v1583 = vpack.c.b16 %v1575, %v1574
      %1584 = vrot.lane.b32.xlu0 %v1576, 8
      %v1585 = vpop.permute.xlu0 %1584
      %1586 = vrot.lane.b32.xlu0 %v1577, 8
      %v1587 = vpop.permute.xlu0 %1586
      %1588 = vrot.lane.b32.xlu0 %v1578, 8
      %v1589 = vpop.permute.xlu0 %1588
      %1590 = vrot.lane.b32.xlu0 %v1579, 8
      %v1591 = vpop.permute.xlu0 %1590
      %1592 = vrot.lane.b32.xlu0 %v1580, 8
      %v1593 = vpop.permute.xlu0 %1592
      %1594 = vrot.lane.b32.xlu0 %v1581, 8
      %v1595 = vpop.permute.xlu0 %1594
      %1596 = vrot.lane.b32.xlu0 %v1582, 8
      %v1597 = vpop.permute.xlu0 %1596
      %1598 = vrot.lane.b32.xlu0 %v1583, 8
      %v1599 = vpop.permute.xlu0 %1598
      %v1600 = vunpack.c.l.b16 %v721
      %v1601 = vunpack.c.l.b16 %v725
      %v1602 = vunpack.c.l.b16 %v729
      %v1603 = vunpack.c.l.b16 %v733
      %v1604 = vunpack.c.l.b16 %v737
      %v1605 = vunpack.c.l.b16 %v741
      %v1606 = vunpack.c.l.b16 %v745
      %v1607 = vunpack.c.l.b16 %v749
      %v1608 = vunpack.c.l.b16 %v753
      %v1609 = vunpack.c.l.b16 %v757
      %v1610 = vunpack.c.l.b16 %v761
      %v1611 = vunpack.c.l.b16 %v765
      %v1612 = vunpack.c.l.b16 %v769
      %v1613 = vunpack.c.l.b16 %v773
      %v1614 = vunpack.c.l.b16 %v777
      %v1615 = vunpack.c.l.b16 %v781
      %v1616 = vpack.c.b16 %v1601, %v1600
      %v1617 = vpack.c.b16 %v1603, %v1602
      %v1618 = vpack.c.b16 %v1605, %v1604
      %v1619 = vpack.c.b16 %v1607, %v1606
      %v1620 = vpack.c.b16 %v1609, %v1608
      %v1621 = vpack.c.b16 %v1611, %v1610
      %v1622 = vpack.c.b16 %v1613, %v1612
      %v1623 = vpack.c.b16 %v1615, %v1614
      %1624 = vrot.lane.b32.xlu0 %v1616, 16
      %v1625 = vpop.permute.xlu0 %1624
      %1626 = vrot.lane.b32.xlu0 %v1617, 16
      %v1627 = vpop.permute.xlu0 %1626
      %1628 = vrot.lane.b32.xlu0 %v1618, 16
      %v1629 = vpop.permute.xlu0 %1628
      %1630 = vrot.lane.b32.xlu0 %v1619, 16
      %v1631 = vpop.permute.xlu0 %1630
      %1632 = vrot.lane.b32.xlu0 %v1620, 16
      %v1633 = vpop.permute.xlu0 %1632
      %1634 = vrot.lane.b32.xlu0 %v1621, 16
      %v1635 = vpop.permute.xlu0 %1634
      %1636 = vrot.lane.b32.xlu0 %v1622, 16
      %v1637 = vpop.permute.xlu0 %1636
      %1638 = vrot.lane.b32.xlu0 %v1623, 16
      %v1639 = vpop.permute.xlu0 %1638
      %v1656 = vunpack.c.l.b16 %v783
      %v1657 = vunpack.c.l.b16 %v784
      %v1658 = vunpack.c.l.b16 %v785
      %v1659 = vunpack.c.l.b16 %v786
      %v1660 = vunpack.c.l.b16 %v787
      %v1661 = vunpack.c.l.b16 %v788
      %v1662 = vunpack.c.l.b16 %v789
      %v1663 = vunpack.c.l.b16 %v790
      %v1664 = vunpack.c.l.b16 %v791
      %v1665 = vunpack.c.l.b16 %v792
      %v1666 = vunpack.c.l.b16 %v793
      %v1667 = vunpack.c.l.b16 %v794
      %v1668 = vunpack.c.l.b16 %v795
      %v1669 = vunpack.c.l.b16 %v796
      %v1670 = vunpack.c.l.b16 %v797
      %v1671 = vunpack.c.l.b16 %v798
      %v1672 = vpack.c.b16 %v1657, %v1656
      %v1673 = vpack.c.b16 %v1659, %v1658
      %v1674 = vpack.c.b16 %v1661, %v1660
      %v1675 = vpack.c.b16 %v1663, %v1662
      %v1676 = vpack.c.b16 %v1665, %v1664
      %v1677 = vpack.c.b16 %v1667, %v1666
      %v1678 = vpack.c.b16 %v1669, %v1668
      %v1679 = vpack.c.b16 %v1671, %v1670
      %1680 = vrot.lane.b32.xlu0 %v1672, 24
      %v1681 = vpop.permute.xlu0 %1680
      %1682 = vrot.lane.b32.xlu0 %v1673, 24
      %v1683 = vpop.permute.xlu0 %1682
      %1684 = vrot.lane.b32.xlu0 %v1674, 24
      %v1685 = vpop.permute.xlu0 %1684
      %1686 = vrot.lane.b32.xlu0 %v1675, 24
      %v1687 = vpop.permute.xlu0 %1686
      %1688 = vrot.lane.b32.xlu0 %v1676, 24
      %v1689 = vpop.permute.xlu0 %1688
      %1690 = vrot.lane.b32.xlu0 %v1677, 24
      %v1691 = vpop.permute.xlu0 %1690
      %1692 = vrot.lane.b32.xlu0 %v1678, 24
      %v1693 = vpop.permute.xlu0 %1692
      %1694 = vrot.lane.b32.xlu0 %v1679, 24
      %v1695 = vpop.permute.xlu0 %1694
      %v1696 = vunpack.c.l.b16 %v828
      %v1697 = vunpack.c.l.b16 %v842
      %v1698 = vunpack.c.l.b16 %v856
      %v1699 = vunpack.c.l.b16 %v870
      %v1700 = vunpack.c.l.b16 %v884
      %v1701 = vunpack.c.l.b16 %v898
      %v1702 = vunpack.c.l.b16 %v912
      %v1703 = vunpack.c.l.b16 %v926
      %v1704 = vunpack.c.l.b16 %v940
      %v1705 = vunpack.c.l.b16 %v954
      %v1706 = vunpack.c.l.b16 %v968
      %v1707 = vunpack.c.l.b16 %v982
      %v1708 = vunpack.c.l.b16 %v996
      %v1709 = vunpack.c.l.b16 %v1010
      %v1710 = vunpack.c.l.b16 %v1024
      %v1711 = vunpack.c.l.b16 %v1038
      %v1712 = vpack.c.b16 %v1697, %v1696
      %v1713 = vpack.c.b16 %v1699, %v1698
      %v1714 = vpack.c.b16 %v1701, %v1700
      %v1715 = vpack.c.b16 %v1703, %v1702
      %v1716 = vpack.c.b16 %v1705, %v1704
      %v1717 = vpack.c.b16 %v1707, %v1706
      %v1718 = vpack.c.b16 %v1709, %v1708
      %v1719 = vpack.c.b16 %v1711, %v1710
      %1720 = vrot.lane.b32.xlu0 %v1712, 32
      %v1721 = vpop.permute.xlu0 %1720
      %1722 = vrot.lane.b32.xlu0 %v1713, 32
      %v1723 = vpop.permute.xlu0 %1722
      %1724 = vrot.lane.b32.xlu0 %v1714, 32
      %v1725 = vpop.permute.xlu0 %1724
      %1726 = vrot.lane.b32.xlu0 %v1715, 32
      %v1727 = vpop.permute.xlu0 %1726
      %1728 = vrot.lane.b32.xlu0 %v1716, 32
      %v1729 = vpop.permute.xlu0 %1728
      %1730 = vrot.lane.b32.xlu0 %v1717, 32
      %v1731 = vpop.permute.xlu0 %1730
      %1732 = vrot.lane.b32.xlu0 %v1718, 32
      %v1733 = vpop.permute.xlu0 %1732
      %1734 = vrot.lane.b32.xlu0 %v1719, 32
      %v1735 = vpop.permute.xlu0 %1734
      %v1736 = vunpack.c.l.b16 %v1090
      %v1737 = vunpack.c.l.b16 %v1094
      %v1738 = vunpack.c.l.b16 %v1098
      %v1739 = vunpack.c.l.b16 %v1102
      %v1740 = vunpack.c.l.b16 %v1106
      %v1741 = vunpack.c.l.b16 %v1110
      %v1742 = vunpack.c.l.b16 %v1114
      %v1743 = vunpack.c.l.b16 %v1118
      %v1744 = vunpack.c.l.b16 %v1122
      %v1745 = vunpack.c.l.b16 %v1126
      %v1746 = vunpack.c.l.b16 %v1130
      %v1747 = vunpack.c.l.b16 %v1134
      %v1748 = vunpack.c.l.b16 %v1138
      %v1749 = vunpack.c.l.b16 %v1142
      %v1750 = vunpack.c.l.b16 %v1146
      %v1751 = vunpack.c.l.b16 %v1150
      %v1752 = vpack.c.b16 %v1737, %v1736
      %v1753 = vpack.c.b16 %v1739, %v1738
      %v1754 = vpack.c.b16 %v1741, %v1740
      %v1755 = vpack.c.b16 %v1743, %v1742
      %v1756 = vpack.c.b16 %v1745, %v1744
      %v1757 = vpack.c.b16 %v1747, %v1746
      %v1758 = vpack.c.b16 %v1749, %v1748
      %v1759 = vpack.c.b16 %v1751, %v1750
      %1760 = vrot.lane.b32.xlu0 %v1752, 40
      %v1761 = vpop.permute.xlu0 %1760
      %1762 = vrot.lane.b32.xlu0 %v1753, 40
      %v1763 = vpop.permute.xlu0 %1762
      %1764 = vrot.lane.b32.xlu0 %v1754, 40
      %v1765 = vpop.permute.xlu0 %1764
      %1766 = vrot.lane.b32.xlu0 %v1755, 40
      %v1767 = vpop.permute.xlu0 %1766
      %1768 = vrot.lane.b32.xlu0 %v1756, 40
      %v1769 = vpop.permute.xlu0 %1768
      %1770 = vrot.lane.b32.xlu0 %v1757, 40
      %v1771 = vpop.permute.xlu0 %1770
      %1772 = vrot.lane.b32.xlu0 %v1758, 40
      %v1773 = vpop.permute.xlu0 %1772
      %1774 = vrot.lane.b32.xlu0 %v1759, 40
      %v1775 = vpop.permute.xlu0 %1774
      %v1792 = vunpack.c.l.b16 %v1152
      %v1793 = vunpack.c.l.b16 %v1153
      %v1794 = vunpack.c.l.b16 %v1154
      %v1795 = vunpack.c.l.b16 %v1155
      %v1796 = vunpack.c.l.b16 %v1156
      %v1797 = vunpack.c.l.b16 %v1157
      %v1798 = vunpack.c.l.b16 %v1158
      %v1799 = vunpack.c.l.b16 %v1159
      %v1800 = vunpack.c.l.b16 %v1160
      %v1801 = vunpack.c.l.b16 %v1161
      %v1802 = vunpack.c.l.b16 %v1162
      %v1803 = vunpack.c.l.b16 %v1163
      %v1804 = vunpack.c.l.b16 %v1164
      %v1805 = vunpack.c.l.b16 %v1165
      %v1806 = vunpack.c.l.b16 %v1166
      %v1807 = vunpack.c.l.b16 %v1167
      %v1808 = vpack.c.b16 %v1793, %v1792
      %v1809 = vpack.c.b16 %v1795, %v1794
      %v1810 = vpack.c.b16 %v1797, %v1796
      %v1811 = vpack.c.b16 %v1799, %v1798
      %v1812 = vpack.c.b16 %v1801, %v1800
      %v1813 = vpack.c.b16 %v1803, %v1802
      %v1814 = vpack.c.b16 %v1805, %v1804
      %v1815 = vpack.c.b16 %v1807, %v1806
      %1816 = vrot.lane.b32.xlu0 %v1808, 48
      %v1817 = vpop.permute.xlu0 %1816
      %1818 = vrot.lane.b32.xlu0 %v1809, 48
      %v1819 = vpop.permute.xlu0 %1818
      %1820 = vrot.lane.b32.xlu0 %v1810, 48
      %v1821 = vpop.permute.xlu0 %1820
      %1822 = vrot.lane.b32.xlu0 %v1811, 48
      %v1823 = vpop.permute.xlu0 %1822
      %1824 = vrot.lane.b32.xlu0 %v1812, 48
      %v1825 = vpop.permute.xlu0 %1824
      %1826 = vrot.lane.b32.xlu0 %v1813, 48
      %v1827 = vpop.permute.xlu0 %1826
      %1828 = vrot.lane.b32.xlu0 %v1814, 48
      %v1829 = vpop.permute.xlu0 %1828
      %1830 = vrot.lane.b32.xlu0 %v1815, 48
      %v1831 = vpop.permute.xlu0 %1830
      %v1832 = vunpack.c.l.b16 %v1197
      %v1833 = vunpack.c.l.b16 %v1211
      %v1834 = vunpack.c.l.b16 %v1225
      %v1835 = vunpack.c.l.b16 %v1239
      %v1836 = vunpack.c.l.b16 %v1253
      %v1837 = vunpack.c.l.b16 %v1267
      %v1838 = vunpack.c.l.b16 %v1281
      %v1839 = vunpack.c.l.b16 %v1295
      %v1840 = vunpack.c.l.b16 %v1309
      %v1841 = vunpack.c.l.b16 %v1323
      %v1842 = vunpack.c.l.b16 %v1337
      %v1843 = vunpack.c.l.b16 %v1351
      %v1844 = vunpack.c.l.b16 %v1365
      %v1845 = vunpack.c.l.b16 %v1379
      %v1846 = vunpack.c.l.b16 %v1393
      %v1847 = vunpack.c.l.b16 %v1407
      %v1848 = vpack.c.b16 %v1833, %v1832
      %v1849 = vpack.c.b16 %v1835, %v1834
      %v1850 = vpack.c.b16 %v1837, %v1836
      %v1851 = vpack.c.b16 %v1839, %v1838
      %v1852 = vpack.c.b16 %v1841, %v1840
      %v1853 = vpack.c.b16 %v1843, %v1842
      %v1854 = vpack.c.b16 %v1845, %v1844
      %v1855 = vpack.c.b16 %v1847, %v1846
      %1856 = vrot.lane.b32.xlu0 %v1848, 56
      %v1857 = vpop.permute.xlu0 %1856
      %1858 = vrot.lane.b32.xlu0 %v1849, 56
      %v1859 = vpop.permute.xlu0 %1858
      %1860 = vrot.lane.b32.xlu0 %v1850, 56
      %v1861 = vpop.permute.xlu0 %1860
      %1862 = vrot.lane.b32.xlu0 %v1851, 56
      %v1863 = vpop.permute.xlu0 %1862
      %1864 = vrot.lane.b32.xlu0 %v1852, 56
      %v1865 = vpop.permute.xlu0 %1864
      %1866 = vrot.lane.b32.xlu0 %v1853, 56
      %v1867 = vpop.permute.xlu0 %1866
      %1868 = vrot.lane.b32.xlu0 %v1854, 56
      %v1869 = vpop.permute.xlu0 %1868
      %1870 = vrot.lane.b32.xlu0 %v1855, 56
      %v1871 = vpop.permute.xlu0 %1870
      %v1872 = vunpack.c.l.b16 %v1459
      %v1873 = vunpack.c.l.b16 %v1463
      %v1874 = vunpack.c.l.b16 %v1467
      %v1875 = vunpack.c.l.b16 %v1471
      %v1876 = vunpack.c.l.b16 %v1475
      %v1877 = vunpack.c.l.b16 %v1479
      %v1878 = vunpack.c.l.b16 %v1483
      %v1879 = vunpack.c.l.b16 %v1487
      %v1880 = vunpack.c.l.b16 %v1491
      %v1881 = vunpack.c.l.b16 %v1495
      %v1882 = vunpack.c.l.b16 %v1499
      %v1883 = vunpack.c.l.b16 %v1503
      %v1884 = vunpack.c.l.b16 %v1507
      %v1885 = vunpack.c.l.b16 %v1511
      %v1886 = vunpack.c.l.b16 %v1515
      %v1887 = vunpack.c.l.b16 %v1519
      %v1888 = vpack.c.b16 %v1873, %v1872
      %v1889 = vpack.c.b16 %v1875, %v1874
      %v1890 = vpack.c.b16 %v1877, %v1876
      %v1891 = vpack.c.b16 %v1879, %v1878
      %v1892 = vpack.c.b16 %v1881, %v1880
      %v1893 = vpack.c.b16 %v1883, %v1882
      %v1894 = vpack.c.b16 %v1885, %v1884
      %v1895 = vpack.c.b16 %v1887, %v1886
      %1896 = vrot.lane.b32.xlu0 %v1888, 64
      %v1897 = vpop.permute.xlu0 %1896
      %1898 = vrot.lane.b32.xlu0 %v1889, 64
      %v1899 = vpop.permute.xlu0 %1898
      %1900 = vrot.lane.b32.xlu0 %v1890, 64
      %v1901 = vpop.permute.xlu0 %1900
      %1902 = vrot.lane.b32.xlu0 %v1891, 64
      %v1903 = vpop.permute.xlu0 %1902
      %1904 = vrot.lane.b32.xlu0 %v1892, 64
      %v1905 = vpop.permute.xlu0 %1904
      %1906 = vrot.lane.b32.xlu0 %v1893, 64
      %v1907 = vpop.permute.xlu0 %1906
      %1908 = vrot.lane.b32.xlu0 %v1894, 64
      %v1909 = vpop.permute.xlu0 %1908
      %1910 = vrot.lane.b32.xlu0 %v1895, 64
      %v1911 = vpop.permute.xlu0 %1910
      %vm1912 = vcmask 64512
      %v1915 = vsel %vm1912, %v1552, %v1585
      %v1918 = vsel %vm1912, %v1553, %v1587
      %v1921 = vsel %vm1912, %v1554, %v1589
      %v1924 = vsel %vm1912, %v1555, %v1591
      %v1927 = vsel %vm1912, %v1556, %v1593
      %v1930 = vsel %vm1912, %v1557, %v1595
      %v1933 = vsel %vm1912, %v1558, %v1597
      %v1936 = vsel %vm1912, %v1559, %v1599
      %vm1937 = vcmask 130048
      %v1939 = vsel %vm1937, %v1915, %v1625
      %v1941 = vsel %vm1937, %v1918, %v1627
      %v1943 = vsel %vm1937, %v1921, %v1629
      %v1945 = vsel %vm1937, %v1924, %v1631
      %v1947 = vsel %vm1937, %v1927, %v1633
      %v1949 = vsel %vm1937, %v1930, %v1635
      %v1951 = vsel %vm1937, %v1933, %v1637
      %v1953 = vsel %vm1937, %v1936, %v1639
      %vm1954 = vcmask 195584
      %v1956 = vsel %vm1954, %v1939, %v1681
      %v1958 = vsel %vm1954, %v1941, %v1683
      %v1960 = vsel %vm1954, %v1943, %v1685
      %v1962 = vsel %vm1954, %v1945, %v1687
      %v1964 = vsel %vm1954, %v1947, %v1689
      %v1966 = vsel %vm1954, %v1949, %v1691
      %v1968 = vsel %vm1954, %v1951, %v1693
      %v1970 = vsel %vm1954, %v1953, %v1695
      %vm1971 = vcmask 261120
      %v1973 = vsel %vm1971, %v1956, %v1721
      %v1975 = vsel %vm1971, %v1958, %v1723
      %v1977 = vsel %vm1971, %v1960, %v1725
      %v1979 = vsel %vm1971, %v1962, %v1727
      %v1981 = vsel %vm1971, %v1964, %v1729
      %v1983 = vsel %vm1971, %v1966, %v1731
      %v1985 = vsel %vm1971, %v1968, %v1733
      %v1987 = vsel %vm1971, %v1970, %v1735
      %vm1988 = vcmask 326656
      %v1990 = vsel %vm1988, %v1973, %v1761
      %v1992 = vsel %vm1988, %v1975, %v1763
      %v1994 = vsel %vm1988, %v1977, %v1765
      %v1996 = vsel %vm1988, %v1979, %v1767
      %v1998 = vsel %vm1988, %v1981, %v1769
      %v2000 = vsel %vm1988, %v1983, %v1771
      %v2002 = vsel %vm1988, %v1985, %v1773
      %v2004 = vsel %vm1988, %v1987, %v1775
      %vm2005 = vcmask 392192
      %v2007 = vsel %vm2005, %v1990, %v1817
      %v2009 = vsel %vm2005, %v1992, %v1819
      %v2011 = vsel %vm2005, %v1994, %v1821
      %v2013 = vsel %vm2005, %v1996, %v1823
      %v2015 = vsel %vm2005, %v1998, %v1825
      %v2017 = vsel %vm2005, %v2000, %v1827
      %v2019 = vsel %vm2005, %v2002, %v1829
      %v2021 = vsel %vm2005, %v2004, %v1831
      %vm2022 = vcmask 457728
      %v2024 = vsel %vm2022, %v2007, %v1857
      %v2026 = vsel %vm2022, %v2009, %v1859
      %v2028 = vsel %vm2022, %v2011, %v1861
      %v2030 = vsel %vm2022, %v2013, %v1863
      %v2032 = vsel %vm2022, %v2015, %v1865
      %v2034 = vsel %vm2022, %v2017, %v1867
      %v2036 = vsel %vm2022, %v2019, %v1869
      %v2038 = vsel %vm2022, %v2021, %v1871
      %vm2039 = vcmask 523264
      %v2041 = vsel %vm2039, %v2024, %v1897
      %v2043 = vsel %vm2039, %v2026, %v1899
      %v2045 = vsel %vm2039, %v2028, %v1901
      %v2047 = vsel %vm2039, %v2030, %v1903
      %v2049 = vsel %vm2039, %v2032, %v1905
      %v2051 = vsel %vm2039, %v2034, %v1907
      %v2053 = vsel %vm2039, %v2036, %v1909
      %v2055 = vsel %vm2039, %v2038, %v1911
      %v2056 = vld [vmem:[%s380] sm:$0xf]
      %v2057 = vld [vmem:[%s380 + $0x4] sm:$0xf]
      %v2058 = vld [vmem:[%s380 + $0x8] sm:$0xf]
      %v2059 = vld [vmem:[%s380 + $0xc] sm:$0xf]
      %v2060 = vld [vmem:[%s380 + $0x10] sm:$0xf]
      %v2061 = vld [vmem:[%s380 + $0x14] sm:$0xf]
      %v2062 = vld [vmem:[%s380 + $0x18] sm:$0xf]
      %v2063 = vld [vmem:[%s380 + $0x1c] sm:$0xf]
      %v2064 = vld [vmem:[%s380 + $0x20] sm:$0xf]
      %v2074 = vunpack.c.l.b16 %v2056
      %v2075 = vunpack.c.l.b16 %v2057
      %v2076 = vunpack.c.l.b16 %v2058
      %v2077 = vunpack.c.l.b16 %v2059
      %v2078 = vunpack.c.l.b16 %v2060
      %v2079 = vunpack.c.l.b16 %v2061
      %v2080 = vunpack.c.l.b16 %v2062
      %v2081 = vunpack.c.l.b16 %v2063
      %v2082 = vunpack.c.l.b16 %v2064
      %v2083 = vpack.c.b16 %v2075, %v2074
      %v2084 = vpack.c.b16 %v2077, %v2076
      %v2085 = vpack.c.b16 %v2079, %v2078
      %v2086 = vpack.c.b16 %v2081, %v2080
      %v2087 = vpack.c.b16 %v2082, %v2082
      %vm2092 = vcmask 588800
      %v2093 = vsel %vm2092, %v2041, 0
      %v2095 = vsel %vm2092, %v2043, 0
      %v2097 = vsel %vm2092, %v2045, 0
      %v2099 = vsel %vm2092, %v2047, 0
      %v2101 = vsel %vm2092, %v2049, 0
      %v2103 = vsel %vm2092, %v2051, 0
      %v2105 = vsel %vm2092, %v2053, 0
      %v2107 = vsel %vm2092, %v2055, 0
      %vm2109 = vcmask 1043456
      %v2111 = vsel %vm2109, %v2087, 0
      %2113 = vmatprep.subr.bf16.mxu0 0
      %2114 = vmatpush1.bf16.msra.mxu0 %v2083
      %2115 = vmatprep.subr.bf16.mxu0 0
      %2116 = vmatpush1.bf16.msra.mxu0 %v2084
      %2117 = vmatprep.subr.bf16.mxu0 0
      %2118 = vmatpush1.bf16.msra.mxu0 %v2085
      %2119 = vmatprep.subr.bf16.mxu0 0
      %2120 = vmatpush1.bf16.msra.mxu0 %v2086
      %2121 = vmatprep.subr.bf16.mxu0 0
      %2122 = vmatpush1.bf16.msra.mxu0 %v2111
      %2123 = vmatprep.subr.bf16.mxu0 0
      %2124 = vmatpush1.bf16.msra.mxu0 0
      %2125 = vmatprep.subr.bf16.mxu0 0
      %2126 = vmatpush1.bf16.msra.mxu0 0
      %2127 = vmatprep.subr.bf16.mxu0 0
      %2128 = vmatpush1.bf16.msra.mxu0 0
      %2129 = vmatprep.subr.bf16.mxu0 0
      %2130 = vmatpush1.bf16.msra.mxu0 0
      %2131 = vmatprep.subr.bf16.mxu0 0
      %2132 = vmatpush1.bf16.msra.mxu0 0
      %2133 = vmatprep.subr.bf16.mxu0 0
      %2134 = vmatpush1.bf16.msra.mxu0 0
      %2135 = vmatprep.subr.bf16.mxu0 0
      %2136 = vmatpush1.bf16.msra.mxu0 0
      %2137 = vmatprep.subr.bf16.mxu0 0
      %2138 = vmatpush1.bf16.msra.mxu0 0
      %2139 = vmatprep.subr.bf16.mxu0 0
      %2140 = vmatpush1.bf16.msra.mxu0 0
      %2141 = vmatprep.subr.bf16.mxu0 0
      %2142 = vmatpush1.bf16.msra.mxu0 0
      %2143 = vmatprep.subr.bf16.mxu0 0
      %2144 = vmatpush1.bf16.msra.mxu0 0
      %2145 = vmatprep.mubr.bf16.mxu0 0
      %2146 = vmatmul.mubr.bf16.gmra.mrb[0].mxu0 %v2093
      %v2147 = vpop.f32.mrb[0].mxu0
      %v2148 = vadd.f32 0.0, %v2147
      %v2149 = vpop.f32.mrb[0].mxu0
      %v2150 = vpop.f32.mrb[0].mxu0
      %v2151 = vadd.f32 0.0, %v2150
      %v2152 = vpop.f32.mrb[0].mxu0
      %2153 = vmatprep.mubr.bf16.mxu0 0
      %2154 = vmatmul.mubr.bf16.gmra.mrb[0].mxu0 %v2095
      %v2155 = vpop.f32.mrb[0].mxu0
      %v2156 = vadd.f32 0.0, %v2155
      %v2157 = vpop.f32.mrb[0].mxu0
      %v2158 = vpop.f32.mrb[0].mxu0
      %v2159 = vadd.f32 0.0, %v2158
      %v2160 = vpop.f32.mrb[0].mxu0
      %2161 = vmatprep.mubr.bf16.mxu0 0
      %2162 = vmatmul.mubr.bf16.gmra.mrb[0].mxu0 %v2097
      %v2163 = vpop.f32.mrb[0].mxu0
      %v2164 = vadd.f32 0.0, %v2163
      %v2165 = vpop.f32.mrb[0].mxu0
      %v2166 = vpop.f32.mrb[0].mxu0
      %v2167 = vadd.f32 0.0, %v2166
      %v2168 = vpop.f32.mrb[0].mxu0
      %2169 = vmatprep.mubr.bf16.mxu0 0
      %2170 = vmatmul.mubr.bf16.gmra.mrb[0].mxu0 %v2099
      %v2171 = vpop.f32.mrb[0].mxu0
      %v2172 = vadd.f32 0.0, %v2171
      %v2173 = vpop.f32.mrb[0].mxu0
      %v2174 = vpop.f32.mrb[0].mxu0
      %v2175 = vadd.f32 0.0, %v2174
      %v2176 = vpop.f32.mrb[0].mxu0
      %2177 = vmatprep.mubr.bf16.mxu0 0
      %2178 = vmatmul.mubr.bf16.gmra.mrb[0].mxu0 %v2101
      %v2179 = vpop.f32.mrb[0].mxu0
      %v2180 = vadd.f32 0.0, %v2179
      %v2181 = vpop.f32.mrb[0].mxu0
      %v2182 = vpop.f32.mrb[0].mxu0
      %v2183 = vadd.f32 0.0, %v2182
      %v2184 = vpop.f32.mrb[0].mxu0
      %2185 = vmatprep.mubr.bf16.mxu0 0
      %2186 = vmatmul.mubr.bf16.gmra.mrb[0].mxu0 %v2103
      %v2187 = vpop.f32.mrb[0].mxu0
      %v2188 = vadd.f32 0.0, %v2187
      %v2189 = vpop.f32.mrb[0].mxu0
      %v2190 = vpop.f32.mrb[0].mxu0
      %v2191 = vadd.f32 0.0, %v2190
      %v2192 = vpop.f32.mrb[0].mxu0
      %2193 = vmatprep.mubr.bf16.mxu0 0
      %2194 = vmatmul.mubr.bf16.gmra.mrb[0].mxu0 %v2105
      %v2195 = vpop.f32.mrb[0].mxu0
      %v2196 = vadd.f32 0.0, %v2195
      %v2197 = vpop.f32.mrb[0].mxu0
      %v2198 = vpop.f32.mrb[0].mxu0
      %v2199 = vadd.f32 0.0, %v2198
      %v2200 = vpop.f32.mrb[0].mxu0
      %2201 = vmatprep.mubr.bf16.mxu0 0
      %2202 = vmatmul.mubr.bf16.gmra.mrb[0].mxu0 %v2107
      %v2203 = vpop.f32.mrb[0].mxu0
      %v2204 = vadd.f32 0.0, %v2203
      %v2205 = vpop.f32.mrb[0].mxu0
      %v2206 = vpop.f32.mrb[0].mxu0
      %v2207 = vadd.f32 0.0, %v2206
      %v2208 = vpop.f32.mrb[0].mxu0
      %2209 = vdwg.mxu0
      %v2210 = vld [vmem:[%s383] sm:$0x1]
      %v2212 = vlaneseq
      %v2213 = vshrl.u32 %v2212, 7
      %v2214 = vsub.s32 0, %v2213
      %v2215 = vrot.slane %v2210, %v2214
      %v2217 = vmul.f32 %v2148, %v2215
      %v2218 = vmul.f32 %v2151, %v2215
      %v2219 = vmul.f32 %v2156, %v2215
      %v2220 = vmul.f32 %v2159, %v2215
      %v2221 = vmul.f32 %v2164, %v2215
      %v2222 = vmul.f32 %v2167, %v2215
      %v2223 = vmul.f32 %v2172, %v2215
      %v2224 = vmul.f32 %v2175, %v2215
      %v2225 = vmul.f32 %v2180, %v2215
      %v2226 = vmul.f32 %v2183, %v2215
      %v2227 = vmul.f32 %v2188, %v2215
      %v2228 = vmul.f32 %v2191, %v2215
      %v2229 = vmul.f32 %v2196, %v2215
      %v2230 = vmul.f32 %v2199, %v2215
      %v2231 = vmul.f32 %v2204, %v2215
      %v2232 = vmul.f32 %v2207, %v2215
      %v2233 = vld [vmem:[%s386] sm:$0x1]
      %v2235 = vlaneseq
      %v2236 = vshrl.u32 %v2235, 7
      %v2237 = vsub.s32 0, %v2236
      %v2238 = vrot.slane %v2233, %v2237
      %v2240 = vadd.f32 %v2217, %v2238
      %v2241 = vadd.f32 %v2218, %v2238
      %v2242 = vadd.f32 %v2219, %v2238
      %v2243 = vadd.f32 %v2220, %v2238
      %v2244 = vadd.f32 %v2221, %v2238
      %v2245 = vadd.f32 %v2222, %v2238
      %v2246 = vadd.f32 %v2223, %v2238
      %v2247 = vadd.f32 %v2224, %v2238
      %v2248 = vadd.f32 %v2225, %v2238
      %v2249 = vadd.f32 %v2226, %v2238
      %v2250 = vadd.f32 %v2227, %v2238
      %v2251 = vadd.f32 %v2228, %v2238
      %v2252 = vadd.f32 %v2229, %v2238
      %v2253 = vadd.f32 %v2230, %v2238
      %v2254 = vadd.f32 %v2231, %v2238
      %v2255 = vadd.f32 %v2232, %v2238
      %v2256 = vmax.f32 %v2240, 0.0
      %v2257 = vmax.f32 %v2241, 0.0
      %v2258 = vmax.f32 %v2242, 0.0
      %v2259 = vmax.f32 %v2243, 0.0
      %v2260 = vmax.f32 %v2244, 0.0
      %v2261 = vmax.f32 %v2245, 0.0
      %v2262 = vmax.f32 %v2246, 0.0
      %v2263 = vmax.f32 %v2247, 0.0
      %v2264 = vmax.f32 %v2248, 0.0
      %v2265 = vmax.f32 %v2249, 0.0
      %v2266 = vmax.f32 %v2250, 0.0
      %v2267 = vmax.f32 %v2251, 0.0
      %v2268 = vmax.f32 %v2252, 0.0
      %v2269 = vmax.f32 %v2253, 0.0
      %v2270 = vmax.f32 %v2254, 0.0
      %v2271 = vmax.f32 %v2255, 0.0
      %vm2272 = vcmask 31744
      %2273 = vst.msk [vmem:[#allocation2] sm:$0xff] %vm2272, 0.0
      %vm2274 = vcmask 25600
      %2275 = vst.msk [vmem:[#allocation2 + $0x8] sm:$0x3] %vm2274, 0.0
      %2276 = vst.msk [vmem:[#allocation2 + $0xa0] sm:$0xff] %vm2272, 0.0
      %2277 = vst.msk [vmem:[#allocation2 + $0xa8] sm:$0x3] %vm2274, 0.0
      %s2278 = scalar_lea.vmem [#allocation2], 144
      %2279 = vst.msk [vmem:[%s2278] sm:$0xff] %vm2272, 0.0
      %2280 = vst.msk [vmem:[%s2278 + $0x8] sm:$0x3] %vm2274, 0.0
      %2281 = vst.msk [vmem:[%s2278 + $0xa0] sm:$0xff] %vm2272, 0.0
      %2282 = vst.msk [vmem:[%s2278 + $0xa8] sm:$0x3] %vm2274, 0.0
      %vm2283 = vcmask 24576
      %2284 = vst.msk [vmem:[#allocation2] sm:$0x1] %vm2283, 0.0
      %2285 = vst.msk [vmem:[#allocation2 + $0x10] sm:$0x1] %vm2283, 0.0
      %2286 = vst.msk [vmem:[#allocation2 + $0x20] sm:$0x1] %vm2283, 0.0
      %2287 = vst.msk [vmem:[#allocation2 + $0x30] sm:$0x1] %vm2283, 0.0
      %2288 = vst.msk [vmem:[#allocation2 + $0x40] sm:$0x1] %vm2283, 0.0
      %2289 = vst.msk [vmem:[#allocation2 + $0x50] sm:$0x1] %vm2283, 0.0
      %2290 = vst.msk [vmem:[#allocation2 + $0x60] sm:$0x1] %vm2283, 0.0
      %2291 = vst.msk [vmem:[#allocation2 + $0x70] sm:$0x1] %vm2283, 0.0
      %2292 = vst.msk [vmem:[#allocation2 + $0x80] sm:$0x1] %vm2283, 0.0
      %2293 = vst.msk [vmem:[#allocation2 + $0x90] sm:$0x1] %vm2283, 0.0
      %2294 = vst.msk [vmem:[#allocation2 + $0xa0] sm:$0x1] %vm2283, 0.0
      %2295 = vst.msk [vmem:[#allocation2 + $0xb0] sm:$0x1] %vm2283, 0.0
      %2296 = vst.msk [vmem:[#allocation2 + $0xc0] sm:$0x1] %vm2283, 0.0
      %2297 = vst.msk [vmem:[#allocation2 + $0xd0] sm:$0x1] %vm2283, 0.0
      %2298 = vst.msk [vmem:[#allocation2 + $0xe0] sm:$0x1] %vm2283, 0.0
      %2299 = vst.msk [vmem:[#allocation2 + $0xf0] sm:$0x1] %vm2283, 0.0
      %2300 = vst.msk [vmem:[#allocation2 + $0x100] sm:$0x1] %vm2283, 0.0
      %2301 = vst.msk [vmem:[#allocation2 + $0x110] sm:$0x1] %vm2283, 0.0
      %2302 = vst.msk [vmem:[#allocation2 + $0x120] sm:$0x1] %vm2283, 0.0
      %2303 = vst.msk [vmem:[#allocation2 + $0x130] sm:$0x1] %vm2283, 0.0
      %2304 = vst.msk [vmem:[#allocation2 + $0x9] sm:$0x1] %vm2283, 0.0
      %2305 = vst.msk [vmem:[#allocation2 + $0x19] sm:$0x1] %vm2283, 0.0
      %2306 = vst.msk [vmem:[#allocation2 + $0x29] sm:$0x1] %vm2283, 0.0
      %2307 = vst.msk [vmem:[#allocation2 + $0x39] sm:$0x1] %vm2283, 0.0
      %2308 = vst.msk [vmem:[#allocation2 + $0x49] sm:$0x1] %vm2283, 0.0
      %2309 = vst.msk [vmem:[#allocation2 + $0x59] sm:$0x1] %vm2283, 0.0
      %2310 = vst.msk [vmem:[#allocation2 + $0x69] sm:$0x1] %vm2283, 0.0
      %2311 = vst.msk [vmem:[#allocation2 + $0x79] sm:$0x1] %vm2283, 0.0
      %2312 = vst.msk [vmem:[#allocation2 + $0x89] sm:$0x1] %vm2283, 0.0
      %2313 = vst.msk [vmem:[#allocation2 + $0x99] sm:$0x1] %vm2283, 0.0
      %2314 = vst.msk [vmem:[#allocation2 + $0xa9] sm:$0x1] %vm2283, 0.0
      %2315 = vst.msk [vmem:[#allocation2 + $0xb9] sm:$0x1] %vm2283, 0.0
      %2316 = vst.msk [vmem:[#allocation2 + $0xc9] sm:$0x1] %vm2283, 0.0
      %2317 = vst.msk [vmem:[#allocation2 + $0xd9] sm:$0x1] %vm2283, 0.0
      %2318 = vst.msk [vmem:[#allocation2 + $0xe9] sm:$0x1] %vm2283, 0.0
      %2319 = vst.msk [vmem:[#allocation2 + $0xf9] sm:$0x1] %vm2283, 0.0
      %2320 = vst.msk [vmem:[#allocation2 + $0x109] sm:$0x1] %vm2283, 0.0
      %2321 = vst.msk [vmem:[#allocation2 + $0x119] sm:$0x1] %vm2283, 0.0
      %2322 = vst.msk [vmem:[#allocation2 + $0x129] sm:$0x1] %vm2283, 0.0
      %2323 = vst.msk [vmem:[#allocation2 + $0x139] sm:$0x1] %vm2283, 0.0
      %s2324 = scalar_lea.vmem [#allocation2], 16
      %2325 = vst.msk [vmem:[%s2324 + $0x1] sm:$0xff] %vm2272, %v2256
      %2326 = vst.msk [vmem:[%s2324 + $0x11] sm:$0xff] %vm2272, %v2257
      %2327 = vst.msk [vmem:[%s2324 + $0x21] sm:$0xff] %vm2272, %v2258
      %2328 = vst.msk [vmem:[%s2324 + $0x31] sm:$0xff] %vm2272, %v2259
      %2329 = vst.msk [vmem:[%s2324 + $0x41] sm:$0xff] %vm2272, %v2260
      %2330 = vst.msk [vmem:[%s2324 + $0x51] sm:$0xff] %vm2272, %v2261
      %2331 = vst.msk [vmem:[%s2324 + $0x61] sm:$0xff] %vm2272, %v2262
      %2332 = vst.msk [vmem:[%s2324 + $0x71] sm:$0xff] %vm2272, %v2263
      %2333 = vst.msk [vmem:[%s2324 + $0xa1] sm:$0xff] %vm2272, %v2264
      %2334 = vst.msk [vmem:[%s2324 + $0xb1] sm:$0xff] %vm2272, %v2265
      %2335 = vst.msk [vmem:[%s2324 + $0xc1] sm:$0xff] %vm2272, %v2266
      %2336 = vst.msk [vmem:[%s2324 + $0xd1] sm:$0xff] %vm2272, %v2267
      %2337 = vst.msk [vmem:[%s2324 + $0xe1] sm:$0xff] %vm2272, %v2268
      %2338 = vst.msk [vmem:[%s2324 + $0xf1] sm:$0xff] %vm2272, %v2269
      %2339 = vst.msk [vmem:[%s2324 + $0x101] sm:$0xff] %vm2272, %v2270
      %2340 = vst.msk [vmem:[%s2324 + $0x111] sm:$0xff] %vm2272, %v2271
      %v2341 = vld [vmem:[#allocation2] sm:$0xff]
      %v2342 = vld [vmem:[#allocation2 + $0x10] sm:$0xff]
      %v2343 = vld [vmem:[#allocation2 + $0x20] sm:$0xff]
      %v2344 = vld [vmem:[#allocation2 + $0x30] sm:$0xff]
      %v2345 = vld [vmem:[#allocation2 + $0x40] sm:$0xff]
      %v2346 = vld [vmem:[#allocation2 + $0x50] sm:$0xff]
      %v2347 = vld [vmem:[#allocation2 + $0x60] sm:$0xff]
      %v2348 = vld [vmem:[#allocation2 + $0x70] sm:$0xff]
      %v2349 = vld [vmem:[#allocation2 + $0xa0] sm:$0xff]
      %v2350 = vld [vmem:[#allocation2 + $0xb0] sm:$0xff]
      %v2351 = vld [vmem:[#allocation2 + $0xc0] sm:$0xff]
      %v2352 = vld [vmem:[#allocation2 + $0xd0] sm:$0xff]
      %v2353 = vld [vmem:[#allocation2 + $0xe0] sm:$0xff]
      %v2354 = vld [vmem:[#allocation2 + $0xf0] sm:$0xff]
      %v2355 = vld [vmem:[#allocation2 + $0x100] sm:$0xff]
      %v2356 = vld [vmem:[#allocation2 + $0x110] sm:$0xff]
      %v2357 = vld [vmem:[#allocation2 + $0x1] sm:$0xff]
      %v2358 = vld [vmem:[#allocation2 + $0x11] sm:$0xff]
      %v2359 = vld [vmem:[#allocation2 + $0x21] sm:$0xff]
      %v2360 = vld [vmem:[#allocation2 + $0x31] sm:$0xff]
      %v2361 = vld [vmem:[#allocation2 + $0x41] sm:$0xff]
      %v2362 = vld [vmem:[#allocation2 + $0x51] sm:$0xff]
      %v2363 = vld [vmem:[#allocation2 + $0x61] sm:$0xff]
      %v2364 = vld [vmem:[#allocation2 + $0x71] sm:$0xff]
      %v2365 = vld [vmem:[#allocation2 + $0xa1] sm:$0xff]
      %v2366 = vld [vmem:[#allocation2 + $0xb1] sm:$0xff]
      %v2367 = vld [vmem:[#allocation2 + $0xc1] sm:$0xff]
      %v2368 = vld [vmem:[#allocation2 + $0xd1] sm:$0xff]
      %v2369 = vld [vmem:[#allocation2 + $0xe1] sm:$0xff]
      %v2370 = vld [vmem:[#allocation2 + $0xf1] sm:$0xff]
      %v2371 = vld [vmem:[#allocation2 + $0x101] sm:$0xff]
      %v2372 = vld [vmem:[#allocation2 + $0x111] sm:$0xff]
      %v2373 = vld [vmem:[#allocation2 + $0x2] sm:$0xff]
      %v2374 = vld [vmem:[#allocation2 + $0x12] sm:$0xff]
      %v2375 = vld [vmem:[#allocation2 + $0x22] sm:$0xff]
      %v2376 = vld [vmem:[#allocation2 + $0x32] sm:$0xff]
      %v2377 = vld [vmem:[#allocation2 + $0x42] sm:$0xff]
      %v2378 = vld [vmem:[#allocation2 + $0x52] sm:$0xff]
      %v2379 = vld [vmem:[#allocation2 + $0x62] sm:$0xff]
      %v2380 = vld [vmem:[#allocation2 + $0x72] sm:$0xff]
      %v2381 = vld [vmem:[#allocation2 + $0xa2] sm:$0xff]
      %v2382 = vld [vmem:[#allocation2 + $0xb2] sm:$0xff]
      %v2383 = vld [vmem:[#allocation2 + $0xc2] sm:$0xff]
      %v2384 = vld [vmem:[#allocation2 + $0xd2] sm:$0xff]
      %v2385 = vld [vmem:[#allocation2 + $0xe2] sm:$0xff]
      %v2386 = vld [vmem:[#allocation2 + $0xf2] sm:$0xff]
      %v2387 = vld [vmem:[#allocation2 + $0x102] sm:$0xff]
      %v2388 = vld [vmem:[#allocation2 + $0x112] sm:$0xff]
      %v2389 = vld [vmem:[%s2324] sm:$0xff]
      %v2390 = vld [vmem:[%s2324 + $0x10] sm:$0xff]
      %v2391 = vld [vmem:[%s2324 + $0x20] sm:$0xff]
      %v2392 = vld [vmem:[%s2324 + $0x30] sm:$0xff]
      %v2393 = vld [vmem:[%s2324 + $0x40] sm:$0xff]
      %v2394 = vld [vmem:[%s2324 + $0x50] sm:$0xff]
      %v2395 = vld [vmem:[%s2324 + $0x60] sm:$0xff]
      %v2396 = vld [vmem:[%s2324 + $0x70] sm:$0xff]
      %v2397 = vld [vmem:[%s2324 + $0xa0] sm:$0xff]
      %v2398 = vld [vmem:[%s2324 + $0xb0] sm:$0xff]
      %v2399 = vld [vmem:[%s2324 + $0xc0] sm:$0xff]
      %v2400 = vld [vmem:[%s2324 + $0xd0] sm:$0xff]
      %v2401 = vld [vmem:[%s2324 + $0xe0] sm:$0xff]
      %v2402 = vld [vmem:[%s2324 + $0xf0] sm:$0xff]
      %v2403 = vld [vmem:[%s2324 + $0x100] sm:$0xff]
      %v2404 = vld [vmem:[%s2324 + $0x110] sm:$0xff]
      %v2405 = vld [vmem:[%s2324 + $0x1] sm:$0xff]
      %v2406 = vld [vmem:[%s2324 + $0x11] sm:$0xff]
      %v2407 = vld [vmem:[%s2324 + $0x21] sm:$0xff]
      %v2408 = vld [vmem:[%s2324 + $0x31] sm:$0xff]
      %v2409 = vld [vmem:[%s2324 + $0x41] sm:$0xff]
      %v2410 = vld [vmem:[%s2324 + $0x51] sm:$0xff]
      %v2411 = vld [vmem:[%s2324 + $0x61] sm:$0xff]
      %v2412 = vld [vmem:[%s2324 + $0x71] sm:$0xff]
      %v2413 = vld [vmem:[%s2324 + $0xa1] sm:$0xff]
      %v2414 = vld [vmem:[%s2324 + $0xb1] sm:$0xff]
      %v2415 = vld [vmem:[%s2324 + $0xc1] sm:$0xff]
      %v2416 = vld [vmem:[%s2324 + $0xd1] sm:$0xff]
      %v2417 = vld [vmem:[%s2324 + $0xe1] sm:$0xff]
      %v2418 = vld [vmem:[%s2324 + $0xf1] sm:$0xff]
      %v2419 = vld [vmem:[%s2324 + $0x101] sm:$0xff]
      %v2420 = vld [vmem:[%s2324 + $0x111] sm:$0xff]
      %v2421 = vld [vmem:[%s2324 + $0x2] sm:$0xff]
      %v2422 = vld [vmem:[%s2324 + $0x12] sm:$0xff]
      %v2423 = vld [vmem:[%s2324 + $0x22] sm:$0xff]
      %v2424 = vld [vmem:[%s2324 + $0x32] sm:$0xff]
      %v2425 = vld [vmem:[%s2324 + $0x42] sm:$0xff]
      %v2426 = vld [vmem:[%s2324 + $0x52] sm:$0xff]
      %v2427 = vld [vmem:[%s2324 + $0x62] sm:$0xff]
      %v2428 = vld [vmem:[%s2324 + $0x72] sm:$0xff]
      %v2429 = vld [vmem:[%s2324 + $0xa2] sm:$0xff]
      %v2430 = vld [vmem:[%s2324 + $0xb2] sm:$0xff]
      %v2431 = vld [vmem:[%s2324 + $0xc2] sm:$0xff]
      %v2432 = vld [vmem:[%s2324 + $0xd2] sm:$0xff]
      %v2433 = vld [vmem:[%s2324 + $0xe2] sm:$0xff]
      %v2434 = vld [vmem:[%s2324 + $0xf2] sm:$0xff]
      %v2435 = vld [vmem:[%s2324 + $0x102] sm:$0xff]
      %v2436 = vld [vmem:[%s2324 + $0x112] sm:$0xff]
      %s2437 = scalar_lea.vmem [#allocation2], 32
      %v2438 = vld [vmem:[%s2437] sm:$0xff]
      %v2439 = vld [vmem:[%s2437 + $0x10] sm:$0xff]
      %v2440 = vld [vmem:[%s2437 + $0x20] sm:$0xff]
      %v2441 = vld [vmem:[%s2437 + $0x30] sm:$0xff]
      %v2442 = vld [vmem:[%s2437 + $0x40] sm:$0xff]
      %v2443 = vld [vmem:[%s2437 + $0x50] sm:$0xff]
      %v2444 = vld [vmem:[%s2437 + $0x60] sm:$0xff]
      %v2445 = vld [vmem:[%s2437 + $0x70] sm:$0xff]
      %v2446 = vld [vmem:[%s2437 + $0xa0] sm:$0xff]
      %v2447 = vld [vmem:[%s2437 + $0xb0] sm:$0xff]
      %v2448 = vld [vmem:[%s2437 + $0xc0] sm:$0xff]
      %v2449 = vld [vmem:[%s2437 + $0xd0] sm:$0xff]
      %v2450 = vld [vmem:[%s2437 + $0xe0] sm:$0xff]
      %v2451 = vld [vmem:[%s2437 + $0xf0] sm:$0xff]
      %v2452 = vld [vmem:[%s2437 + $0x100] sm:$0xff]
      %v2453 = vld [vmem:[%s2437 + $0x110] sm:$0xff]
      %v2454 = vld [vmem:[%s2437 + $0x1] sm:$0xff]
      %v2455 = vld [vmem:[%s2437 + $0x11] sm:$0xff]
      %v2456 = vld [vmem:[%s2437 + $0x21] sm:$0xff]
      %v2457 = vld [vmem:[%s2437 + $0x31] sm:$0xff]
      %v2458 = vld [vmem:[%s2437 + $0x41] sm:$0xff]
      %v2459 = vld [vmem:[%s2437 + $0x51] sm:$0xff]
      %v2460 = vld [vmem:[%s2437 + $0x61] sm:$0xff]
      %v2461 = vld [vmem:[%s2437 + $0x71] sm:$0xff]
      %v2462 = vld [vmem:[%s2437 + $0xa1] sm:$0xff]
      %v2463 = vld [vmem:[%s2437 + $0xb1] sm:$0xff]
      %v2464 = vld [vmem:[%s2437 + $0xc1] sm:$0xff]
      %v2465 = vld [vmem:[%s2437 + $0xd1] sm:$0xff]
      %v2466 = vld [vmem:[%s2437 + $0xe1] sm:$0xff]
      %v2467 = vld [vmem:[%s2437 + $0xf1] sm:$0xff]
      %v2468 = vld [vmem:[%s2437 + $0x101] sm:$0xff]
      %v2469 = vld [vmem:[%s2437 + $0x111] sm:$0xff]
      %v2470 = vld [vmem:[%s2437 + $0x2] sm:$0xff]
      %v2471 = vld [vmem:[%s2437 + $0x12] sm:$0xff]
      %v2472 = vld [vmem:[%s2437 + $0x22] sm:$0xff]
      %v2473 = vld [vmem:[%s2437 + $0x32] sm:$0xff]
      %v2474 = vld [vmem:[%s2437 + $0x42] sm:$0xff]
      %v2475 = vld [vmem:[%s2437 + $0x52] sm:$0xff]
      %v2476 = vld [vmem:[%s2437 + $0x62] sm:$0xff]
      %v2477 = vld [vmem:[%s2437 + $0x72] sm:$0xff]
      %v2478 = vld [vmem:[%s2437 + $0xa2] sm:$0xff]
      %v2479 = vld [vmem:[%s2437 + $0xb2] sm:$0xff]
      %v2480 = vld [vmem:[%s2437 + $0xc2] sm:$0xff]
      %v2481 = vld [vmem:[%s2437 + $0xd2] sm:$0xff]
      %v2482 = vld [vmem:[%s2437 + $0xe2] sm:$0xff]
      %v2483 = vld [vmem:[%s2437 + $0xf2] sm:$0xff]
      %v2484 = vld [vmem:[%s2437 + $0x102] sm:$0xff]
      %v2485 = vld [vmem:[%s2437 + $0x112] sm:$0xff]
      %2502 = vrot.lane.b32.xlu0 %v2357, 4
      %v2503 = vpop.permute.xlu0 %2502
      %2504 = vrot.lane.b32.xlu0 %v2358, 4
      %v2505 = vpop.permute.xlu0 %2504
      %2506 = vrot.lane.b32.xlu0 %v2359, 4
      %v2507 = vpop.permute.xlu0 %2506
      %2508 = vrot.lane.b32.xlu0 %v2360, 4
      %v2509 = vpop.permute.xlu0 %2508
      %2510 = vrot.lane.b32.xlu0 %v2361, 4
      %v2511 = vpop.permute.xlu0 %2510
      %2512 = vrot.lane.b32.xlu0 %v2362, 4
      %v2513 = vpop.permute.xlu0 %2512
      %2514 = vrot.lane.b32.xlu0 %v2363, 4
      %v2515 = vpop.permute.xlu0 %2514
      %2516 = vrot.lane.b32.xlu0 %v2364, 4
      %v2517 = vpop.permute.xlu0 %2516
      %2518 = vrot.lane.b32.xlu0 %v2365, 4
      %v2519 = vpop.permute.xlu0 %2518
      %2520 = vrot.lane.b32.xlu0 %v2366, 4
      %v2521 = vpop.permute.xlu0 %2520
      %2522 = vrot.lane.b32.xlu0 %v2367, 4
      %v2523 = vpop.permute.xlu0 %2522
      %2524 = vrot.lane.b32.xlu0 %v2368, 4
      %v2525 = vpop.permute.xlu0 %2524
      %2526 = vrot.lane.b32.xlu0 %v2369, 4
      %v2527 = vpop.permute.xlu0 %2526
      %2528 = vrot.lane.b32.xlu0 %v2370, 4
      %v2529 = vpop.permute.xlu0 %2528
      %2530 = vrot.lane.b32.xlu0 %v2371, 4
      %v2531 = vpop.permute.xlu0 %2530
      %2532 = vrot.lane.b32.xlu0 %v2372, 4
      %v2533 = vpop.permute.xlu0 %2532
      %2566 = vrot.lane.b32.xlu0 %v2373, 8
      %v2567 = vpop.permute.xlu0 %2566
      %2568 = vrot.lane.b32.xlu0 %v2374, 8
      %v2569 = vpop.permute.xlu0 %2568
      %2570 = vrot.lane.b32.xlu0 %v2375, 8
      %v2571 = vpop.permute.xlu0 %2570
      %2572 = vrot.lane.b32.xlu0 %v2376, 8
      %v2573 = vpop.permute.xlu0 %2572
      %2574 = vrot.lane.b32.xlu0 %v2377, 8
      %v2575 = vpop.permute.xlu0 %2574
      %2576 = vrot.lane.b32.xlu0 %v2378, 8
      %v2577 = vpop.permute.xlu0 %2576
      %2578 = vrot.lane.b32.xlu0 %v2379, 8
      %v2579 = vpop.permute.xlu0 %2578
      %2580 = vrot.lane.b32.xlu0 %v2380, 8
      %v2581 = vpop.permute.xlu0 %2580
      %2582 = vrot.lane.b32.xlu0 %v2381, 8
      %v2583 = vpop.permute.xlu0 %2582
      %2584 = vrot.lane.b32.xlu0 %v2382, 8
      %v2585 = vpop.permute.xlu0 %2584
      %2586 = vrot.lane.b32.xlu0 %v2383, 8
      %v2587 = vpop.permute.xlu0 %2586
      %2588 = vrot.lane.b32.xlu0 %v2384, 8
      %v2589 = vpop.permute.xlu0 %2588
      %2590 = vrot.lane.b32.xlu0 %v2385, 8
      %v2591 = vpop.permute.xlu0 %2590
      %2592 = vrot.lane.b32.xlu0 %v2386, 8
      %v2593 = vpop.permute.xlu0 %2592
      %2594 = vrot.lane.b32.xlu0 %v2387, 8
      %v2595 = vpop.permute.xlu0 %2594
      %2596 = vrot.lane.b32.xlu0 %v2388, 8
      %v2597 = vpop.permute.xlu0 %2596
      %2630 = vrot.lane.b32.xlu0 %v2389, 12
      %v2631 = vpop.permute.xlu0 %2630
      %2632 = vrot.lane.b32.xlu0 %v2390, 12
      %v2633 = vpop.permute.xlu0 %2632
      %2634 = vrot.lane.b32.xlu0 %v2391, 12
      %v2635 = vpop.permute.xlu0 %2634
      %2636 = vrot.lane.b32.xlu0 %v2392, 12
      %v2637 = vpop.permute.xlu0 %2636
      %2638 = vrot.lane.b32.xlu0 %v2393, 12
      %v2639 = vpop.permute.xlu0 %2638
      %2640 = vrot.lane.b32.xlu0 %v2394, 12
      %v2641 = vpop.permute.xlu0 %2640
      %2642 = vrot.lane.b32.xlu0 %v2395, 12
      %v2643 = vpop.permute.xlu0 %2642
      %2644 = vrot.lane.b32.xlu0 %v2396, 12
      %v2645 = vpop.permute.xlu0 %2644
      %2646 = vrot.lane.b32.xlu0 %v2397, 12
      %v2647 = vpop.permute.xlu0 %2646
      %2648 = vrot.lane.b32.xlu0 %v2398, 12
      %v2649 = vpop.permute.xlu0 %2648
      %2650 = vrot.lane.b32.xlu0 %v2399, 12
      %v2651 = vpop.permute.xlu0 %2650
      %2652 = vrot.lane.b32.xlu0 %v2400, 12
      %v2653 = vpop.permute.xlu0 %2652
      %2654 = vrot.lane.b32.xlu0 %v2401, 12
      %v2655 = vpop.permute.xlu0 %2654
      %2656 = vrot.lane.b32.xlu0 %v2402, 12
      %v2657 = vpop.permute.xlu0 %2656
      %2658 = vrot.lane.b32.xlu0 %v2403, 12
      %v2659 = vpop.permute.xlu0 %2658
      %2660 = vrot.lane.b32.xlu0 %v2404, 12
      %v2661 = vpop.permute.xlu0 %2660
      %2694 = vrot.lane.b32.xlu0 %v2405, 16
      %v2695 = vpop.permute.xlu0 %2694
      %2696 = vrot.lane.b32.xlu0 %v2406, 16
      %v2697 = vpop.permute.xlu0 %2696
      %2698 = vrot.lane.b32.xlu0 %v2407, 16
      %v2699 = vpop.permute.xlu0 %2698
      %2700 = vrot.lane.b32.xlu0 %v2408, 16
      %v2701 = vpop.permute.xlu0 %2700
      %2702 = vrot.lane.b32.xlu0 %v2409, 16
      %v2703 = vpop.permute.xlu0 %2702
      %2704 = vrot.lane.b32.xlu0 %v2410, 16
      %v2705 = vpop.permute.xlu0 %2704
      %2706 = vrot.lane.b32.xlu0 %v2411, 16
      %v2707 = vpop.permute.xlu0 %2706
      %2708 = vrot.lane.b32.xlu0 %v2412, 16
      %v2709 = vpop.permute.xlu0 %2708
      %2710 = vrot.lane.b32.xlu0 %v2413, 16
      %v2711 = vpop.permute.xlu0 %2710
      %2712 = vrot.lane.b32.xlu0 %v2414, 16
      %v2713 = vpop.permute.xlu0 %2712
      %2714 = vrot.lane.b32.xlu0 %v2415, 16
      %v2715 = vpop.permute.xlu0 %2714
      %2716 = vrot.lane.b32.xlu0 %v2416, 16
      %v2717 = vpop.permute.xlu0 %2716
      %2718 = vrot.lane.b32.xlu0 %v2417, 16
      %v2719 = vpop.permute.xlu0 %2718
      %2720 = vrot.lane.b32.xlu0 %v2418, 16
      %v2721 = vpop.permute.xlu0 %2720
      %2722 = vrot.lane.b32.xlu0 %v2419, 16
      %v2723 = vpop.permute.xlu0 %2722
      %2724 = vrot.lane.b32.xlu0 %v2420, 16
      %v2725 = vpop.permute.xlu0 %2724
      %2758 = vrot.lane.b32.xlu0 %v2421, 20
      %v2759 = vpop.permute.xlu0 %2758
      %2760 = vrot.lane.b32.xlu0 %v2422, 20
      %v2761 = vpop.permute.xlu0 %2760
      %2762 = vrot.lane.b32.xlu0 %v2423, 20
      %v2763 = vpop.permute.xlu0 %2762
      %2764 = vrot.lane.b32.xlu0 %v2424, 20
      %v2765 = vpop.permute.xlu0 %2764
      %2766 = vrot.lane.b32.xlu0 %v2425, 20
      %v2767 = vpop.permute.xlu0 %2766
      %2768 = vrot.lane.b32.xlu0 %v2426, 20
      %v2769 = vpop.permute.xlu0 %2768
      %2770 = vrot.lane.b32.xlu0 %v2427, 20
      %v2771 = vpop.permute.xlu0 %2770
      %2772 = vrot.lane.b32.xlu0 %v2428, 20
      %v2773 = vpop.permute.xlu0 %2772
      %2774 = vrot.lane.b32.xlu0 %v2429, 20
      %v2775 = vpop.permute.xlu0 %2774
      %2776 = vrot.lane.b32.xlu0 %v2430, 20
      %v2777 = vpop.permute.xlu0 %2776
      %2778 = vrot.lane.b32.xlu0 %v2431, 20
      %v2779 = vpop.permute.xlu0 %2778
      %2780 = vrot.lane.b32.xlu0 %v2432, 20
      %v2781 = vpop.permute.xlu0 %2780
      %2782 = vrot.lane.b32.xlu0 %v2433, 20
      %v2783 = vpop.permute.xlu0 %2782
      %2784 = vrot.lane.b32.xlu0 %v2434, 20
      %v2785 = vpop.permute.xlu0 %2784
      %2786 = vrot.lane.b32.xlu0 %v2435, 20
      %v2787 = vpop.permute.xlu0 %2786
      %2788 = vrot.lane.b32.xlu0 %v2436, 20
      %v2789 = vpop.permute.xlu0 %2788
      %2822 = vrot.lane.b32.xlu0 %v2438, 24
      %v2823 = vpop.permute.xlu0 %2822
      %2824 = vrot.lane.b32.xlu0 %v2439, 24
      %v2825 = vpop.permute.xlu0 %2824
      %2826 = vrot.lane.b32.xlu0 %v2440, 24
      %v2827 = vpop.permute.xlu0 %2826
      %2828 = vrot.lane.b32.xlu0 %v2441, 24
      %v2829 = vpop.permute.xlu0 %2828
      %2830 = vrot.lane.b32.xlu0 %v2442, 24
      %v2831 = vpop.permute.xlu0 %2830
      %2832 = vrot.lane.b32.xlu0 %v2443, 24
      %v2833 = vpop.permute.xlu0 %2832
      %2834 = vrot.lane.b32.xlu0 %v2444, 24
      %v2835 = vpop.permute.xlu0 %2834
      %2836 = vrot.lane.b32.xlu0 %v2445, 24
      %v2837 = vpop.permute.xlu0 %2836
      %2838 = vrot.lane.b32.xlu0 %v2446, 24
      %v2839 = vpop.permute.xlu0 %2838
      %2840 = vrot.lane.b32.xlu0 %v2447, 24
      %v2841 = vpop.permute.xlu0 %2840
      %2842 = vrot.lane.b32.xlu0 %v2448, 24
      %v2843 = vpop.permute.xlu0 %2842
      %2844 = vrot.lane.b32.xlu0 %v2449, 24
      %v2845 = vpop.permute.xlu0 %2844
      %2846 = vrot.lane.b32.xlu0 %v2450, 24
      %v2847 = vpop.permute.xlu0 %2846
      %2848 = vrot.lane.b32.xlu0 %v2451, 24
      %v2849 = vpop.permute.xlu0 %2848
      %2850 = vrot.lane.b32.xlu0 %v2452, 24
      %v2851 = vpop.permute.xlu0 %2850
      %2852 = vrot.lane.b32.xlu0 %v2453, 24
      %v2853 = vpop.permute.xlu0 %2852
      %2886 = vrot.lane.b32.xlu0 %v2454, 28
      %v2887 = vpop.permute.xlu0 %2886
      %2888 = vrot.lane.b32.xlu0 %v2455, 28
      %v2889 = vpop.permute.xlu0 %2888
      %2890 = vrot.lane.b32.xlu0 %v2456, 28
      %v2891 = vpop.permute.xlu0 %2890
      %2892 = vrot.lane.b32.xlu0 %v2457, 28
      %v2893 = vpop.permute.xlu0 %2892
      %2894 = vrot.lane.b32.xlu0 %v2458, 28
      %v2895 = vpop.permute.xlu0 %2894
      %2896 = vrot.lane.b32.xlu0 %v2459, 28
      %v2897 = vpop.permute.xlu0 %2896
      %2898 = vrot.lane.b32.xlu0 %v2460, 28
      %v2899 = vpop.permute.xlu0 %2898
      %2900 = vrot.lane.b32.xlu0 %v2461, 28
      %v2901 = vpop.permute.xlu0 %2900
      %2902 = vrot.lane.b32.xlu0 %v2462, 28
      %v2903 = vpop.permute.xlu0 %2902
      %2904 = vrot.lane.b32.xlu0 %v2463, 28
      %v2905 = vpop.permute.xlu0 %2904
      %2906 = vrot.lane.b32.xlu0 %v2464, 28
      %v2907 = vpop.permute.xlu0 %2906
      %2908 = vrot.lane.b32.xlu0 %v2465, 28
      %v2909 = vpop.permute.xlu0 %2908
      %2910 = vrot.lane.b32.xlu0 %v2466, 28
      %v2911 = vpop.permute.xlu0 %2910
      %2912 = vrot.lane.b32.xlu0 %v2467, 28
      %v2913 = vpop.permute.xlu0 %2912
      %2914 = vrot.lane.b32.xlu0 %v2468, 28
      %v2915 = vpop.permute.xlu0 %2914
      %2916 = vrot.lane.b32.xlu0 %v2469, 28
      %v2917 = vpop.permute.xlu0 %2916
      %2950 = vrot.lane.b32.xlu0 %v2470, 32
      %v2951 = vpop.permute.xlu0 %2950
      %2952 = vrot.lane.b32.xlu0 %v2471, 32
      %v2953 = vpop.permute.xlu0 %2952
      %2954 = vrot.lane.b32.xlu0 %v2472, 32
      %v2955 = vpop.permute.xlu0 %2954
      %2956 = vrot.lane.b32.xlu0 %v2473, 32
      %v2957 = vpop.permute.xlu0 %2956
      %2958 = vrot.lane.b32.xlu0 %v2474, 32
      %v2959 = vpop.permute.xlu0 %2958
      %2960 = vrot.lane.b32.xlu0 %v2475, 32
      %v2961 = vpop.permute.xlu0 %2960
      %2962 = vrot.lane.b32.xlu0 %v2476, 32
      %v2963 = vpop.permute.xlu0 %2962
      %2964 = vrot.lane.b32.xlu0 %v2477, 32
      %v2965 = vpop.permute.xlu0 %2964
      %2966 = vrot.lane.b32.xlu0 %v2478, 32
      %v2967 = vpop.permute.xlu0 %2966
      %2968 = vrot.lane.b32.xlu0 %v2479, 32
      %v2969 = vpop.permute.xlu0 %2968
      %2970 = vrot.lane.b32.xlu0 %v2480, 32
      %v2971 = vpop.permute.xlu0 %2970
      %2972 = vrot.lane.b32.xlu0 %v2481, 32
      %v2973 = vpop.permute.xlu0 %2972
      %2974 = vrot.lane.b32.xlu0 %v2482, 32
      %v2975 = vpop.permute.xlu0 %2974
      %2976 = vrot.lane.b32.xlu0 %v2483, 32
      %v2977 = vpop.permute.xlu0 %2976
      %2978 = vrot.lane.b32.xlu0 %v2484, 32
      %v2979 = vpop.permute.xlu0 %2978
      %2980 = vrot.lane.b32.xlu0 %v2485, 32
      %v2981 = vpop.permute.xlu0 %2980
      %v2998 = vsel %vm2272, %v2341, %v2503
      %v2999 = vsel %vm2272, %v2342, %v2505
      %v3000 = vsel %vm2272, %v2343, %v2507
      %v3001 = vsel %vm2272, %v2344, %v2509
      %v3002 = vsel %vm2272, %v2345, %v2511
      %v3003 = vsel %vm2272, %v2346, %v2513
      %v3004 = vsel %vm2272, %v2347, %v2515
      %v3005 = vsel %vm2272, %v2348, %v2517
      %v3006 = vsel %vm2272, %v2349, %v2519
      %v3007 = vsel %vm2272, %v2350, %v2521
      %v3008 = vsel %vm2272, %v2351, %v2523
      %v3009 = vsel %vm2272, %v2352, %v2525
      %v3010 = vsel %vm2272, %v2353, %v2527
      %v3011 = vsel %vm2272, %v2354, %v2529
      %v3012 = vsel %vm2272, %v2355, %v2531
      %v3013 = vsel %vm2272, %v2356, %v2533
      %v3014 = vsel %vm1912, %v2998, %v2567
      %v3015 = vsel %vm1912, %v2999, %v2569
      %v3016 = vsel %vm1912, %v3000, %v2571
      %v3017 = vsel %vm1912, %v3001, %v2573
      %v3018 = vsel %vm1912, %v3002, %v2575
      %v3019 = vsel %vm1912, %v3003, %v2577
      %v3020 = vsel %vm1912, %v3004, %v2579
      %v3021 = vsel %vm1912, %v3005, %v2581
      %v3022 = vsel %vm1912, %v3006, %v2583
      %v3023 = vsel %vm1912, %v3007, %v2585
      %v3024 = vsel %vm1912, %v3008, %v2587
      %v3025 = vsel %vm1912, %v3009, %v2589
      %v3026 = vsel %vm1912, %v3010, %v2591
      %v3027 = vsel %vm1912, %v3011, %v2593
      %v3028 = vsel %vm1912, %v3012, %v2595
      %v3029 = vsel %vm1912, %v3013, %v2597
      %vm3030 = vcmask 97280
      %v3031 = vsel %vm3030, %v3014, %v2631
      %v3032 = vsel %vm3030, %v3015, %v2633
      %v3033 = vsel %vm3030, %v3016, %v2635
      %v3034 = vsel %vm3030, %v3017, %v2637
      %v3035 = vsel %vm3030, %v3018, %v2639
      %v3036 = vsel %vm3030, %v3019, %v2641
      %v3037 = vsel %vm3030, %v3020, %v2643
      %v3038 = vsel %vm3030, %v3021, %v2645
      %v3039 = vsel %vm3030, %v3022, %v2647
      %v3040 = vsel %vm3030, %v3023, %v2649
      %v3041 = vsel %vm3030, %v3024, %v2651
      %v3042 = vsel %vm3030, %v3025, %v2653
      %v3043 = vsel %vm3030, %v3026, %v2655
      %v3044 = vsel %vm3030, %v3027, %v2657
      %v3045 = vsel %vm3030, %v3028, %v2659
      %v3046 = vsel %vm3030, %v3029, %v2661
      %v3047 = vsel %vm1937, %v3031, %v2695
      %v3048 = vsel %vm1937, %v3032, %v2697
      %v3049 = vsel %vm1937, %v3033, %v2699
      %v3050 = vsel %vm1937, %v3034, %v2701
      %v3051 = vsel %vm1937, %v3035, %v2703
      %v3052 = vsel %vm1937, %v3036, %v2705
      %v3053 = vsel %vm1937, %v3037, %v2707
      %v3054 = vsel %vm1937, %v3038, %v2709
      %v3055 = vsel %vm1937, %v3039, %v2711
      %v3056 = vsel %vm1937, %v3040, %v2713
      %v3057 = vsel %vm1937, %v3041, %v2715
      %v3058 = vsel %vm1937, %v3042, %v2717
      %v3059 = vsel %vm1937, %v3043, %v2719
      %v3060 = vsel %vm1937, %v3044, %v2721
      %v3061 = vsel %vm1937, %v3045, %v2723
      %v3062 = vsel %vm1937, %v3046, %v2725
      %vm3063 = vcmask 162816
      %v3064 = vsel %vm3063, %v3047, %v2759
      %v3065 = vsel %vm3063, %v3048, %v2761
      %v3066 = vsel %vm3063, %v3049, %v2763
      %v3067 = vsel %vm3063, %v3050, %v2765
      %v3068 = vsel %vm3063, %v3051, %v2767
      %v3069 = vsel %vm3063, %v3052, %v2769
      %v3070 = vsel %vm3063, %v3053, %v2771
      %v3071 = vsel %vm3063, %v3054, %v2773
      %v3072 = vsel %vm3063, %v3055, %v2775
      %v3073 = vsel %vm3063, %v3056, %v2777
      %v3074 = vsel %vm3063, %v3057, %v2779
      %v3075 = vsel %vm3063, %v3058, %v2781
      %v3076 = vsel %vm3063, %v3059, %v2783
      %v3077 = vsel %vm3063, %v3060, %v2785
      %v3078 = vsel %vm3063, %v3061, %v2787
      %v3079 = vsel %vm3063, %v3062, %v2789
      %v3080 = vsel %vm1954, %v3064, %v2823
      %v3081 = vsel %vm1954, %v3065, %v2825
      %v3082 = vsel %vm1954, %v3066, %v2827
      %v3083 = vsel %vm1954, %v3067, %v2829
      %v3084 = vsel %vm1954, %v3068, %v2831
      %v3085 = vsel %vm1954, %v3069, %v2833
      %v3086 = vsel %vm1954, %v3070, %v2835
      %v3087 = vsel %vm1954, %v3071, %v2837
      %v3088 = vsel %vm1954, %v3072, %v2839
      %v3089 = vsel %vm1954, %v3073, %v2841
      %v3090 = vsel %vm1954, %v3074, %v2843
      %v3091 = vsel %vm1954, %v3075, %v2845
      %v3092 = vsel %vm1954, %v3076, %v2847
      %v3093 = vsel %vm1954, %v3077, %v2849
      %v3094 = vsel %vm1954, %v3078, %v2851
      %v3095 = vsel %vm1954, %v3079, %v2853
      %vm3096 = vcmask 228352
      %v3097 = vsel %vm3096, %v3080, %v2887
      %v3098 = vsel %vm3096, %v3081, %v2889
      %v3099 = vsel %vm3096, %v3082, %v2891
      %v3100 = vsel %vm3096, %v3083, %v2893
      %v3101 = vsel %vm3096, %v3084, %v2895
      %v3102 = vsel %vm3096, %v3085, %v2897
      %v3103 = vsel %vm3096, %v3086, %v2899
      %v3104 = vsel %vm3096, %v3087, %v2901
      %v3105 = vsel %vm3096, %v3088, %v2903
      %v3106 = vsel %vm3096, %v3089, %v2905
      %v3107 = vsel %vm3096, %v3090, %v2907
      %v3108 = vsel %vm3096, %v3091, %v2909
      %v3109 = vsel %vm3096, %v3092, %v2911
      %v3110 = vsel %vm3096, %v3093, %v2913
      %v3111 = vsel %vm3096, %v3094, %v2915
      %v3112 = vsel %vm3096, %v3095, %v2917
      %v3113 = vsel %vm1971, %v3097, %v2951
      %v3114 = vsel %vm1971, %v3098, %v2953
      %v3115 = vsel %vm1971, %v3099, %v2955
      %v3116 = vsel %vm1971, %v3100, %v2957
      %v3117 = vsel %vm1971, %v3101, %v2959
      %v3118 = vsel %vm1971, %v3102, %v2961
      %v3119 = vsel %vm1971, %v3103, %v2963
      %v3120 = vsel %vm1971, %v3104, %v2965
      %v3121 = vsel %vm1971, %v3105, %v2967
      %v3122 = vsel %vm1971, %v3106, %v2969
      %v3123 = vsel %vm1971, %v3107, %v2971
      %v3124 = vsel %vm1971, %v3108, %v2973
      %v3125 = vsel %vm1971, %v3109, %v2975
      %v3126 = vsel %vm1971, %v3110, %v2977
      %v3127 = vsel %vm1971, %v3111, %v2979
      %v3128 = vsel %vm1971, %v3112, %v2981
      %v3129 = vpack.c.bf16 %v3114, %v3113
      %v3130 = vpack.c.bf16 %v3116, %v3115
      %v3131 = vpack.c.bf16 %v3118, %v3117
      %v3132 = vpack.c.bf16 %v3120, %v3119
      %v3133 = vpack.c.bf16 %v3122, %v3121
      %v3134 = vpack.c.bf16 %v3124, %v3123
      %v3135 = vpack.c.bf16 %v3126, %v3125
      %v3136 = vpack.c.bf16 %v3128, %v3127
      %v3137 = vld [vmem:[%s391] sm:$0xf]
      %v3138 = vld [vmem:[%s391 + $0x4] sm:$0xf]
      %v3139 = vld [vmem:[%s391 + $0x8] sm:$0xf]
      %v3140 = vld [vmem:[%s391 + $0xc] sm:$0xf]
      %v3141 = vld [vmem:[%s391 + $0x10] sm:$0x3]
      %v3147 = vunpack.c.l.b16 %v3137
      %v3148 = vunpack.c.l.b16 %v3138
      %v3149 = vunpack.c.l.b16 %v3139
      %v3150 = vunpack.c.l.b16 %v3140
      %v3151 = vunpack.c.l.b16 %v3141
      %v3152 = vpack.c.b16 %v3148, %v3147
      %v3153 = vpack.c.b16 %v3150, %v3149
      %v3154 = vpack.c.b16 %v3151, %v3151
      %vm3157 = vcmask 293888
      %v3159 = vsel %vm3157, %v3129, 0
      %v3162 = vsel %vm3157, %v3130, 0
      %v3165 = vsel %vm3157, %v3131, 0
      %v3168 = vsel %vm3157, %v3132, 0
      %v3171 = vsel %vm3157, %v3133, 0
      %v3174 = vsel %vm3157, %v3134, 0
      %v3177 = vsel %vm3157, %v3135, 0
      %v3180 = vsel %vm3157, %v3136, 0
      %vm3182 = vcmask 1041408
      %v3184 = vsel %vm3182, %v3154, 0
      %3186 = vmatprep.subr.bf16.mxu0 0
      %3187 = vmatpush1.bf16.msra.mxu0 %v3152
      %3188 = vmatprep.subr.bf16.mxu0 0
      %3189 = vmatpush1.bf16.msra.mxu0 %v3153
      %3190 = vmatprep.subr.bf16.mxu0 0
      %3191 = vmatpush1.bf16.msra.mxu0 %v3184
      %3192 = vmatprep.subr.bf16.mxu0 0
      %3193 = vmatpush1.bf16.msra.mxu0 0
      %3194 = vmatprep.subr.bf16.mxu0 0
      %3195 = vmatpush1.bf16.msra.mxu0 0
      %3196 = vmatprep.subr.bf16.mxu0 0
      %3197 = vmatpush1.bf16.msra.mxu0 0
      %3198 = vmatprep.subr.bf16.mxu0 0
      %3199 = vmatpush1.bf16.msra.mxu0 0
      %3200 = vmatprep.subr.bf16.mxu0 0
      %3201 = vmatpush1.bf16.msra.mxu0 0
      %3202 = vmatprep.subr.bf16.mxu0 0
      %3203 = vmatpush1.bf16.msra.mxu0 0
      %3204 = vmatprep.subr.bf16.mxu0 0
      %3205 = vmatpush1.bf16.msra.mxu0 0
      %3206 = vmatprep.subr.bf16.mxu0 0
      %3207 = vmatpush1.bf16.msra.mxu0 0
      %3208 = vmatprep.subr.bf16.mxu0 0
      %3209 = vmatpush1.bf16.msra.mxu0 0
      %3210 = vmatprep.subr.bf16.mxu0 0
      %3211 = vmatpush1.bf16.msra.mxu0 0
      %3212 = vmatprep.subr.bf16.mxu0 0
      %3213 = vmatpush1.bf16.msra.mxu0 0
      %3214 = vmatprep.subr.bf16.mxu0 0
      %3215 = vmatpush1.bf16.msra.mxu0 0
      %3216 = vmatprep.subr.bf16.mxu0 0
      %3217 = vmatpush1.bf16.msra.mxu0 0
      %3218 = vmatprep.mubr.bf16.mxu0 0
      %3219 = vmatmul.mubr.bf16.gmra.mrb[0].mxu0 %v3159
      %v3220 = vpop.f32.mrb[0].mxu0
      %v3221 = vadd.f32 0.0, %v3220
      %v3222 = vpop.f32.mrb[0].mxu0
      %v3223 = vpop.f32.mrb[0].mxu0
      %v3224 = vadd.f32 0.0, %v3223
      %v3225 = vpop.f32.mrb[0].mxu0
      %3226 = vmatprep.mubr.bf16.mxu0 0
      %3227 = vmatmul.mubr.bf16.gmra.mrb[0].mxu0 %v3162
      %v3228 = vpop.f32.mrb[0].mxu0
      %v3229 = vadd.f32 0.0, %v3228
      %v3230 = vpop.f32.mrb[0].mxu0
      %v3231 = vpop.f32.mrb[0].mxu0
      %v3232 = vadd.f32 0.0, %v3231
      %v3233 = vpop.f32.mrb[0].mxu0
      %3234 = vmatprep.mubr.bf16.mxu0 0
      %3235 = vmatmul.mubr.bf16.gmra.mrb[0].mxu0 %v3165
      %v3236 = vpop.f32.mrb[0].mxu0
      %v3237 = vadd.f32 0.0, %v3236
      %v3238 = vpop.f32.mrb[0].mxu0
      %v3239 = vpop.f32.mrb[0].mxu0
      %v3240 = vadd.f32 0.0, %v3239
      %v3241 = vpop.f32.mrb[0].mxu0
      %3242 = vmatprep.mubr.bf16.mxu0 0
      %3243 = vmatmul.mubr.bf16.gmra.mrb[0].mxu0 %v3168
      %v3244 = vpop.f32.mrb[0].mxu0
      %v3245 = vadd.f32 0.0, %v3244
      %v3246 = vpop.f32.mrb[0].mxu0
      %v3247 = vpop.f32.mrb[0].mxu0
      %v3248 = vadd.f32 0.0, %v3247
      %v3249 = vpop.f32.mrb[0].mxu0
      %3250 = vmatprep.mubr.bf16.mxu0 0
      %3251 = vmatmul.mubr.bf16.gmra.mrb[0].mxu0 %v3171
      %v3252 = vpop.f32.mrb[0].mxu0
      %v3253 = vadd.f32 0.0, %v3252
      %v3254 = vpop.f32.mrb[0].mxu0
      %v3255 = vpop.f32.mrb[0].mxu0
      %v3256 = vadd.f32 0.0, %v3255
      %v3257 = vpop.f32.mrb[0].mxu0
      %3258 = vmatprep.mubr.bf16.mxu0 0
      %3259 = vmatmul.mubr.bf16.gmra.mrb[0].mxu0 %v3174
      %v3260 = vpop.f32.mrb[0].mxu0
      %v3261 = vadd.f32 0.0, %v3260
      %v3262 = vpop.f32.mrb[0].mxu0
      %v3263 = vpop.f32.mrb[0].mxu0
      %v3264 = vadd.f32 0.0, %v3263
      %v3265 = vpop.f32.mrb[0].mxu0
      %3266 = vmatprep.mubr.bf16.mxu0 0
      %3267 = vmatmul.mubr.bf16.gmra.mrb[0].mxu0 %v3177
      %v3268 = vpop.f32.mrb[0].mxu0
      %v3269 = vadd.f32 0.0, %v3268
      %v3270 = vpop.f32.mrb[0].mxu0
      %v3271 = vpop.f32.mrb[0].mxu0
      %v3272 = vadd.f32 0.0, %v3271
      %v3273 = vpop.f32.mrb[0].mxu0
      %3274 = vmatprep.mubr.bf16.mxu0 0
      %3275 = vmatmul.mubr.bf16.gmra.mrb[0].mxu0 %v3180
      %v3276 = vpop.f32.mrb[0].mxu0
      %v3277 = vadd.f32 0.0, %v3276
      %v3278 = vpop.f32.mrb[0].mxu0
      %v3279 = vpop.f32.mrb[0].mxu0
      %v3280 = vadd.f32 0.0, %v3279
      %v3281 = vpop.f32.mrb[0].mxu0
      %3282 = vdwg.mxu0
      %v3283 = vld [vmem:[%s394] sm:$0x1]
      %v3285 = vlaneseq
      %v3286 = vshrl.u32 %v3285, 7
      %v3287 = vsub.s32 0, %v3286
      %v3288 = vrot.slane %v3283, %v3287
      %v3290 = vmul.f32 %v3221, %v3288
      %v3291 = vmul.f32 %v3224, %v3288
      %v3292 = vmul.f32 %v3229, %v3288
      %v3293 = vmul.f32 %v3232, %v3288
      %v3294 = vmul.f32 %v3237, %v3288
      %v3295 = vmul.f32 %v3240, %v3288
      %v3296 = vmul.f32 %v3245, %v3288
      %v3297 = vmul.f32 %v3248, %v3288
      %v3298 = vmul.f32 %v3253, %v3288
      %v3299 = vmul.f32 %v3256, %v3288
      %v3300 = vmul.f32 %v3261, %v3288
      %v3301 = vmul.f32 %v3264, %v3288
      %v3302 = vmul.f32 %v3269, %v3288
      %v3303 = vmul.f32 %v3272, %v3288
      %v3304 = vmul.f32 %v3277, %v3288
      %v3305 = vmul.f32 %v3280, %v3288
      %v3306 = vld [vmem:[%s397] sm:$0x1]
      %v3308 = vlaneseq
      %v3309 = vshrl.u32 %v3308, 7
      %v3310 = vsub.s32 0, %v3309
      %v3311 = vrot.slane %v3306, %v3310
      %v3313 = vadd.f32 %v3290, %v3311
      %v3314 = vadd.f32 %v3291, %v3311
      %v3315 = vadd.f32 %v3292, %v3311
      %v3316 = vadd.f32 %v3293, %v3311
      %v3317 = vadd.f32 %v3294, %v3311
      %v3318 = vadd.f32 %v3295, %v3311
      %v3319 = vadd.f32 %v3296, %v3311
      %v3320 = vadd.f32 %v3297, %v3311
      %v3321 = vadd.f32 %v3298, %v3311
      %v3322 = vadd.f32 %v3299, %v3311
      %v3323 = vadd.f32 %v3300, %v3311
      %v3324 = vadd.f32 %v3301, %v3311
      %v3325 = vadd.f32 %v3302, %v3311
      %v3326 = vadd.f32 %v3303, %v3311
      %v3327 = vadd.f32 %v3304, %v3311
      %v3328 = vadd.f32 %v3305, %v3311
      %v3329 = vmax.f32 %v3313, 0.0
      %v3330 = vmax.f32 %v3314, 0.0
      %v3331 = vmax.f32 %v3315, 0.0
      %v3332 = vmax.f32 %v3316, 0.0
      %v3333 = vmax.f32 %v3317, 0.0
      %v3334 = vmax.f32 %v3318, 0.0
      %v3335 = vmax.f32 %v3319, 0.0
      %v3336 = vmax.f32 %v3320, 0.0
      %v3337 = vmax.f32 %v3321, 0.0
      %v3338 = vmax.f32 %v3322, 0.0
      %v3339 = vmax.f32 %v3323, 0.0
      %v3340 = vmax.f32 %v3324, 0.0
      %v3341 = vmax.f32 %v3325, 0.0
      %v3342 = vmax.f32 %v3326, 0.0
      %v3343 = vmax.f32 %v3327, 0.0
      %v3344 = vmax.f32 %v3328, 0.0
      %v3345 = vpack.c.bf16 %v3329, %v3329
      %v3346 = vpack.c.bf16 %v3330, %v3330
      %v3347 = vpack.c.bf16 %v3331, %v3331
      %v3348 = vpack.c.bf16 %v3332, %v3332
      %v3349 = vpack.c.bf16 %v3333, %v3333
      %v3350 = vpack.c.bf16 %v3334, %v3334
      %v3351 = vpack.c.bf16 %v3335, %v3335
      %v3352 = vpack.c.bf16 %v3336, %v3336
      %v3353 = vpack.c.bf16 %v3337, %v3337
      %v3354 = vpack.c.bf16 %v3338, %v3338
      %v3355 = vpack.c.bf16 %v3339, %v3339
      %v3356 = vpack.c.bf16 %v3340, %v3340
      %v3357 = vpack.c.bf16 %v3341, %v3341
      %v3358 = vpack.c.bf16 %v3342, %v3342
      %v3359 = vpack.c.bf16 %v3343, %v3343
      %v3360 = vpack.c.bf16 %v3344, %v3344
      %3361 = vst [vmem:[%s404] sm:$0xf] %v3345
      %3362 = vst [vmem:[%s404 + $0x4] sm:$0xf] %v3346
      %3363 = vst [vmem:[%s404 + $0x8] sm:$0xf] %v3347
      %3364 = vst [vmem:[%s404 + $0xc] sm:$0xf] %v3348
      %3365 = vst [vmem:[%s404 + $0x10] sm:$0xf] %v3349
      %3366 = vst [vmem:[%s404 + $0x14] sm:$0xf] %v3350
      %3367 = vst [vmem:[%s404 + $0x18] sm:$0xf] %v3351
      %3368 = vst [vmem:[%s404 + $0x1c] sm:$0xf] %v3352
      %3369 = vst [vmem:[%s404 + $0x20] sm:$0xf] %v3353
      %3370 = vst [vmem:[%s404 + $0x24] sm:$0xf] %v3354
      %3371 = vst [vmem:[%s404 + $0x28] sm:$0xf] %v3355
      %3372 = vst [vmem:[%s404 + $0x2c] sm:$0xf] %v3356
      %3373 = vst [vmem:[%s404 + $0x30] sm:$0xf] %v3357
      %3374 = vst [vmem:[%s404 + $0x34] sm:$0xf] %v3358
      %3375 = vst [vmem:[%s404 + $0x38] sm:$0xf] %v3359
      %3376 = vst [vmem:[%s404 + $0x3c] sm:$0xf] %v3360
      %s3377 = sadd.s32 %s22, %s23
      %s3378 = smul.u32 2, %s3377
      %p3379 = scmp.lt.s32.totalorder %s3378, 7
      %s3380 = scalar_select %p3379, %s3378, 7
      %s3381 = smul.addr %s3380, 8
      %s3382 = smul.addr %s3381, 4
      %s3383 = scalar_lea.vmem %s7, %s3382
      // Predicated region
      $region49: #{up_dense_2_softmax_forward.3} parent=47 // pred_check
        %p3384 = pneg %p234
      $region50: #{up_dense_2_softmax_forward.3} parent=47 // pred_check_branch
        %3386 = sbr.rel (%p3384) target = $region52
      $region51: #{up_dense_2_softmax_forward.3} parent=47 // pred_region
        %s3387 = sadd.s32 %s22, %s23
        %s3388 = smul.u32 2, %s3387
      $region52: #{up_dense_2_softmax_forward.3} parent=47 // pred_fallthru
        _
    $region48: #{up_dense_2_softmax_forward.3} parent=5 // pred_fallthru
      _
    %p3389 = scmp.le.s32.totalorder 2, %s13
    // Predicated region
    $region53: #{up_dense_2_softmax_forward.3} parent=5 // pred_check
      %p3390 = pneg %p3389
    $region54: #{up_dense_2_softmax_forward.3} parent=5 // pred_check_branch
      %3392 = sbr.rel (%p3390) target = $region56
    $region55: #{up_dense_2_softmax_forward.3} parent=5 // pred_region
      %s3393 = ssub.s32 %s13, 2
      // Predicated region
      $region57: #{up_dense_2_softmax_forward.3} parent=55 // pred_check
        %p3394 = pneg %p240
      $region58: #{up_dense_2_softmax_forward.3} parent=55 // pred_check_branch
        %3396 = sbr.rel (%p3394) target = $region60
      $region59: #{up_dense_2_softmax_forward.3} parent=55 // pred_region
        %s3397 = sadd.s32 %s24, %s25
        %s3398 = smul.u32 2, %s3397
        %p3399 = scmp.lt.s32.totalorder %s3398, 7
        %s3400 = scalar_select %p3399, %s3398, 7
        %s3401 = smul.addr %s3400, 8
        %s3402 = smul.addr %s3401, 4
        %s3403 = scalar_lea.vmem %s7, %s3402
      $region60: #{up_dense_2_softmax_forward.3} parent=55 // pred_fallthru
        _
    $region56: #{up_dense_2_softmax_forward.3} parent=5 // pred_fallthru
      _
  $region6: #{up_dense_2_softmax_forward.3} parent=0 // loop_footer
    %s17 = sadd.s32 1, %s13
  $region7: #{up_dense_2_softmax_forward.3} parent=0 // loop_footer_branch
    %12 = sbr.rel target = $region3
  $region8: #{up_dense_2_softmax_forward.3} parent=0 // loop_exit
    _

</llo_original>
